<compile_context>
chip_gen: v7x
topology: tpu7x:2x2x1
jax: 0.10.0
libtpu: 0.0.40
codegen_flags: <defaults>
</compile_context>

<pallas_src>
import functools

import numpy as np
import jax
import jax.numpy as jnp
from jax.experimental import pallas as pl
from jax.experimental.pallas import tpu as pltpu


# ----------------------------- Pallas kernel --------------------------------

def _shift_lanes(x, off):
    """result[:, p] = x[:, p + off] for p < S - off (wrapped tail never read)."""
    if off == 0:
        return x
    return jnp.concatenate([x[:, off:], x[:, :off]], axis=1)


def _fused_encoder_kernel(x_ref, w1_ref, b1_ref, w2_ref, b2_ref,
                          w3_ref, b3_ref, w4_ref, b4_ref, o_ref, *, pw, s):
    """One batch element: 4x (3x3 conv + ReLU), activations resident on-chip.

    x_ref : (1, 4, Cin, S)  stride-2 phase images of the raw obs, S = PH*PW
    w*_ref: (9, Cout, Cin)  tap-major conv weights (tap = ky*3 + kx)
    b*_ref: (Cout, 1)
    o_ref : (1, C4, S)      final features on the (PH, PW) flat grid
    """
    c1 = w1_ref.shape[1]

    # ---- conv1 (stride 2): tap (ky,kx) reads phase (ky%2,kx%2) shifted by
    #      (ky//2)*PW + (kx//2) on the flat (PH, PW) output grid. ----
    acc = jnp.zeros((c1, s), jnp.float32)
    for ky in range(3):
        for kx in range(3):
            phase = (ky % 2) * 2 + (kx % 2)
            off = (ky // 2) * pw + (kx // 2)
            xin = _shift_lanes(x_ref[0, phase, :, :], off)      # (Cin, S)
            acc = acc + jnp.dot(w1_ref[ky * 3 + kx, :, :], xin,
                                preferred_element_type=jnp.float32)
    act = jnp.maximum(acc + b1_ref[...], 0.0)                    # (C1, S)

    # ---- conv2..conv4 (stride 1) on the same fixed flat grid; the valid
    #      spatial region shrinks by 2 per layer and garbage columns never
    #      feed valid output columns. ----
    for w_ref, b_ref in ((w2_ref, b2_ref), (w3_ref, b3_ref), (w4_ref, b4_ref)):
        cout = w_ref.shape[1]
        acc = jnp.zeros((cout, s), jnp.float32)
        for ky in range(3):
            for kx in range(3):
                a = _shift_lanes(act, ky * pw + kx)
                acc = acc + jnp.dot(w_ref[ky * 3 + kx, :, :], a,
                                    preferred_element_type=jnp.float32)
        act = jnp.maximum(acc + b_ref[...], 0.0)

    o_ref[0, :, :] = act.astype(o_ref.dtype)


# --------------------------- Encoder forward ---------------------------------

def rl_encoder_forward(obs, params):
    """Normalize (folded), 4x (3x3 conv + ReLU), flatten -- one pallas_call."""
    obs = obs.astype(jnp.float32)
    N, C, H, W = obs.shape
    C1 = params["w1"].shape[0]

    OH1, OW1 = (H - 3) // 2 + 1, (W - 3) // 2 + 1     # after conv1 (stride 2)
    OH4, OW4 = OH1 - 6, OW1 - 6                       # after three stride-1 convs
    PH, PW = (H + 1) // 2, (W + 1) // 2               # stride-2 phase grid
    S = PH * PW
    assert OH4 > 0 and OW4 > 0, "input spatial size too small for 4 conv layers"

    # Fold obs/255 - 0.5 into conv1 (removes the in-kernel divide/sub).
    w1 = params["w1"].astype(jnp.float32)
    w1_fold = w1 / 255.0
    b1_fold = params["b1"].astype(jnp.float32) - 0.5 * w1.sum(axis=(1, 2, 3))

    def pack_w(w):        # (Cout, Cin, 3, 3) -> (9, Cout, Cin), tap = ky*3+kx
        w = w.astype(jnp.float32)
        return jnp.transpose(w, (2, 3, 0, 1)).reshape(9, w.shape[0], w.shape[1])

    def pack_b(b):
        return b.astype(jnp.float32).reshape(-1, 1)

    w1m, b1m = pack_w(w1_fold), pack_b(b1_fold)
    w2m, b2m = pack_w(params["w2"]), pack_b(params["b2"])
    w3m, b3m = pack_w(params["w3"]), pack_b(params["b3"])
    w4m, b4m = pack_w(params["w4"]), pack_b(params["b4"])

    # One-time even/odd phase split of the raw input (turns the stride-2 conv
    # into stride-1 shifted matmuls).  Channels-major, spatial on lanes.
    phases = []
    for py in range(2):
        for px in range(2):
            p = obs[:, :, py::2, px::2]
            p = jnp.pad(p, ((0, 0), (0, 0),
                            (0, PH - p.shape[2]), (0, PW - p.shape[3])))
            phases.append(p.reshape(N, C, S))
    x_ph = jnp.stack(phases, axis=1)                  # (N, 4, C, S)

    flops = 2 * 9 * S * C1 * (C + 3 * C1) * N
    bytes_accessed = 4 * (x_ph.size + w1m.size + b1m.size + w2m.size + b2m.size
                          + w3m.size + b3m.size + w4m.size + b4m.size
                          + N * C1 * S)

    w_spec_1 = pl.BlockSpec((9, C1, C), lambda i: (0, 0, 0))
    w_spec = pl.BlockSpec((9, C1, C1), lambda i: (0, 0, 0))
    b_spec = pl.BlockSpec((C1, 1), lambda i: (0, 0))

    out = pl.pallas_call(
        functools.partial(_fused_encoder_kernel, pw=PW, s=S),
        out_shape=jax.ShapeDtypeStruct((N, C1, S), jnp.float32),
        grid=(N,),
        in_specs=[
            pl.BlockSpec((1, 4, C, S), lambda i: (i, 0, 0, 0)),
            w_spec_1, b_spec,
            w_spec, b_spec,
            w_spec, b_spec,
            w_spec, b_spec,
        ],
        out_specs=pl.BlockSpec((1, C1, S), lambda i: (i, 0, 0)),
        compiler_params=pltpu.CompilerParams(
            dimension_semantics=("parallel",),
            vmem_limit_bytes=32 * 1024 * 1024),
        cost_estimate=pl.CostEstimate(flops=flops, transcendentals=0,
                                      bytes_accessed=bytes_accessed),
    )(x_ph, w1m, b1m, w2m, b2m, w3m, b3m, w4m, b4m)

    # Extract the valid spatial region; (c, oh, ow) order == PyTorch NCHW flatten.
    out = out.reshape(N, C1, PH, PW)[:, :, :OH4, :OW4]
    return out.reshape(N, C1 * OH4 * OW4)


def init_params(key, in_ch, n_channel):
    """Deterministic synthetic init (shapes follow the PyTorch conv stack)."""
    ks = jax.random.split(key, 8)

    def conv_w(k, cout, cin):
        fan_in = cin * 3 * 3
        return (jax.random.normal(k, (cout, cin, 3, 3), jnp.float32)
                / jnp.sqrt(fan_in))

    return {
        "w1": conv_w(ks[0], n_channel, in_ch),
        "b1": 0.01 * jax.random.normal(ks[1], (n_channel,), jnp.float32),
        "w2": conv_w(ks[2], n_channel, n_channel),
        "b2": 0.01 * jax.random.normal(ks[3], (n_channel,), jnp.float32),
        "w3": conv_w(ks[4], n_channel, n_channel),
        "b3": 0.01 * jax.random.normal(ks[5], (n_channel,), jnp.float32),
        "w4": conv_w(ks[6], n_channel, n_channel),
        "b4": 0.01 * jax.random.normal(ks[7], (n_channel,), jnp.float32),
    }


# ------------------------------ Reference ------------------------------------

def _reference_forward(obs, params):
    x = obs.astype(jnp.float32) / 255.0 - 0.5
    dn = ("NCHW", "OIHW", "NCHW")

    def conv(x, w, b, stride):
        y = jax.lax.conv_general_dilated(
            x, w, window_strides=(stride, stride), padding="VALID",
            dimension_numbers=dn)
        return jnp.maximum(y + b.reshape(1, -1, 1, 1), 0.0)

    x = conv(x, params["w1"], params["b1"], 2)
    x = conv(x, params["w2"], params["b2"], 1)
    x = conv(x, params["w3"], params["b3"], 1)
    x = conv(x, params["w4"], params["b4"], 1)
    return x.reshape(x.shape[0], -1)


# --------------------------------- Main ---------------------------------------

if __name__ == "__main__":
    key = jax.random.PRNGKey(0)
    k_obs, k_params = jax.random.split(key)

    # RLEncoder requires n_input_channel % 3 == 0; '32channel' -> 32 filters.
    batch, in_ch, n_channel, spatial = 2, 3, 32, 20
    obs = jax.random.uniform(k_obs, (batch, in_ch, spatial, spatial),
                             minval=0.0, maxval=255.0, dtype=jnp.float32)
    params = init_params(k_params, in_ch, n_channel)

    out = jax.block_until_ready(jax.jit(rl_encoder_forward)(obs, params))

    ref = jax.block_until_ready(_reference_forward(obs, params))
    assert out.shape == ref.shape, (out.shape, ref.shape)
    np.testing.assert_allclose(np.asarray(out), np.asarray(ref),
                               rtol=1e-4, atol=1e-4)

    print("KERNEL_OK")
</pallas_src>

<mosaic_0001>
module attributes {stable_mosaic.version = 11 : i64} {
  func.func @_fused_encoder_kernel(%arg0: i32, %arg1: memref<1x4x3x100xf32, #tpu.memory_space<vmem>>, %arg2: memref<9x32x3xf32, #tpu.memory_space<vmem>>, %arg3: memref<32x1xf32, #tpu.memory_space<vmem>>, %arg4: memref<9x32x32xf32, #tpu.memory_space<vmem>>, %arg5: memref<32x1xf32, #tpu.memory_space<vmem>>, %arg6: memref<9x32x32xf32, #tpu.memory_space<vmem>>, %arg7: memref<32x1xf32, #tpu.memory_space<vmem>>, %arg8: memref<9x32x32xf32, #tpu.memory_space<vmem>>, %arg9: memref<32x1xf32, #tpu.memory_space<vmem>>, %arg10: memref<1x32x100xf32, #tpu.memory_space<vmem>>) attributes {dimension_semantics = [#tpu.dimension_semantics<parallel>], iteration_bounds = array<i64: 2>, scalar_prefetch = 0 : i64, scratch_operands = 0 : i64, tpu.core_type = #tpu.core_type<tc>, window_params = [{transform_indices = @transform_0, window_bounds = array<i64: 1, 4, 3, 100>}, {pipeline_mode = #tpu.pipeline_mode<synchronous>, transform_indices = @transform_1, window_bounds = array<i64: 9, 32, 3>}, {pipeline_mode = #tpu.pipeline_mode<synchronous>, transform_indices = @transform_2, window_bounds = array<i64: 32, 1>}, {pipeline_mode = #tpu.pipeline_mode<synchronous>, transform_indices = @transform_3, window_bounds = array<i64: 9, 32, 32>}, {pipeline_mode = #tpu.pipeline_mode<synchronous>, transform_indices = @transform_4, window_bounds = array<i64: 32, 1>}, {pipeline_mode = #tpu.pipeline_mode<synchronous>, transform_indices = @transform_5, window_bounds = array<i64: 9, 32, 32>}, {pipeline_mode = #tpu.pipeline_mode<synchronous>, transform_indices = @transform_6, window_bounds = array<i64: 32, 1>}, {pipeline_mode = #tpu.pipeline_mode<synchronous>, transform_indices = @transform_7, window_bounds = array<i64: 9, 32, 32>}, {pipeline_mode = #tpu.pipeline_mode<synchronous>, transform_indices = @transform_8, window_bounds = array<i64: 32, 1>}, {transform_indices = @transform_9, window_bounds = array<i64: 1, 32, 100>}]} {
    %cst = arith.constant 0.000000e+00 : f32
    %0 = vector.broadcast %cst : f32 to vector<32x100xf32>
    %c0 = arith.constant 0 : index
    %c0_0 = arith.constant 0 : index
    %c0_1 = arith.constant 0 : index
    %c0_2 = arith.constant 0 : index
    %1 = vector.load %arg1[%c0, %c0_0, %c0_1, %c0_2] : memref<1x4x3x100xf32, #tpu.memory_space<vmem>>, vector<1x1x3x100xf32>
    %2 = vector.shape_cast %1 : vector<1x1x3x100xf32> to vector<3x100xf32>
    %c0_3 = arith.constant 0 : index
    %c0_4 = arith.constant 0 : index
    %c0_5 = arith.constant 0 : index
    %3 = vector.load %arg2[%c0_3, %c0_4, %c0_5] : memref<9x32x3xf32, #tpu.memory_space<vmem>>, vector<1x32x3xf32>
    %4 = vector.shape_cast %3 : vector<1x32x3xf32> to vector<32x3xf32>
    %cst_6 = arith.constant dense<0.000000e+00> : vector<32x100xf32>
    %5 = tpu.matmul %4, %2, %cst_6 {dimension_numbers = #tpu.dot_dimension_numbers<[1], [0], [0], [1], [0, 0, 1, 1], [], []>} : vector<32x3xf32>, vector<3x100xf32>, vector<32x100xf32> -> vector<32x100xf32>
    %6 = arith.addf %0, %5 : vector<32x100xf32>
    %c0_7 = arith.constant 0 : index
    %c1 = arith.constant 1 : index
    %c0_8 = arith.constant 0 : index
    %c0_9 = arith.constant 0 : index
    %7 = vector.load %arg1[%c0_7, %c1, %c0_8, %c0_9] : memref<1x4x3x100xf32, #tpu.memory_space<vmem>>, vector<1x1x3x100xf32>
    %8 = vector.shape_cast %7 : vector<1x1x3x100xf32> to vector<3x100xf32>
    %c1_10 = arith.constant 1 : index
    %c0_11 = arith.constant 0 : index
    %c0_12 = arith.constant 0 : index
    %9 = vector.load %arg2[%c1_10, %c0_11, %c0_12] : memref<9x32x3xf32, #tpu.memory_space<vmem>>, vector<1x32x3xf32>
    %10 = vector.shape_cast %9 : vector<1x32x3xf32> to vector<32x3xf32>
    %cst_13 = arith.constant dense<0.000000e+00> : vector<32x100xf32>
    %11 = tpu.matmul %10, %8, %cst_13 {dimension_numbers = #tpu.dot_dimension_numbers<[1], [0], [0], [1], [0, 0, 1, 1], [], []>} : vector<32x3xf32>, vector<3x100xf32>, vector<32x100xf32> -> vector<32x100xf32>
    %12 = arith.addf %6, %11 : vector<32x100xf32>
    %c0_14 = arith.constant 0 : index
    %c0_15 = arith.constant 0 : index
    %c0_16 = arith.constant 0 : index
    %c0_17 = arith.constant 0 : index
    %13 = vector.load %arg1[%c0_14, %c0_15, %c0_16, %c0_17] : memref<1x4x3x100xf32, #tpu.memory_space<vmem>>, vector<1x1x3x100xf32>
    %14 = vector.shape_cast %13 : vector<1x1x3x100xf32> to vector<3x100xf32>
    %15 = vector.extract_strided_slice %14 {offsets = [0, 1], sizes = [3, 99], strides = [1, 1]} : vector<3x100xf32> to vector<3x99xf32>
    %16 = vector.extract_strided_slice %14 {offsets = [0, 0], sizes = [3, 1], strides = [1, 1]} : vector<3x100xf32> to vector<3x1xf32>
    %17 = tpu.concatenate %15, %16 in 1 : vector<3x99xf32>, vector<3x1xf32> -> vector<3x100xf32>
    %c2 = arith.constant 2 : index
    %c0_18 = arith.constant 0 : index
    %c0_19 = arith.constant 0 : index
    %18 = vector.load %arg2[%c2, %c0_18, %c0_19] : memref<9x32x3xf32, #tpu.memory_space<vmem>>, vector<1x32x3xf32>
    %19 = vector.shape_cast %18 : vector<1x32x3xf32> to vector<32x3xf32>
    %cst_20 = arith.constant dense<0.000000e+00> : vector<32x100xf32>
    %20 = tpu.matmul %19, %17, %cst_20 {dimension_numbers = #tpu.dot_dimension_numbers<[1], [0], [0], [1], [0, 0, 1, 1], [], []>} : vector<32x3xf32>, vector<3x100xf32>, vector<32x100xf32> -> vector<32x100xf32>
    %21 = arith.addf %12, %20 : vector<32x100xf32>
    %c0_21 = arith.constant 0 : index
    %c2_22 = arith.constant 2 : index
    %c0_23 = arith.constant 0 : index
    %c0_24 = arith.constant 0 : index
    %22 = vector.load %arg1[%c0_21, %c2_22, %c0_23, %c0_24] : memref<1x4x3x100xf32, #tpu.memory_space<vmem>>, vector<1x1x3x100xf32>
    %23 = vector.shape_cast %22 : vector<1x1x3x100xf32> to vector<3x100xf32>
    %c3 = arith.constant 3 : index
    %c0_25 = arith.constant 0 : index
    %c0_26 = arith.constant 0 : index
    %24 = vector.load %arg2[%c3, %c0_25, %c0_26] : memref<9x32x3xf32, #tpu.memory_space<vmem>>, vector<1x32x3xf32>
    %25 = vector.shape_cast %24 : vector<1x32x3xf32> to vector<32x3xf32>
    %cst_27 = arith.constant dense<0.000000e+00> : vector<32x100xf32>
    %26 = tpu.matmul %25, %23, %cst_27 {dimension_numbers = #tpu.dot_dimension_numbers<[1], [0], [0], [1], [0, 0, 1, 1], [], []>} : vector<32x3xf32>, vector<3x100xf32>, vector<32x100xf32> -> vector<32x100xf32>
    %27 = arith.addf %21, %26 : vector<32x100xf32>
    %c0_28 = arith.constant 0 : index
    %c3_29 = arith.constant 3 : index
    %c0_30 = arith.constant 0 : index
    %c0_31 = arith.constant 0 : index
    %28 = vector.load %arg1[%c0_28, %c3_29, %c0_30, %c0_31] : memref<1x4x3x100xf32, #tpu.memory_space<vmem>>, vector<1x1x3x100xf32>
    %29 = vector.shape_cast %28 : vector<1x1x3x100xf32> to vector<3x100xf32>
    %c4 = arith.constant 4 : index
    %c0_32 = arith.constant 0 : index
    %c0_33 = arith.constant 0 : index
    %30 = vector.load %arg2[%c4, %c0_32, %c0_33] : memref<9x32x3xf32, #tpu.memory_space<vmem>>, vector<1x32x3xf32>
    %31 = vector.shape_cast %30 : vector<1x32x3xf32> to vector<32x3xf32>
    %cst_34 = arith.constant dense<0.000000e+00> : vector<32x100xf32>
    %32 = tpu.matmul %31, %29, %cst_34 {dimension_numbers = #tpu.dot_dimension_numbers<[1], [0], [0], [1], [0, 0, 1, 1], [], []>} : vector<32x3xf32>, vector<3x100xf32>, vector<32x100xf32> -> vector<32x100xf32>
    %33 = arith.addf %27, %32 : vector<32x100xf32>
    %c0_35 = arith.constant 0 : index
    %c2_36 = arith.constant 2 : index
    %c0_37 = arith.constant 0 : index
    %c0_38 = arith.constant 0 : index
    %34 = vector.load %arg1[%c0_35, %c2_36, %c0_37, %c0_38] : memref<1x4x3x100xf32, #tpu.memory_space<vmem>>, vector<1x1x3x100xf32>
    %35 = vector.shape_cast %34 : vector<1x1x3x100xf32> to vector<3x100xf32>
    %36 = vector.extract_strided_slice %35 {offsets = [0, 1], sizes = [3, 99], strides = [1, 1]} : vector<3x100xf32> to vector<3x99xf32>
    %37 = vector.extract_strided_slice %35 {offsets = [0, 0], sizes = [3, 1], strides = [1, 1]} : vector<3x100xf32> to vector<3x1xf32>
    %38 = tpu.concatenate %36, %37 in 1 : vector<3x99xf32>, vector<3x1xf32> -> vector<3x100xf32>
    %c5 = arith.constant 5 : index
    %c0_39 = arith.constant 0 : index
    %c0_40 = arith.constant 0 : index
    %39 = vector.load %arg2[%c5, %c0_39, %c0_40] : memref<9x32x3xf32, #tpu.memory_space<vmem>>, vector<1x32x3xf32>
    %40 = vector.shape_cast %39 : vector<1x32x3xf32> to vector<32x3xf32>
    %cst_41 = arith.constant dense<0.000000e+00> : vector<32x100xf32>
    %41 = tpu.matmul %40, %38, %cst_41 {dimension_numbers = #tpu.dot_dimension_numbers<[1], [0], [0], [1], [0, 0, 1, 1], [], []>} : vector<32x3xf32>, vector<3x100xf32>, vector<32x100xf32> -> vector<32x100xf32>
    %42 = arith.addf %33, %41 : vector<32x100xf32>
    %c0_42 = arith.constant 0 : index
    %c0_43 = arith.constant 0 : index
    %c0_44 = arith.constant 0 : index
    %c0_45 = arith.constant 0 : index
    %43 = vector.load %arg1[%c0_42, %c0_43, %c0_44, %c0_45] : memref<1x4x3x100xf32, #tpu.memory_space<vmem>>, vector<1x1x3x100xf32>
    %44 = vector.shape_cast %43 : vector<1x1x3x100xf32> to vector<3x100xf32>
    %45 = vector.extract_strided_slice %44 {offsets = [0, 10], sizes = [3, 90], strides = [1, 1]} : vector<3x100xf32> to vector<3x90xf32>
    %46 = vector.extract_strided_slice %44 {offsets = [0, 0], sizes = [3, 10], strides = [1, 1]} : vector<3x100xf32> to vector<3x10xf32>
    %47 = tpu.concatenate %45, %46 in 1 : vector<3x90xf32>, vector<3x10xf32> -> vector<3x100xf32>
    %c6 = arith.constant 6 : index
    %c0_46 = arith.constant 0 : index
    %c0_47 = arith.constant 0 : index
    %48 = vector.load %arg2[%c6, %c0_46, %c0_47] : memref<9x32x3xf32, #tpu.memory_space<vmem>>, vector<1x32x3xf32>
    %49 = vector.shape_cast %48 : vector<1x32x3xf32> to vector<32x3xf32>
    %cst_48 = arith.constant dense<0.000000e+00> : vector<32x100xf32>
    %50 = tpu.matmul %49, %47, %cst_48 {dimension_numbers = #tpu.dot_dimension_numbers<[1], [0], [0], [1], [0, 0, 1, 1], [], []>} : vector<32x3xf32>, vector<3x100xf32>, vector<32x100xf32> -> vector<32x100xf32>
    %51 = arith.addf %42, %50 : vector<32x100xf32>
    %c0_49 = arith.constant 0 : index
    %c1_50 = arith.constant 1 : index
    %c0_51 = arith.constant 0 : index
    %c0_52 = arith.constant 0 : index
    %52 = vector.load %arg1[%c0_49, %c1_50, %c0_51, %c0_52] : memref<1x4x3x100xf32, #tpu.memory_space<vmem>>, vector<1x1x3x100xf32>
    %53 = vector.shape_cast %52 : vector<1x1x3x100xf32> to vector<3x100xf32>
    %54 = vector.extract_strided_slice %53 {offsets = [0, 10], sizes = [3, 90], strides = [1, 1]} : vector<3x100xf32> to vector<3x90xf32>
    %55 = vector.extract_strided_slice %53 {offsets = [0, 0], sizes = [3, 10], strides = [1, 1]} : vector<3x100xf32> to vector<3x10xf32>
    %56 = tpu.concatenate %54, %55 in 1 : vector<3x90xf32>, vector<3x10xf32> -> vector<3x100xf32>
    %c7 = arith.constant 7 : index
    %c0_53 = arith.constant 0 : index
    %c0_54 = arith.constant 0 : index
    %57 = vector.load %arg2[%c7, %c0_53, %c0_54] : memref<9x32x3xf32, #tpu.memory_space<vmem>>, vector<1x32x3xf32>
    %58 = vector.shape_cast %57 : vector<1x32x3xf32> to vector<32x3xf32>
    %cst_55 = arith.constant dense<0.000000e+00> : vector<32x100xf32>
    %59 = tpu.matmul %58, %56, %cst_55 {dimension_numbers = #tpu.dot_dimension_numbers<[1], [0], [0], [1], [0, 0, 1, 1], [], []>} : vector<32x3xf32>, vector<3x100xf32>, vector<32x100xf32> -> vector<32x100xf32>
    %60 = arith.addf %51, %59 : vector<32x100xf32>
    %c0_56 = arith.constant 0 : index
    %c0_57 = arith.constant 0 : index
    %c0_58 = arith.constant 0 : index
    %c0_59 = arith.constant 0 : index
    %61 = vector.load %arg1[%c0_56, %c0_57, %c0_58, %c0_59] : memref<1x4x3x100xf32, #tpu.memory_space<vmem>>, vector<1x1x3x100xf32>
    %62 = vector.shape_cast %61 : vector<1x1x3x100xf32> to vector<3x100xf32>
    %63 = vector.extract_strided_slice %62 {offsets = [0, 11], sizes = [3, 89], strides = [1, 1]} : vector<3x100xf32> to vector<3x89xf32>
    %64 = vector.extract_strided_slice %62 {offsets = [0, 0], sizes = [3, 11], strides = [1, 1]} : vector<3x100xf32> to vector<3x11xf32>
    %65 = tpu.concatenate %63, %64 in 1 : vector<3x89xf32>, vector<3x11xf32> -> vector<3x100xf32>
    %c8 = arith.constant 8 : index
    %c0_60 = arith.constant 0 : index
    %c0_61 = arith.constant 0 : index
    %66 = vector.load %arg2[%c8, %c0_60, %c0_61] : memref<9x32x3xf32, #tpu.memory_space<vmem>>, vector<1x32x3xf32>
    %67 = vector.shape_cast %66 : vector<1x32x3xf32> to vector<32x3xf32>
    %cst_62 = arith.constant dense<0.000000e+00> : vector<32x100xf32>
    %68 = tpu.matmul %67, %65, %cst_62 {dimension_numbers = #tpu.dot_dimension_numbers<[1], [0], [0], [1], [0, 0, 1, 1], [], []>} : vector<32x3xf32>, vector<3x100xf32>, vector<32x100xf32> -> vector<32x100xf32>
    %69 = arith.addf %60, %68 : vector<32x100xf32>
    %c0_63 = arith.constant 0 : index
    %c0_64 = arith.constant 0 : index
    %70 = vector.load %arg3[%c0_63, %c0_64] : memref<32x1xf32, #tpu.memory_space<vmem>>, vector<32x1xf32>
    %71 = vector.broadcast %70 : vector<32x1xf32> to vector<32x100xf32>
    %72 = arith.addf %69, %71 : vector<32x100xf32>
    %cst_65 = arith.constant 0.000000e+00 : f32
    %73 = vector.broadcast %cst_65 : f32 to vector<32x100xf32>
    %74 = arith.maximumf %72, %73 : vector<32x100xf32>
    %cst_66 = arith.constant 0.000000e+00 : f32
    %75 = vector.broadcast %cst_66 : f32 to vector<32x100xf32>
    %c0_67 = arith.constant 0 : index
    %c0_68 = arith.constant 0 : index
    %c0_69 = arith.constant 0 : index
    %76 = vector.load %arg4[%c0_67, %c0_68, %c0_69] : memref<9x32x32xf32, #tpu.memory_space<vmem>>, vector<1x32x32xf32>
    %77 = vector.shape_cast %76 : vector<1x32x32xf32> to vector<32x32xf32>
    %cst_70 = arith.constant dense<0.000000e+00> : vector<32x100xf32>
    %78 = tpu.matmul %77, %74, %cst_70 {dimension_numbers = #tpu.dot_dimension_numbers<[1], [0], [0], [1], [0, 0, 1, 1], [], []>} : vector<32x32xf32>, vector<32x100xf32>, vector<32x100xf32> -> vector<32x100xf32>
    %79 = arith.addf %75, %78 : vector<32x100xf32>
    %80 = vector.extract_strided_slice %74 {offsets = [0, 1], sizes = [32, 99], strides = [1, 1]} : vector<32x100xf32> to vector<32x99xf32>
    %81 = vector.extract_strided_slice %74 {offsets = [0, 0], sizes = [32, 1], strides = [1, 1]} : vector<32x100xf32> to vector<32x1xf32>
    %82 = tpu.concatenate %80, %81 in 1 : vector<32x99xf32>, vector<32x1xf32> -> vector<32x100xf32>
    %c1_71 = arith.constant 1 : index
    %c0_72 = arith.constant 0 : index
    %c0_73 = arith.constant 0 : index
    %83 = vector.load %arg4[%c1_71, %c0_72, %c0_73] : memref<9x32x32xf32, #tpu.memory_space<vmem>>, vector<1x32x32xf32>
    %84 = vector.shape_cast %83 : vector<1x32x32xf32> to vector<32x32xf32>
    %cst_74 = arith.constant dense<0.000000e+00> : vector<32x100xf32>
    %85 = tpu.matmul %84, %82, %cst_74 {dimension_numbers = #tpu.dot_dimension_numbers<[1], [0], [0], [1], [0, 0, 1, 1], [], []>} : vector<32x32xf32>, vector<32x100xf32>, vector<32x100xf32> -> vector<32x100xf32>
    %86 = arith.addf %79, %85 : vector<32x100xf32>
    %87 = vector.extract_strided_slice %74 {offsets = [0, 2], sizes = [32, 98], strides = [1, 1]} : vector<32x100xf32> to vector<32x98xf32>
    %88 = vector.extract_strided_slice %74 {offsets = [0, 0], sizes = [32, 2], strides = [1, 1]} : vector<32x100xf32> to vector<32x2xf32>
    %89 = tpu.concatenate %87, %88 in 1 : vector<32x98xf32>, vector<32x2xf32> -> vector<32x100xf32>
    %c2_75 = arith.constant 2 : index
    %c0_76 = arith.constant 0 : index
    %c0_77 = arith.constant 0 : index
    %90 = vector.load %arg4[%c2_75, %c0_76, %c0_77] : memref<9x32x32xf32, #tpu.memory_space<vmem>>, vector<1x32x32xf32>
    %91 = vector.shape_cast %90 : vector<1x32x32xf32> to vector<32x32xf32>
    %cst_78 = arith.constant dense<0.000000e+00> : vector<32x100xf32>
    %92 = tpu.matmul %91, %89, %cst_78 {dimension_numbers = #tpu.dot_dimension_numbers<[1], [0], [0], [1], [0, 0, 1, 1], [], []>} : vector<32x32xf32>, vector<32x100xf32>, vector<32x100xf32> -> vector<32x100xf32>
    %93 = arith.addf %86, %92 : vector<32x100xf32>
    %94 = vector.extract_strided_slice %74 {offsets = [0, 10], sizes = [32, 90], strides = [1, 1]} : vector<32x100xf32> to vector<32x90xf32>
    %95 = vector.extract_strided_slice %74 {offsets = [0, 0], sizes = [32, 10], strides = [1, 1]} : vector<32x100xf32> to vector<32x10xf32>
    %96 = tpu.concatenate %94, %95 in 1 : vector<32x90xf32>, vector<32x10xf32> -> vector<32x100xf32>
    %c3_79 = arith.constant 3 : index
    %c0_80 = arith.constant 0 : index
    %c0_81 = arith.constant 0 : index
    %97 = vector.load %arg4[%c3_79, %c0_80, %c0_81] : memref<9x32x32xf32, #tpu.memory_space<vmem>>, vector<1x32x32xf32>
    %98 = vector.shape_cast %97 : vector<1x32x32xf32> to vector<32x32xf32>
    %cst_82 = arith.constant dense<0.000000e+00> : vector<32x100xf32>
    %99 = tpu.matmul %98, %96, %cst_82 {dimension_numbers = #tpu.dot_dimension_numbers<[1], [0], [0], [1], [0, 0, 1, 1], [], []>} : vector<32x32xf32>, vector<32x100xf32>, vector<32x100xf32> -> vector<32x100xf32>
    %100 = arith.addf %93, %99 : vector<32x100xf32>
    %101 = vector.extract_strided_slice %74 {offsets = [0, 11], sizes = [32, 89], strides = [1, 1]} : vector<32x100xf32> to vector<32x89xf32>
    %102 = vector.extract_strided_slice %74 {offsets = [0, 0], sizes = [32, 11], strides = [1, 1]} : vector<32x100xf32> to vector<32x11xf32>
    %103 = tpu.concatenate %101, %102 in 1 : vector<32x89xf32>, vector<32x11xf32> -> vector<32x100xf32>
    %c4_83 = arith.constant 4 : index
    %c0_84 = arith.constant 0 : index
    %c0_85 = arith.constant 0 : index
    %104 = vector.load %arg4[%c4_83, %c0_84, %c0_85] : memref<9x32x32xf32, #tpu.memory_space<vmem>>, vector<1x32x32xf32>
    %105 = vector.shape_cast %104 : vector<1x32x32xf32> to vector<32x32xf32>
    %cst_86 = arith.constant dense<0.000000e+00> : vector<32x100xf32>
    %106 = tpu.matmul %105, %103, %cst_86 {dimension_numbers = #tpu.dot_dimension_numbers<[1], [0], [0], [1], [0, 0, 1, 1], [], []>} : vector<32x32xf32>, vector<32x100xf32>, vector<32x100xf32> -> vector<32x100xf32>
    %107 = arith.addf %100, %106 : vector<32x100xf32>
    %108 = vector.extract_strided_slice %74 {offsets = [0, 12], sizes = [32, 88], strides = [1, 1]} : vector<32x100xf32> to vector<32x88xf32>
    %109 = vector.extract_strided_slice %74 {offsets = [0, 0], sizes = [32, 12], strides = [1, 1]} : vector<32x100xf32> to vector<32x12xf32>
    %110 = tpu.concatenate %108, %109 in 1 : vector<32x88xf32>, vector<32x12xf32> -> vector<32x100xf32>
    %c5_87 = arith.constant 5 : index
    %c0_88 = arith.constant 0 : index
    %c0_89 = arith.constant 0 : index
    %111 = vector.load %arg4[%c5_87, %c0_88, %c0_89] : memref<9x32x32xf32, #tpu.memory_space<vmem>>, vector<1x32x32xf32>
    %112 = vector.shape_cast %111 : vector<1x32x32xf32> to vector<32x32xf32>
    %cst_90 = arith.constant dense<0.000000e+00> : vector<32x100xf32>
    %113 = tpu.matmul %112, %110, %cst_90 {dimension_numbers = #tpu.dot_dimension_numbers<[1], [0], [0], [1], [0, 0, 1, 1], [], []>} : vector<32x32xf32>, vector<32x100xf32>, vector<32x100xf32> -> vector<32x100xf32>
    %114 = arith.addf %107, %113 : vector<32x100xf32>
    %115 = vector.extract_strided_slice %74 {offsets = [0, 20], sizes = [32, 80], strides = [1, 1]} : vector<32x100xf32> to vector<32x80xf32>
    %116 = vector.extract_strided_slice %74 {offsets = [0, 0], sizes = [32, 20], strides = [1, 1]} : vector<32x100xf32> to vector<32x20xf32>
    %117 = tpu.concatenate %115, %116 in 1 : vector<32x80xf32>, vector<32x20xf32> -> vector<32x100xf32>
    %c6_91 = arith.constant 6 : index
    %c0_92 = arith.constant 0 : index
    %c0_93 = arith.constant 0 : index
    %118 = vector.load %arg4[%c6_91, %c0_92, %c0_93] : memref<9x32x32xf32, #tpu.memory_space<vmem>>, vector<1x32x32xf32>
    %119 = vector.shape_cast %118 : vector<1x32x32xf32> to vector<32x32xf32>
    %cst_94 = arith.constant dense<0.000000e+00> : vector<32x100xf32>
    %120 = tpu.matmul %119, %117, %cst_94 {dimension_numbers = #tpu.dot_dimension_numbers<[1], [0], [0], [1], [0, 0, 1, 1], [], []>} : vector<32x32xf32>, vector<32x100xf32>, vector<32x100xf32> -> vector<32x100xf32>
    %121 = arith.addf %114, %120 : vector<32x100xf32>
    %122 = vector.extract_strided_slice %74 {offsets = [0, 21], sizes = [32, 79], strides = [1, 1]} : vector<32x100xf32> to vector<32x79xf32>
    %123 = vector.extract_strided_slice %74 {offsets = [0, 0], sizes = [32, 21], strides = [1, 1]} : vector<32x100xf32> to vector<32x21xf32>
    %124 = tpu.concatenate %122, %123 in 1 : vector<32x79xf32>, vector<32x21xf32> -> vector<32x100xf32>
    %c7_95 = arith.constant 7 : index
    %c0_96 = arith.constant 0 : index
    %c0_97 = arith.constant 0 : index
    %125 = vector.load %arg4[%c7_95, %c0_96, %c0_97] : memref<9x32x32xf32, #tpu.memory_space<vmem>>, vector<1x32x32xf32>
    %126 = vector.shape_cast %125 : vector<1x32x32xf32> to vector<32x32xf32>
    %cst_98 = arith.constant dense<0.000000e+00> : vector<32x100xf32>
    %127 = tpu.matmul %126, %124, %cst_98 {dimension_numbers = #tpu.dot_dimension_numbers<[1], [0], [0], [1], [0, 0, 1, 1], [], []>} : vector<32x32xf32>, vector<32x100xf32>, vector<32x100xf32> -> vector<32x100xf32>
    %128 = arith.addf %121, %127 : vector<32x100xf32>
    %129 = vector.extract_strided_slice %74 {offsets = [0, 22], sizes = [32, 78], strides = [1, 1]} : vector<32x100xf32> to vector<32x78xf32>
    %130 = vector.extract_strided_slice %74 {offsets = [0, 0], sizes = [32, 22], strides = [1, 1]} : vector<32x100xf32> to vector<32x22xf32>
    %131 = tpu.concatenate %129, %130 in 1 : vector<32x78xf32>, vector<32x22xf32> -> vector<32x100xf32>
    %c8_99 = arith.constant 8 : index
    %c0_100 = arith.constant 0 : index
    %c0_101 = arith.constant 0 : index
    %132 = vector.load %arg4[%c8_99, %c0_100, %c0_101] : memref<9x32x32xf32, #tpu.memory_space<vmem>>, vector<1x32x32xf32>
    %133 = vector.shape_cast %132 : vector<1x32x32xf32> to vector<32x32xf32>
    %cst_102 = arith.constant dense<0.000000e+00> : vector<32x100xf32>
    %134 = tpu.matmul %133, %131, %cst_102 {dimension_numbers = #tpu.dot_dimension_numbers<[1], [0], [0], [1], [0, 0, 1, 1], [], []>} : vector<32x32xf32>, vector<32x100xf32>, vector<32x100xf32> -> vector<32x100xf32>
    %135 = arith.addf %128, %134 : vector<32x100xf32>
    %c0_103 = arith.constant 0 : index
    %c0_104 = arith.constant 0 : index
    %136 = vector.load %arg5[%c0_103, %c0_104] : memref<32x1xf32, #tpu.memory_space<vmem>>, vector<32x1xf32>
    %137 = vector.broadcast %136 : vector<32x1xf32> to vector<32x100xf32>
    %138 = arith.addf %135, %137 : vector<32x100xf32>
    %cst_105 = arith.constant 0.000000e+00 : f32
    %139 = vector.broadcast %cst_105 : f32 to vector<32x100xf32>
    %140 = arith.maximumf %138, %139 : vector<32x100xf32>
    %cst_106 = arith.constant 0.000000e+00 : f32
    %141 = vector.broadcast %cst_106 : f32 to vector<32x100xf32>
    %c0_107 = arith.constant 0 : index
    %c0_108 = arith.constant 0 : index
    %c0_109 = arith.constant 0 : index
    %142 = vector.load %arg6[%c0_107, %c0_108, %c0_109] : memref<9x32x32xf32, #tpu.memory_space<vmem>>, vector<1x32x32xf32>
    %143 = vector.shape_cast %142 : vector<1x32x32xf32> to vector<32x32xf32>
    %cst_110 = arith.constant dense<0.000000e+00> : vector<32x100xf32>
    %144 = tpu.matmul %143, %140, %cst_110 {dimension_numbers = #tpu.dot_dimension_numbers<[1], [0], [0], [1], [0, 0, 1, 1], [], []>} : vector<32x32xf32>, vector<32x100xf32>, vector<32x100xf32> -> vector<32x100xf32>
    %145 = arith.addf %141, %144 : vector<32x100xf32>
    %146 = vector.extract_strided_slice %140 {offsets = [0, 1], sizes = [32, 99], strides = [1, 1]} : vector<32x100xf32> to vector<32x99xf32>
    %147 = vector.extract_strided_slice %140 {offsets = [0, 0], sizes = [32, 1], strides = [1, 1]} : vector<32x100xf32> to vector<32x1xf32>
    %148 = tpu.concatenate %146, %147 in 1 : vector<32x99xf32>, vector<32x1xf32> -> vector<32x100xf32>
    %c1_111 = arith.constant 1 : index
    %c0_112 = arith.constant 0 : index
    %c0_113 = arith.constant 0 : index
    %149 = vector.load %arg6[%c1_111, %c0_112, %c0_113] : memref<9x32x32xf32, #tpu.memory_space<vmem>>, vector<1x32x32xf32>
    %150 = vector.shape_cast %149 : vector<1x32x32xf32> to vector<32x32xf32>
    %cst_114 = arith.constant dense<0.000000e+00> : vector<32x100xf32>
    %151 = tpu.matmul %150, %148, %cst_114 {dimension_numbers = #tpu.dot_dimension_numbers<[1], [0], [0], [1], [0, 0, 1, 1], [], []>} : vector<32x32xf32>, vector<32x100xf32>, vector<32x100xf32> -> vector<32x100xf32>
    %152 = arith.addf %145, %151 : vector<32x100xf32>
    %153 = vector.extract_strided_slice %140 {offsets = [0, 2], sizes = [32, 98], strides = [1, 1]} : vector<32x100xf32> to vector<32x98xf32>
    %154 = vector.extract_strided_slice %140 {offsets = [0, 0], sizes = [32, 2], strides = [1, 1]} : vector<32x100xf32> to vector<32x2xf32>
    %155 = tpu.concatenate %153, %154 in 1 : vector<32x98xf32>, vector<32x2xf32> -> vector<32x100xf32>
    %c2_115 = arith.constant 2 : index
    %c0_116 = arith.constant 0 : index
    %c0_117 = arith.constant 0 : index
    %156 = vector.load %arg6[%c2_115, %c0_116, %c0_117] : memref<9x32x32xf32, #tpu.memory_space<vmem>>, vector<1x32x32xf32>
    %157 = vector.shape_cast %156 : vector<1x32x32xf32> to vector<32x32xf32>
    %cst_118 = arith.constant dense<0.000000e+00> : vector<32x100xf32>
    %158 = tpu.matmul %157, %155, %cst_118 {dimension_numbers = #tpu.dot_dimension_numbers<[1], [0], [0], [1], [0, 0, 1, 1], [], []>} : vector<32x32xf32>, vector<32x100xf32>, vector<32x100xf32> -> vector<32x100xf32>
    %159 = arith.addf %152, %158 : vector<32x100xf32>
    %160 = vector.extract_strided_slice %140 {offsets = [0, 10], sizes = [32, 90], strides = [1, 1]} : vector<32x100xf32> to vector<32x90xf32>
    %161 = vector.extract_strided_slice %140 {offsets = [0, 0], sizes = [32, 10], strides = [1, 1]} : vector<32x100xf32> to vector<32x10xf32>
    %162 = tpu.concatenate %160, %161 in 1 : vector<32x90xf32>, vector<32x10xf32> -> vector<32x100xf32>
    %c3_119 = arith.constant 3 : index
    %c0_120 = arith.constant 0 : index
    %c0_121 = arith.constant 0 : index
    %163 = vector.load %arg6[%c3_119, %c0_120, %c0_121] : memref<9x32x32xf32, #tpu.memory_space<vmem>>, vector<1x32x32xf32>
    %164 = vector.shape_cast %163 : vector<1x32x32xf32> to vector<32x32xf32>
    %cst_122 = arith.constant dense<0.000000e+00> : vector<32x100xf32>
    %165 = tpu.matmul %164, %162, %cst_122 {dimension_numbers = #tpu.dot_dimension_numbers<[1], [0], [0], [1], [0, 0, 1, 1], [], []>} : vector<32x32xf32>, vector<32x100xf32>, vector<32x100xf32> -> vector<32x100xf32>
    %166 = arith.addf %159, %165 : vector<32x100xf32>
    %167 = vector.extract_strided_slice %140 {offsets = [0, 11], sizes = [32, 89], strides = [1, 1]} : vector<32x100xf32> to vector<32x89xf32>
    %168 = vector.extract_strided_slice %140 {offsets = [0, 0], sizes = [32, 11], strides = [1, 1]} : vector<32x100xf32> to vector<32x11xf32>
    %169 = tpu.concatenate %167, %168 in 1 : vector<32x89xf32>, vector<32x11xf32> -> vector<32x100xf32>
    %c4_123 = arith.constant 4 : index
    %c0_124 = arith.constant 0 : index
    %c0_125 = arith.constant 0 : index
    %170 = vector.load %arg6[%c4_123, %c0_124, %c0_125] : memref<9x32x32xf32, #tpu.memory_space<vmem>>, vector<1x32x32xf32>
    %171 = vector.shape_cast %170 : vector<1x32x32xf32> to vector<32x32xf32>
    %cst_126 = arith.constant dense<0.000000e+00> : vector<32x100xf32>
    %172 = tpu.matmul %171, %169, %cst_126 {dimension_numbers = #tpu.dot_dimension_numbers<[1], [0], [0], [1], [0, 0, 1, 1], [], []>} : vector<32x32xf32>, vector<32x100xf32>, vector<32x100xf32> -> vector<32x100xf32>
    %173 = arith.addf %166, %172 : vector<32x100xf32>
    %174 = vector.extract_strided_slice %140 {offsets = [0, 12], sizes = [32, 88], strides = [1, 1]} : vector<32x100xf32> to vector<32x88xf32>
    %175 = vector.extract_strided_slice %140 {offsets = [0, 0], sizes = [32, 12], strides = [1, 1]} : vector<32x100xf32> to vector<32x12xf32>
    %176 = tpu.concatenate %174, %175 in 1 : vector<32x88xf32>, vector<32x12xf32> -> vector<32x100xf32>
    %c5_127 = arith.constant 5 : index
    %c0_128 = arith.constant 0 : index
    %c0_129 = arith.constant 0 : index
    %177 = vector.load %arg6[%c5_127, %c0_128, %c0_129] : memref<9x32x32xf32, #tpu.memory_space<vmem>>, vector<1x32x32xf32>
    %178 = vector.shape_cast %177 : vector<1x32x32xf32> to vector<32x32xf32>
    %cst_130 = arith.constant dense<0.000000e+00> : vector<32x100xf32>
    %179 = tpu.matmul %178, %176, %cst_130 {dimension_numbers = #tpu.dot_dimension_numbers<[1], [0], [0], [1], [0, 0, 1, 1], [], []>} : vector<32x32xf32>, vector<32x100xf32>, vector<32x100xf32> -> vector<32x100xf32>
    %180 = arith.addf %173, %179 : vector<32x100xf32>
    %181 = vector.extract_strided_slice %140 {offsets = [0, 20], sizes = [32, 80], strides = [1, 1]} : vector<32x100xf32> to vector<32x80xf32>
    %182 = vector.extract_strided_slice %140 {offsets = [0, 0], sizes = [32, 20], strides = [1, 1]} : vector<32x100xf32> to vector<32x20xf32>
    %183 = tpu.concatenate %181, %182 in 1 : vector<32x80xf32>, vector<32x20xf32> -> vector<32x100xf32>
    %c6_131 = arith.constant 6 : index
    %c0_132 = arith.constant 0 : index
    %c0_133 = arith.constant 0 : index
    %184 = vector.load %arg6[%c6_131, %c0_132, %c0_133] : memref<9x32x32xf32, #tpu.memory_space<vmem>>, vector<1x32x32xf32>
    %185 = vector.shape_cast %184 : vector<1x32x32xf32> to vector<32x32xf32>
    %cst_134 = arith.constant dense<0.000000e+00> : vector<32x100xf32>
    %186 = tpu.matmul %185, %183, %cst_134 {dimension_numbers = #tpu.dot_dimension_numbers<[1], [0], [0], [1], [0, 0, 1, 1], [], []>} : vector<32x32xf32>, vector<32x100xf32>, vector<32x100xf32> -> vector<32x100xf32>
    %187 = arith.addf %180, %186 : vector<32x100xf32>
    %188 = vector.extract_strided_slice %140 {offsets = [0, 21], sizes = [32, 79], strides = [1, 1]} : vector<32x100xf32> to vector<32x79xf32>
    %189 = vector.extract_strided_slice %140 {offsets = [0, 0], sizes = [32, 21], strides = [1, 1]} : vector<32x100xf32> to vector<32x21xf32>
    %190 = tpu.concatenate %188, %189 in 1 : vector<32x79xf32>, vector<32x21xf32> -> vector<32x100xf32>
    %c7_135 = arith.constant 7 : index
    %c0_136 = arith.constant 0 : index
    %c0_137 = arith.constant 0 : index
    %191 = vector.load %arg6[%c7_135, %c0_136, %c0_137] : memref<9x32x32xf32, #tpu.memory_space<vmem>>, vector<1x32x32xf32>
    %192 = vector.shape_cast %191 : vector<1x32x32xf32> to vector<32x32xf32>
    %cst_138 = arith.constant dense<0.000000e+00> : vector<32x100xf32>
    %193 = tpu.matmul %192, %190, %cst_138 {dimension_numbers = #tpu.dot_dimension_numbers<[1], [0], [0], [1], [0, 0, 1, 1], [], []>} : vector<32x32xf32>, vector<32x100xf32>, vector<32x100xf32> -> vector<32x100xf32>
    %194 = arith.addf %187, %193 : vector<32x100xf32>
    %195 = vector.extract_strided_slice %140 {offsets = [0, 22], sizes = [32, 78], strides = [1, 1]} : vector<32x100xf32> to vector<32x78xf32>
    %196 = vector.extract_strided_slice %140 {offsets = [0, 0], sizes = [32, 22], strides = [1, 1]} : vector<32x100xf32> to vector<32x22xf32>
    %197 = tpu.concatenate %195, %196 in 1 : vector<32x78xf32>, vector<32x22xf32> -> vector<32x100xf32>
    %c8_139 = arith.constant 8 : index
    %c0_140 = arith.constant 0 : index
    %c0_141 = arith.constant 0 : index
    %198 = vector.load %arg6[%c8_139, %c0_140, %c0_141] : memref<9x32x32xf32, #tpu.memory_space<vmem>>, vector<1x32x32xf32>
    %199 = vector.shape_cast %198 : vector<1x32x32xf32> to vector<32x32xf32>
    %cst_142 = arith.constant dense<0.000000e+00> : vector<32x100xf32>
    %200 = tpu.matmul %199, %197, %cst_142 {dimension_numbers = #tpu.dot_dimension_numbers<[1], [0], [0], [1], [0, 0, 1, 1], [], []>} : vector<32x32xf32>, vector<32x100xf32>, vector<32x100xf32> -> vector<32x100xf32>
    %201 = arith.addf %194, %200 : vector<32x100xf32>
    %c0_143 = arith.constant 0 : index
    %c0_144 = arith.constant 0 : index
    %202 = vector.load %arg7[%c0_143, %c0_144] : memref<32x1xf32, #tpu.memory_space<vmem>>, vector<32x1xf32>
    %203 = vector.broadcast %202 : vector<32x1xf32> to vector<32x100xf32>
    %204 = arith.addf %201, %203 : vector<32x100xf32>
    %cst_145 = arith.constant 0.000000e+00 : f32
    %205 = vector.broadcast %cst_145 : f32 to vector<32x100xf32>
    %206 = arith.maximumf %204, %205 : vector<32x100xf32>
    %cst_146 = arith.constant 0.000000e+00 : f32
    %207 = vector.broadcast %cst_146 : f32 to vector<32x100xf32>
    %c0_147 = arith.constant 0 : index
    %c0_148 = arith.constant 0 : index
    %c0_149 = arith.constant 0 : index
    %208 = vector.load %arg8[%c0_147, %c0_148, %c0_149] : memref<9x32x32xf32, #tpu.memory_space<vmem>>, vector<1x32x32xf32>
    %209 = vector.shape_cast %208 : vector<1x32x32xf32> to vector<32x32xf32>
    %cst_150 = arith.constant dense<0.000000e+00> : vector<32x100xf32>
    %210 = tpu.matmul %209, %206, %cst_150 {dimension_numbers = #tpu.dot_dimension_numbers<[1], [0], [0], [1], [0, 0, 1, 1], [], []>} : vector<32x32xf32>, vector<32x100xf32>, vector<32x100xf32> -> vector<32x100xf32>
    %211 = arith.addf %207, %210 : vector<32x100xf32>
    %212 = vector.extract_strided_slice %206 {offsets = [0, 1], sizes = [32, 99], strides = [1, 1]} : vector<32x100xf32> to vector<32x99xf32>
    %213 = vector.extract_strided_slice %206 {offsets = [0, 0], sizes = [32, 1], strides = [1, 1]} : vector<32x100xf32> to vector<32x1xf32>
    %214 = tpu.concatenate %212, %213 in 1 : vector<32x99xf32>, vector<32x1xf32> -> vector<32x100xf32>
    %c1_151 = arith.constant 1 : index
    %c0_152 = arith.constant 0 : index
    %c0_153 = arith.constant 0 : index
    %215 = vector.load %arg8[%c1_151, %c0_152, %c0_153] : memref<9x32x32xf32, #tpu.memory_space<vmem>>, vector<1x32x32xf32>
    %216 = vector.shape_cast %215 : vector<1x32x32xf32> to vector<32x32xf32>
    %cst_154 = arith.constant dense<0.000000e+00> : vector<32x100xf32>
    %217 = tpu.matmul %216, %214, %cst_154 {dimension_numbers = #tpu.dot_dimension_numbers<[1], [0], [0], [1], [0, 0, 1, 1], [], []>} : vector<32x32xf32>, vector<32x100xf32>, vector<32x100xf32> -> vector<32x100xf32>
    %218 = arith.addf %211, %217 : vector<32x100xf32>
    %219 = vector.extract_strided_slice %206 {offsets = [0, 2], sizes = [32, 98], strides = [1, 1]} : vector<32x100xf32> to vector<32x98xf32>
    %220 = vector.extract_strided_slice %206 {offsets = [0, 0], sizes = [32, 2], strides = [1, 1]} : vector<32x100xf32> to vector<32x2xf32>
    %221 = tpu.concatenate %219, %220 in 1 : vector<32x98xf32>, vector<32x2xf32> -> vector<32x100xf32>
    %c2_155 = arith.constant 2 : index
    %c0_156 = arith.constant 0 : index
    %c0_157 = arith.constant 0 : index
    %222 = vector.load %arg8[%c2_155, %c0_156, %c0_157] : memref<9x32x32xf32, #tpu.memory_space<vmem>>, vector<1x32x32xf32>
    %223 = vector.shape_cast %222 : vector<1x32x32xf32> to vector<32x32xf32>
    %cst_158 = arith.constant dense<0.000000e+00> : vector<32x100xf32>
    %224 = tpu.matmul %223, %221, %cst_158 {dimension_numbers = #tpu.dot_dimension_numbers<[1], [0], [0], [1], [0, 0, 1, 1], [], []>} : vector<32x32xf32>, vector<32x100xf32>, vector<32x100xf32> -> vector<32x100xf32>
    %225 = arith.addf %218, %224 : vector<32x100xf32>
    %226 = vector.extract_strided_slice %206 {offsets = [0, 10], sizes = [32, 90], strides = [1, 1]} : vector<32x100xf32> to vector<32x90xf32>
    %227 = vector.extract_strided_slice %206 {offsets = [0, 0], sizes = [32, 10], strides = [1, 1]} : vector<32x100xf32> to vector<32x10xf32>
    %228 = tpu.concatenate %226, %227 in 1 : vector<32x90xf32>, vector<32x10xf32> -> vector<32x100xf32>
    %c3_159 = arith.constant 3 : index
    %c0_160 = arith.constant 0 : index
    %c0_161 = arith.constant 0 : index
    %229 = vector.load %arg8[%c3_159, %c0_160, %c0_161] : memref<9x32x32xf32, #tpu.memory_space<vmem>>, vector<1x32x32xf32>
    %230 = vector.shape_cast %229 : vector<1x32x32xf32> to vector<32x32xf32>
    %cst_162 = arith.constant dense<0.000000e+00> : vector<32x100xf32>
    %231 = tpu.matmul %230, %228, %cst_162 {dimension_numbers = #tpu.dot_dimension_numbers<[1], [0], [0], [1], [0, 0, 1, 1], [], []>} : vector<32x32xf32>, vector<32x100xf32>, vector<32x100xf32> -> vector<32x100xf32>
    %232 = arith.addf %225, %231 : vector<32x100xf32>
    %233 = vector.extract_strided_slice %206 {offsets = [0, 11], sizes = [32, 89], strides = [1, 1]} : vector<32x100xf32> to vector<32x89xf32>
    %234 = vector.extract_strided_slice %206 {offsets = [0, 0], sizes = [32, 11], strides = [1, 1]} : vector<32x100xf32> to vector<32x11xf32>
    %235 = tpu.concatenate %233, %234 in 1 : vector<32x89xf32>, vector<32x11xf32> -> vector<32x100xf32>
    %c4_163 = arith.constant 4 : index
    %c0_164 = arith.constant 0 : index
    %c0_165 = arith.constant 0 : index
    %236 = vector.load %arg8[%c4_163, %c0_164, %c0_165] : memref<9x32x32xf32, #tpu.memory_space<vmem>>, vector<1x32x32xf32>
    %237 = vector.shape_cast %236 : vector<1x32x32xf32> to vector<32x32xf32>
    %cst_166 = arith.constant dense<0.000000e+00> : vector<32x100xf32>
    %238 = tpu.matmul %237, %235, %cst_166 {dimension_numbers = #tpu.dot_dimension_numbers<[1], [0], [0], [1], [0, 0, 1, 1], [], []>} : vector<32x32xf32>, vector<32x100xf32>, vector<32x100xf32> -> vector<32x100xf32>
    %239 = arith.addf %232, %238 : vector<32x100xf32>
    %240 = vector.extract_strided_slice %206 {offsets = [0, 12], sizes = [32, 88], strides = [1, 1]} : vector<32x100xf32> to vector<32x88xf32>
    %241 = vector.extract_strided_slice %206 {offsets = [0, 0], sizes = [32, 12], strides = [1, 1]} : vector<32x100xf32> to vector<32x12xf32>
    %242 = tpu.concatenate %240, %241 in 1 : vector<32x88xf32>, vector<32x12xf32> -> vector<32x100xf32>
    %c5_167 = arith.constant 5 : index
    %c0_168 = arith.constant 0 : index
    %c0_169 = arith.constant 0 : index
    %243 = vector.load %arg8[%c5_167, %c0_168, %c0_169] : memref<9x32x32xf32, #tpu.memory_space<vmem>>, vector<1x32x32xf32>
    %244 = vector.shape_cast %243 : vector<1x32x32xf32> to vector<32x32xf32>
    %cst_170 = arith.constant dense<0.000000e+00> : vector<32x100xf32>
    %245 = tpu.matmul %244, %242, %cst_170 {dimension_numbers = #tpu.dot_dimension_numbers<[1], [0], [0], [1], [0, 0, 1, 1], [], []>} : vector<32x32xf32>, vector<32x100xf32>, vector<32x100xf32> -> vector<32x100xf32>
    %246 = arith.addf %239, %245 : vector<32x100xf32>
    %247 = vector.extract_strided_slice %206 {offsets = [0, 20], sizes = [32, 80], strides = [1, 1]} : vector<32x100xf32> to vector<32x80xf32>
    %248 = vector.extract_strided_slice %206 {offsets = [0, 0], sizes = [32, 20], strides = [1, 1]} : vector<32x100xf32> to vector<32x20xf32>
    %249 = tpu.concatenate %247, %248 in 1 : vector<32x80xf32>, vector<32x20xf32> -> vector<32x100xf32>
    %c6_171 = arith.constant 6 : index
    %c0_172 = arith.constant 0 : index
    %c0_173 = arith.constant 0 : index
    %250 = vector.load %arg8[%c6_171, %c0_172, %c0_173] : memref<9x32x32xf32, #tpu.memory_space<vmem>>, vector<1x32x32xf32>
    %251 = vector.shape_cast %250 : vector<1x32x32xf32> to vector<32x32xf32>
    %cst_174 = arith.constant dense<0.000000e+00> : vector<32x100xf32>
    %252 = tpu.matmul %251, %249, %cst_174 {dimension_numbers = #tpu.dot_dimension_numbers<[1], [0], [0], [1], [0, 0, 1, 1], [], []>} : vector<32x32xf32>, vector<32x100xf32>, vector<32x100xf32> -> vector<32x100xf32>
    %253 = arith.addf %246, %252 : vector<32x100xf32>
    %254 = vector.extract_strided_slice %206 {offsets = [0, 21], sizes = [32, 79], strides = [1, 1]} : vector<32x100xf32> to vector<32x79xf32>
    %255 = vector.extract_strided_slice %206 {offsets = [0, 0], sizes = [32, 21], strides = [1, 1]} : vector<32x100xf32> to vector<32x21xf32>
    %256 = tpu.concatenate %254, %255 in 1 : vector<32x79xf32>, vector<32x21xf32> -> vector<32x100xf32>
    %c7_175 = arith.constant 7 : index
    %c0_176 = arith.constant 0 : index
    %c0_177 = arith.constant 0 : index
    %257 = vector.load %arg8[%c7_175, %c0_176, %c0_177] : memref<9x32x32xf32, #tpu.memory_space<vmem>>, vector<1x32x32xf32>
    %258 = vector.shape_cast %257 : vector<1x32x32xf32> to vector<32x32xf32>
    %cst_178 = arith.constant dense<0.000000e+00> : vector<32x100xf32>
    %259 = tpu.matmul %258, %256, %cst_178 {dimension_numbers = #tpu.dot_dimension_numbers<[1], [0], [0], [1], [0, 0, 1, 1], [], []>} : vector<32x32xf32>, vector<32x100xf32>, vector<32x100xf32> -> vector<32x100xf32>
    %260 = arith.addf %253, %259 : vector<32x100xf32>
    %261 = vector.extract_strided_slice %206 {offsets = [0, 22], sizes = [32, 78], strides = [1, 1]} : vector<32x100xf32> to vector<32x78xf32>
    %262 = vector.extract_strided_slice %206 {offsets = [0, 0], sizes = [32, 22], strides = [1, 1]} : vector<32x100xf32> to vector<32x22xf32>
    %263 = tpu.concatenate %261, %262 in 1 : vector<32x78xf32>, vector<32x22xf32> -> vector<32x100xf32>
    %c8_179 = arith.constant 8 : index
    %c0_180 = arith.constant 0 : index
    %c0_181 = arith.constant 0 : index
    %264 = vector.load %arg8[%c8_179, %c0_180, %c0_181] : memref<9x32x32xf32, #tpu.memory_space<vmem>>, vector<1x32x32xf32>
    %265 = vector.shape_cast %264 : vector<1x32x32xf32> to vector<32x32xf32>
    %cst_182 = arith.constant dense<0.000000e+00> : vector<32x100xf32>
    %266 = tpu.matmul %265, %263, %cst_182 {dimension_numbers = #tpu.dot_dimension_numbers<[1], [0], [0], [1], [0, 0, 1, 1], [], []>} : vector<32x32xf32>, vector<32x100xf32>, vector<32x100xf32> -> vector<32x100xf32>
    %267 = arith.addf %260, %266 : vector<32x100xf32>
    %c0_183 = arith.constant 0 : index
    %c0_184 = arith.constant 0 : index
    %268 = vector.load %arg9[%c0_183, %c0_184] : memref<32x1xf32, #tpu.memory_space<vmem>>, vector<32x1xf32>
    %269 = vector.broadcast %268 : vector<32x1xf32> to vector<32x100xf32>
    %270 = arith.addf %267, %269 : vector<32x100xf32>
    %cst_185 = arith.constant 0.000000e+00 : f32
    %271 = vector.broadcast %cst_185 : f32 to vector<32x100xf32>
    %272 = arith.maximumf %270, %271 : vector<32x100xf32>
    %c0_186 = arith.constant 0 : index
    %c0_187 = arith.constant 0 : index
    %c0_188 = arith.constant 0 : index
    %273 = vector.load %arg10[%c0_186, %c0_187, %c0_188] : memref<1x32x100xf32, #tpu.memory_space<vmem>>, vector<1x32x100xf32>
    %274 = vector.shape_cast %273 : vector<1x32x100xf32> to vector<32x100xf32>
    %275 = vector.shape_cast %272 : vector<32x100xf32> to vector<1x32x100xf32>
    tpu.vector_store %arg10[%c0_186, %c0_187, %c0_188], %275 {strides = array<i32>} : memref<1x32x100xf32, #tpu.memory_space<vmem>>, vector<1x32x100xf32>,
    return
  }
  func.func @transform_0(%arg0: i32) -> (i32, i32, i32, i32) {
    %c0_i32 = arith.constant 0 : i32
    %c0_i32_0 = arith.constant 0 : i32
    %c0_i32_1 = arith.constant 0 : i32
    %c0_i32_2 = arith.constant 0 : i32
    return %arg0, %c0_i32, %c0_i32_0, %c0_i32_1 : i32, i32, i32, i32
  }
  func.func @transform_1(%arg0: i32) -> (i32, i32, i32) {
    %c0_i32 = arith.constant 0 : i32
    %c0_i32_0 = arith.constant 0 : i32
    %c0_i32_1 = arith.constant 0 : i32
    %c0_i32_2 = arith.constant 0 : i32
    return %c0_i32, %c0_i32_0, %c0_i32_1 : i32, i32, i32
  }
  func.func @transform_2(%arg0: i32) -> (i32, i32) {
    %c0_i32 = arith.constant 0 : i32
    %c0_i32_0 = arith.constant 0 : i32
    %c0_i32_1 = arith.constant 0 : i32
    return %c0_i32, %c0_i32_0 : i32, i32
  }
  func.func @transform_3(%arg0: i32) -> (i32, i32, i32) {
    %c0_i32 = arith.constant 0 : i32
    %c0_i32_0 = arith.constant 0 : i32
    %c0_i32_1 = arith.constant 0 : i32
    %c0_i32_2 = arith.constant 0 : i32
    return %c0_i32, %c0_i32_0, %c0_i32_1 : i32, i32, i32
  }
  func.func @transform_4(%arg0: i32) -> (i32, i32) {
    %c0_i32 = arith.constant 0 : i32
    %c0_i32_0 = arith.constant 0 : i32
    %c0_i32_1 = arith.constant 0 : i32
    return %c0_i32, %c0_i32_0 : i32, i32
  }
  func.func @transform_5(%arg0: i32) -> (i32, i32, i32) {
    %c0_i32 = arith.constant 0 : i32
    %c0_i32_0 = arith.constant 0 : i32
    %c0_i32_1 = arith.constant 0 : i32
    %c0_i32_2 = arith.constant 0 : i32
    return %c0_i32, %c0_i32_0, %c0_i32_1 : i32, i32, i32
  }
  func.func @transform_6(%arg0: i32) -> (i32, i32) {
    %c0_i32 = arith.constant 0 : i32
    %c0_i32_0 = arith.constant 0 : i32
    %c0_i32_1 = arith.constant 0 : i32
    return %c0_i32, %c0_i32_0 : i32, i32
  }
  func.func @transform_7(%arg0: i32) -> (i32, i32, i32) {
    %c0_i32 = arith.constant 0 : i32
    %c0_i32_0 = arith.constant 0 : i32
    %c0_i32_1 = arith.constant 0 : i32
    %c0_i32_2 = arith.constant 0 : i32
    return %c0_i32, %c0_i32_0, %c0_i32_1 : i32, i32, i32
  }
  func.func @transform_8(%arg0: i32) -> (i32, i32) {
    %c0_i32 = arith.constant 0 : i32
    %c0_i32_0 = arith.constant 0 : i32
    %c0_i32_1 = arith.constant 0 : i32
    return %c0_i32, %c0_i32_0 : i32, i32
  }
  func.func @transform_9(%arg0: i32) -> (i32, i32, i32) {
    %c0_i32 = arith.constant 0 : i32
    %c0_i32_0 = arith.constant 0 : i32
    %c0_i32_1 = arith.constant 0 : i32
    return %arg0, %c0_i32, %c0_i32_0 : i32, i32, i32
  }
}

</mosaic_0001>

<llo_original>
// kernel: rl_encoder_forward.1
$region0: #{rl_encoder_forward.1}
  #allocation0 [shape = 'u32[]', space=smem, size = 0x4, offset = 0x4, fixed_abs, tag = 'smem constant byte address 0x4 - core index']
  #allocation1 [shape = 'u32[144,128]{1,0:T(1,128)}', space=vmem, size = 0x12000, scoped, tag = 'internal scratch']
  %s0 = inlined_call_operand.vmem [shape: f32[2,4,3,100], index: 0, kind: input, shape index: {}]
  %s1 = inlined_call_operand.vmem [shape: f32[9,32,3], index: 1, kind: input, shape index: {}]
  %s2 = inlined_call_operand.vmem [shape: f32[32,1], index: 2, kind: input, shape index: {}]
  %s3 = inlined_call_operand.vmem [shape: f32[9,32,32], index: 3, kind: input, shape index: {}]
  %s4 = inlined_call_operand.vmem [shape: f32[32,1], index: 4, kind: input, shape index: {}]
  %s5 = inlined_call_operand.vmem [shape: f32[9,32,32], index: 5, kind: input, shape index: {}]
  %s6 = inlined_call_operand.vmem [shape: f32[32,1], index: 6, kind: input, shape index: {}]
  %s7 = inlined_call_operand.vmem [shape: f32[9,32,32], index: 7, kind: input, shape index: {}]
  %s8 = inlined_call_operand.vmem [shape: f32[32,1], index: 8, kind: input, shape index: {}]
  %s9 = inlined_call_operand.vmem [shape: f32[2,32,100], index: 9, kind: output, shape index: {}]
  %s10 = sld [smem:[#allocation0]]
  $region69: #{rl_encoder_forward.1} parent=0
    _
  %s12 = ssub.s32 1, %s10
  %s13 = scalar_select 0, %s12, %s10
  loop: start=0, step=1, limit=4
  $region2: #{rl_encoder_forward.1} parent=0 // loop_pre_header
    _
  $region3: #{rl_encoder_forward.1} parent=0 // loop_header
    %s15 = sphi 0, %s19
    %p16 = scmp.ge.s32.totalorder %s15, 4
    %s25 = sphi 0, %s27
    %s28 = sphi 0, %s25
    %s29 = sphi 0, %s28
    %s45 = sphi 0, %s29
    %s49 = sphi 0, %s49
    %s51 = sphi 0, %s49
    %s52 = sphi 0, %s51
    %s66 = sphi 0, %s52
    %s70 = sphi 0, %s70
    %s72 = sphi 0, %s70
    %s73 = sphi 0, %s72
    %s87 = sphi 0, %s73
    %s91 = sphi 0, %s91
    %s93 = sphi 0, %s91
    %s94 = sphi 0, %s93
    %s108 = sphi 0, %s94
    %s112 = sphi 0, %s112
    %s114 = sphi 0, %s112
    %s115 = sphi 0, %s114
    %s129 = sphi 0, %s115
    %s133 = sphi 0, %s133
    %s135 = sphi 0, %s133
    %s136 = sphi 0, %s135
    %s150 = sphi 0, %s136
    %s154 = sphi 0, %s154
    %s156 = sphi 0, %s154
    %s157 = sphi 0, %s156
    %s171 = sphi 0, %s157
    %s175 = sphi 0, %s175
    %s177 = sphi 0, %s175
    %s178 = sphi 0, %s177
    %s192 = sphi 0, %s178
    %s196 = sphi 0, %s196
    %s198 = sphi 0, %s196
    %s199 = sphi 0, %s198
    %s213 = sphi 0, %s199
    %s219 = sphi 0, %s221
    %s222 = sphi 0, %s219
    %s223 = sphi 0, %s222
    %s239 = sphi 0, %s223
  $region4: #{rl_encoder_forward.1} parent=0 // loop_header_branch
    %18 = sbr.rel (%p16) target = $region8
  $region5: #{rl_encoder_forward.1} parent=0 // loop_body
    %s20 = ssub.s32 %s15, 1
    %s21 = ssub.s32 %s15, 2
    %s22 = sadd.s32 %s15, 1
    %s23 = ssub.s32 %s15, %s22
    %p24 = scmp.eq.s32.totalorder %s23, 0
    %s26 = sadd.s32 %s25, 1
    %s27 = scalar_select %p24, %s25, %s26
    %p30 = pneg %p24
    %p31 = scmp.eq.s32.totalorder %s15, 1
    %p32 = por %p30, %p31
    %p33 = scmp.ne.s32.totalorder %s25, %s28
    %p34 = scmp.eq.s32.totalorder %s15, 0
    %p35 = por %p33, %p34
    %p36 = scmp.ne.s32.totalorder %s25, %s28
    %p37 = scmp.eq.s32.totalorder %s20, 1
    %p38 = por %p36, %p37
    %p39 = scmp.ne.s32.totalorder %s28, %s29
    %p40 = scmp.eq.s32.totalorder %s20, 0
    %p41 = por %p39, %p40
    %p42 = scmp.ne.s32.totalorder %s28, %s29
    %p43 = scmp.eq.s32.totalorder %s21, 1
    %p44 = por %p42, %p43
    %p46 = scmp.ne.s32.totalorder %s29, %s45
    %p47 = scmp.eq.s32.totalorder %s21, 0
    %p48 = por %p46, %p47
    %s50 = sadd.s32 %s49, 1
    %p53 = scmp.eq.s32.totalorder %s15, 1
    %p54 = scmp.ne.s32.totalorder %s49, %s51
    %p55 = scmp.eq.s32.totalorder %s15, 0
    %p56 = por %p54, %p55
    %p57 = scmp.ne.s32.totalorder %s49, %s51
    %p58 = scmp.eq.s32.totalorder %s20, 1
    %p59 = por %p57, %p58
    %p60 = scmp.ne.s32.totalorder %s51, %s52
    %p61 = scmp.eq.s32.totalorder %s20, 0
    %p62 = por %p60, %p61
    %p63 = scmp.ne.s32.totalorder %s51, %s52
    %p64 = scmp.eq.s32.totalorder %s21, 1
    %p65 = por %p63, %p64
    %p67 = scmp.ne.s32.totalorder %s52, %s66
    %p68 = scmp.eq.s32.totalorder %s21, 0
    %p69 = por %p67, %p68
    %s71 = sadd.s32 %s70, 1
    %p74 = scmp.eq.s32.totalorder %s15, 1
    %p75 = scmp.ne.s32.totalorder %s70, %s72
    %p76 = scmp.eq.s32.totalorder %s15, 0
    %p77 = por %p75, %p76
    %p78 = scmp.ne.s32.totalorder %s70, %s72
    %p79 = scmp.eq.s32.totalorder %s20, 1
    %p80 = por %p78, %p79
    %p81 = scmp.ne.s32.totalorder %s72, %s73
    %p82 = scmp.eq.s32.totalorder %s20, 0
    %p83 = por %p81, %p82
    %p84 = scmp.ne.s32.totalorder %s72, %s73
    %p85 = scmp.eq.s32.totalorder %s21, 1
    %p86 = por %p84, %p85
    %p88 = scmp.ne.s32.totalorder %s73, %s87
    %p89 = scmp.eq.s32.totalorder %s21, 0
    %p90 = por %p88, %p89
    %s92 = sadd.s32 %s91, 1
    %p95 = scmp.eq.s32.totalorder %s15, 1
    %p96 = scmp.ne.s32.totalorder %s91, %s93
    %p97 = scmp.eq.s32.totalorder %s15, 0
    %p98 = por %p96, %p97
    %p99 = scmp.ne.s32.totalorder %s91, %s93
    %p100 = scmp.eq.s32.totalorder %s20, 1
    %p101 = por %p99, %p100
    %p102 = scmp.ne.s32.totalorder %s93, %s94
    %p103 = scmp.eq.s32.totalorder %s20, 0
    %p104 = por %p102, %p103
    %p105 = scmp.ne.s32.totalorder %s93, %s94
    %p106 = scmp.eq.s32.totalorder %s21, 1
    %p107 = por %p105, %p106
    %p109 = scmp.ne.s32.totalorder %s94, %s108
    %p110 = scmp.eq.s32.totalorder %s21, 0
    %p111 = por %p109, %p110
    %s113 = sadd.s32 %s112, 1
    %p116 = scmp.eq.s32.totalorder %s15, 1
    %p117 = scmp.ne.s32.totalorder %s112, %s114
    %p118 = scmp.eq.s32.totalorder %s15, 0
    %p119 = por %p117, %p118
    %p120 = scmp.ne.s32.totalorder %s112, %s114
    %p121 = scmp.eq.s32.totalorder %s20, 1
    %p122 = por %p120, %p121
    %p123 = scmp.ne.s32.totalorder %s114, %s115
    %p124 = scmp.eq.s32.totalorder %s20, 0
    %p125 = por %p123, %p124
    %p126 = scmp.ne.s32.totalorder %s114, %s115
    %p127 = scmp.eq.s32.totalorder %s21, 1
    %p128 = por %p126, %p127
    %p130 = scmp.ne.s32.totalorder %s115, %s129
    %p131 = scmp.eq.s32.totalorder %s21, 0
    %p132 = por %p130, %p131
    %s134 = sadd.s32 %s133, 1
    %p137 = scmp.eq.s32.totalorder %s15, 1
    %p138 = scmp.ne.s32.totalorder %s133, %s135
    %p139 = scmp.eq.s32.totalorder %s15, 0
    %p140 = por %p138, %p139
    %p141 = scmp.ne.s32.totalorder %s133, %s135
    %p142 = scmp.eq.s32.totalorder %s20, 1
    %p143 = por %p141, %p142
    %p144 = scmp.ne.s32.totalorder %s135, %s136
    %p145 = scmp.eq.s32.totalorder %s20, 0
    %p146 = por %p144, %p145
    %p147 = scmp.ne.s32.totalorder %s135, %s136
    %p148 = scmp.eq.s32.totalorder %s21, 1
    %p149 = por %p147, %p148
    %p151 = scmp.ne.s32.totalorder %s136, %s150
    %p152 = scmp.eq.s32.totalorder %s21, 0
    %p153 = por %p151, %p152
    %s155 = sadd.s32 %s154, 1
    %p158 = scmp.eq.s32.totalorder %s15, 1
    %p159 = scmp.ne.s32.totalorder %s154, %s156
    %p160 = scmp.eq.s32.totalorder %s15, 0
    %p161 = por %p159, %p160
    %p162 = scmp.ne.s32.totalorder %s154, %s156
    %p163 = scmp.eq.s32.totalorder %s20, 1
    %p164 = por %p162, %p163
    %p165 = scmp.ne.s32.totalorder %s156, %s157
    %p166 = scmp.eq.s32.totalorder %s20, 0
    %p167 = por %p165, %p166
    %p168 = scmp.ne.s32.totalorder %s156, %s157
    %p169 = scmp.eq.s32.totalorder %s21, 1
    %p170 = por %p168, %p169
    %p172 = scmp.ne.s32.totalorder %s157, %s171
    %p173 = scmp.eq.s32.totalorder %s21, 0
    %p174 = por %p172, %p173
    %s176 = sadd.s32 %s175, 1
    %p179 = scmp.eq.s32.totalorder %s15, 1
    %p180 = scmp.ne.s32.totalorder %s175, %s177
    %p181 = scmp.eq.s32.totalorder %s15, 0
    %p182 = por %p180, %p181
    %p183 = scmp.ne.s32.totalorder %s175, %s177
    %p184 = scmp.eq.s32.totalorder %s20, 1
    %p185 = por %p183, %p184
    %p186 = scmp.ne.s32.totalorder %s177, %s178
    %p187 = scmp.eq.s32.totalorder %s20, 0
    %p188 = por %p186, %p187
    %p189 = scmp.ne.s32.totalorder %s177, %s178
    %p190 = scmp.eq.s32.totalorder %s21, 1
    %p191 = por %p189, %p190
    %p193 = scmp.ne.s32.totalorder %s178, %s192
    %p194 = scmp.eq.s32.totalorder %s21, 0
    %p195 = por %p193, %p194
    %s197 = sadd.s32 %s196, 1
    %p200 = scmp.eq.s32.totalorder %s15, 1
    %p201 = scmp.ne.s32.totalorder %s196, %s198
    %p202 = scmp.eq.s32.totalorder %s15, 0
    %p203 = por %p201, %p202
    %p204 = scmp.ne.s32.totalorder %s196, %s198
    %p205 = scmp.eq.s32.totalorder %s20, 1
    %p206 = por %p204, %p205
    %p207 = scmp.ne.s32.totalorder %s198, %s199
    %p208 = scmp.eq.s32.totalorder %s20, 0
    %p209 = por %p207, %p208
    %p210 = scmp.ne.s32.totalorder %s198, %s199
    %p211 = scmp.eq.s32.totalorder %s21, 1
    %p212 = por %p210, %p211
    %p214 = scmp.ne.s32.totalorder %s199, %s213
    %p215 = scmp.eq.s32.totalorder %s21, 0
    %p216 = por %p214, %p215
    %s217 = ssub.s32 %s15, %s22
    %p218 = scmp.eq.s32.totalorder %s217, 0
    %s220 = sadd.s32 %s219, 1
    %s221 = scalar_select %p218, %s219, %s220
    %p224 = pneg %p218
    %p225 = scmp.eq.s32.totalorder %s15, 1
    %p226 = por %p224, %p225
    %p227 = scmp.ne.s32.totalorder %s219, %s222
    %p228 = scmp.eq.s32.totalorder %s15, 0
    %p229 = por %p227, %p228
    %p230 = scmp.ne.s32.totalorder %s219, %s222
    %p231 = scmp.eq.s32.totalorder %s20, 1
    %p232 = por %p230, %p231
    %p233 = scmp.ne.s32.totalorder %s222, %s223
    %p234 = scmp.eq.s32.totalorder %s20, 0
    %p235 = por %p233, %p234
    %p236 = scmp.ne.s32.totalorder %s222, %s223
    %p237 = scmp.eq.s32.totalorder %s21, 1
    %p238 = por %p236, %p237
    %p240 = scmp.ne.s32.totalorder %s223, %s239
    %p241 = scmp.eq.s32.totalorder %s21, 0
    %p242 = por %p240, %p241
    %p243 = scmp.le.s32.totalorder 1, %s15
    %p244 = scmp.lt.s32.totalorder %s15, 3
    %p245 = pnand %p243, %p244
    %p246 = pneg %p245
    // Predicated region
    $region9: #{rl_encoder_forward.1} parent=5 // pred_check
      _
    $region10: #{rl_encoder_forward.1} parent=5 // pred_check_branch
      %248 = sbr.rel (%p245) target = $region12
    $region11: #{rl_encoder_forward.1} parent=5 // pred_region
      %s249 = ssub.s32 %s15, 1
      // Predicated region
      $region13: #{rl_encoder_forward.1} parent=11 // pred_check
        %p250 = pneg %p62
      $region14: #{rl_encoder_forward.1} parent=11 // pred_check_branch
        %252 = sbr.rel (%p250) target = $region16
      $region15: #{rl_encoder_forward.1} parent=11 // pred_region
        _
      $region16: #{rl_encoder_forward.1} parent=11 // pred_fallthru
        _
      // Predicated region
      $region17: #{rl_encoder_forward.1} parent=11 // pred_check
        %p253 = pneg %p83
      $region18: #{rl_encoder_forward.1} parent=11 // pred_check_branch
        %255 = sbr.rel (%p253) target = $region20
      $region19: #{rl_encoder_forward.1} parent=11 // pred_region
        _
      $region20: #{rl_encoder_forward.1} parent=11 // pred_fallthru
        _
      // Predicated region
      $region21: #{rl_encoder_forward.1} parent=11 // pred_check
        %p256 = pneg %p104
      $region22: #{rl_encoder_forward.1} parent=11 // pred_check_branch
        %258 = sbr.rel (%p256) target = $region24
      $region23: #{rl_encoder_forward.1} parent=11 // pred_region
        _
      $region24: #{rl_encoder_forward.1} parent=11 // pred_fallthru
        _
      // Predicated region
      $region25: #{rl_encoder_forward.1} parent=11 // pred_check
        %p259 = pneg %p125
      $region26: #{rl_encoder_forward.1} parent=11 // pred_check_branch
        %261 = sbr.rel (%p259) target = $region28
      $region27: #{rl_encoder_forward.1} parent=11 // pred_region
        _
      $region28: #{rl_encoder_forward.1} parent=11 // pred_fallthru
        _
      // Predicated region
      $region29: #{rl_encoder_forward.1} parent=11 // pred_check
        %p262 = pneg %p146
      $region30: #{rl_encoder_forward.1} parent=11 // pred_check_branch
        %264 = sbr.rel (%p262) target = $region32
      $region31: #{rl_encoder_forward.1} parent=11 // pred_region
        _
      $region32: #{rl_encoder_forward.1} parent=11 // pred_fallthru
        _
      // Predicated region
      $region33: #{rl_encoder_forward.1} parent=11 // pred_check
        %p265 = pneg %p167
      $region34: #{rl_encoder_forward.1} parent=11 // pred_check_branch
        %267 = sbr.rel (%p265) target = $region36
      $region35: #{rl_encoder_forward.1} parent=11 // pred_region
        _
      $region36: #{rl_encoder_forward.1} parent=11 // pred_fallthru
        _
      // Predicated region
      $region37: #{rl_encoder_forward.1} parent=11 // pred_check
        %p268 = pneg %p188
      $region38: #{rl_encoder_forward.1} parent=11 // pred_check_branch
        %270 = sbr.rel (%p268) target = $region40
      $region39: #{rl_encoder_forward.1} parent=11 // pred_region
        _
      $region40: #{rl_encoder_forward.1} parent=11 // pred_fallthru
        _
      // Predicated region
      $region41: #{rl_encoder_forward.1} parent=11 // pred_check
        %p271 = pneg %p209
      $region42: #{rl_encoder_forward.1} parent=11 // pred_check_branch
        %273 = sbr.rel (%p271) target = $region44
      $region43: #{rl_encoder_forward.1} parent=11 // pred_region
        _
      $region44: #{rl_encoder_forward.1} parent=11 // pred_fallthru
        _
    $region12: #{rl_encoder_forward.1} parent=5 // pred_fallthru
      _
    %p274 = scmp.lt.s32.totalorder %s15, 2
    // Predicated region
    $region45: #{rl_encoder_forward.1} parent=5 // pred_check
      %p275 = pneg %p274
    $region46: #{rl_encoder_forward.1} parent=5 // pred_check_branch
      %277 = sbr.rel (%p275) target = $region48
    $region47: #{rl_encoder_forward.1} parent=5 // pred_region
      // Predicated region
      $region49: #{rl_encoder_forward.1} parent=47 // pred_check
        %p278 = pneg %p35
      $region50: #{rl_encoder_forward.1} parent=47 // pred_check_branch
        %280 = sbr.rel (%p278) target = $region52
      $region51: #{rl_encoder_forward.1} parent=47 // pred_region
        %p281 = scmp.lt.s32.totalorder %s15, 1
        %s282 = scalar_select %p281, %s15, 1
        %s283 = smul.addr %s282, 4
        %s284 = smul.addr %s283, 4
        %s285 = scalar_lea.vmem %s0, %s284
      $region52: #{rl_encoder_forward.1} parent=47 // pred_fallthru
        _
    $region48: #{rl_encoder_forward.1} parent=5 // pred_fallthru
      _
    %p286 = scmp.le.s32.totalorder 1, %s15
    %p287 = scmp.lt.s32.totalorder %s15, 3
    %p288 = pnand %p286, %p287
    %p289 = pneg %p288
    // Predicated region
    $region53: #{rl_encoder_forward.1} parent=5 // pred_check
      _
    $region54: #{rl_encoder_forward.1} parent=5 // pred_check_branch
      %291 = sbr.rel (%p288) target = $region56
    $region55: #{rl_encoder_forward.1} parent=5 // pred_region
      %s292 = ssub.s32 %s15, 1
      %p293 = scmp.lt.s32.totalorder %s20, 1
      %s294 = scalar_select %p293, %s20, 1
      %s295 = smul.addr %s294, 4
      %s296 = smul.addr %s295, 4
      %s297 = scalar_lea.vmem %s0, %s296
      %p298 = pneg %p41
      %p299 = pneg %p38
      %p300 = pneg %p62
      %p301 = pneg %p59
      %p302 = pneg %p83
      %p303 = pneg %p80
      %p304 = pneg %p104
      %p305 = pneg %p101
      %p306 = pneg %p125
      %p307 = pneg %p122
      %p308 = pneg %p146
      %p309 = pneg %p143
      %p310 = pneg %p167
      %p311 = pneg %p164
      %p312 = pneg %p188
      %p313 = pneg %p185
      %p314 = pneg %p209
      %p315 = pneg %p206
      %p316 = pneg %p235
      %p317 = pneg %p232
      %p318 = scmp.lt.s32.totalorder %s20, 1
      %s319 = scalar_select %p318, %s20, 1
      %s320 = smul.addr %s319, 4
      %s321 = smul.addr %s320, 8
      %s322 = scalar_lea.vmem %s9, %s321
      %p323 = scmp.lt.s32.totalorder %s20, 1
      %s324 = scalar_select %p323, %s20, 1
      %s325 = smul.addr %s324, 4
      %s326 = smul.addr %s325, 4
      %s327 = scalar_lea.vmem %s0, %s326
      %p328 = scmp.lt.s32.totalorder %s20, 1
      %s329 = scalar_select %p328, %s20, 1
      %s330 = smul.addr %s329, 4
      %s331 = smul.addr %s330, 8
      %s332 = scalar_lea.vmem %s9, %s331
      %v333 = vld [vmem:[%s327] sm:$0x7]
      %v334 = vld [vmem:[%s1] sm:$0xff]
      %v335 = vld [vmem:[%s1 + $0x8] sm:$0xff]
      %v336 = vld [vmem:[%s1 + $0x10] sm:$0xff]
      %v337 = vld [vmem:[%s1 + $0x18] sm:$0xff]
      %s338 = scalar_lea.vmem %s327, 4
      %v339 = vld [vmem:[%s338] sm:$0x7]
      %s340 = scalar_lea.vmem %s1, 32
      %v341 = vld [vmem:[%s340] sm:$0xff]
      %v342 = vld [vmem:[%s340 + $0x8] sm:$0xff]
      %v343 = vld [vmem:[%s340 + $0x10] sm:$0xff]
      %v344 = vld [vmem:[%s340 + $0x18] sm:$0xff]
      %vm345 = vcmask 23552
      %v347 = vsel %vm345, %v341, 0
      %v350 = vsel %vm345, %v342, 0
      %v353 = vsel %vm345, %v343, 0
      %v356 = vsel %vm345, %v344, 0
      %vm358 = vcmask 1042432
      %v360 = vsel %vm358, %v339, 0
      %362 = vmatprep.subr.mxu0 0.0
      %363 = vmatpush1.msra.mxu0 %v360
      %364 = vmatprep.subr.mxu0 0.0
      %365 = vmatpush1.msra.mxu0 0.0
      %366 = vmatprep.subr.mxu0 0.0
      %367 = vmatpush1.msra.mxu0 0.0
      %368 = vmatprep.subr.mxu0 0.0
      %369 = vmatpush1.msra.mxu0 0.0
      %370 = vmatprep.subr.mxu0 0.0
      %371 = vmatpush1.msra.mxu0 0.0
      %372 = vmatprep.subr.mxu0 0.0
      %373 = vmatpush1.msra.mxu0 0.0
      %374 = vmatprep.subr.mxu0 0.0
      %375 = vmatpush1.msra.mxu0 0.0
      %376 = vmatprep.subr.mxu0 0.0
      %377 = vmatpush1.msra.mxu0 0.0
      %378 = vmatprep.subr.mxu0 0.0
      %379 = vmatpush1.msra.mxu0 0.0
      %380 = vmatprep.subr.mxu0 0.0
      %381 = vmatpush1.msra.mxu0 0.0
      %382 = vmatprep.subr.mxu0 0.0
      %383 = vmatpush1.msra.mxu0 0.0
      %384 = vmatprep.subr.mxu0 0.0
      %385 = vmatpush1.msra.mxu0 0.0
      %386 = vmatprep.subr.mxu0 0.0
      %387 = vmatpush1.msra.mxu0 0.0
      %388 = vmatprep.subr.mxu0 0.0
      %389 = vmatpush1.msra.mxu0 0.0
      %390 = vmatprep.subr.mxu0 0.0
      %391 = vmatpush1.msra.mxu0 0.0
      %392 = vmatprep.subr.mxu0 0.0
      %393 = vmatpush1.msra.mxu0 0.0
      %394 = vmatprep.subr.mxu0 0.0
      %395 = vmatpush1.msra.mxu0 0.0
      %396 = vmatprep.subr.mxu0 0.0
      %397 = vmatpush1.msra.mxu0 0.0
      %398 = vmatprep.subr.mxu0 0.0
      %399 = vmatpush1.msra.mxu0 0.0
      %400 = vmatprep.subr.mxu0 0.0
      %401 = vmatpush1.msra.mxu0 0.0
      %402 = vmatprep.subr.mxu0 0.0
      %403 = vmatpush1.msra.mxu0 0.0
      %404 = vmatprep.subr.mxu0 0.0
      %405 = vmatpush1.msra.mxu0 0.0
      %406 = vmatprep.subr.mxu0 0.0
      %407 = vmatpush1.msra.mxu0 0.0
      %408 = vmatprep.subr.mxu0 0.0
      %409 = vmatpush1.msra.mxu0 0.0
      %410 = vmatprep.subr.mxu0 0.0
      %411 = vmatpush1.msra.mxu0 0.0
      %412 = vmatprep.subr.mxu0 0.0
      %413 = vmatpush1.msra.mxu0 0.0
      %414 = vmatprep.subr.mxu0 0.0
      %415 = vmatpush1.msra.mxu0 0.0
      %416 = vmatprep.subr.mxu0 0.0
      %417 = vmatpush1.msra.mxu0 0.0
      %418 = vmatprep.subr.mxu0 0.0
      %419 = vmatpush1.msra.mxu0 0.0
      %420 = vmatprep.subr.mxu0 0.0
      %421 = vmatpush1.msra.mxu0 0.0
      %422 = vmatprep.subr.mxu0 0.0
      %423 = vmatpush1.msra.mxu0 0.0
      %424 = vmatprep.subr.mxu0 0.0
      %425 = vmatpush1.msra.mxu0 0.0
      %426 = vmatprep.mubr.f32.mxu0 0.0
      %427 = vmatmul.mubr.f32.gmra.mrb[0].mxu0 %v347
      %v428 = vpop.f32.mrb[0].mxu0
      %v429 = vadd.f32 0.0, %v428
      %v430 = vpop.f32.mrb[0].mxu0
      %431 = vmatprep.mubr.f32.mxu0 0.0
      %432 = vmatmul.mubr.f32.gmra.mrb[0].mxu0 %v350
      %v433 = vpop.f32.mrb[0].mxu0
      %v434 = vadd.f32 0.0, %v433
      %v435 = vpop.f32.mrb[0].mxu0
      %436 = vmatprep.mubr.f32.mxu0 0.0
      %437 = vmatmul.mubr.f32.gmra.mrb[0].mxu0 %v353
      %v438 = vpop.f32.mrb[0].mxu0
      %v439 = vadd.f32 0.0, %v438
      %v440 = vpop.f32.mrb[0].mxu0
      %441 = vmatprep.mubr.f32.mxu0 0.0
      %442 = vmatmul.mubr.f32.gmra.mrb[0].mxu0 %v356
      %v443 = vpop.f32.mrb[0].mxu0
      %v444 = vadd.f32 0.0, %v443
      %v445 = vpop.f32.mrb[0].mxu0
      %446 = vdwg.mxu0
      %v448 = vsel %vm345, %v334, 0
      %v451 = vsel %vm345, %v335, 0
      %v454 = vsel %vm345, %v336, 0
      %v457 = vsel %vm345, %v337, 0
      %v460 = vsel %vm358, %v333, 0
      %462 = vmatprep.subr.mxu0 0.0
      %463 = vmatpush1.msra.mxu0 %v460
      %464 = vmatprep.subr.mxu0 0.0
      %465 = vmatpush1.msra.mxu0 0.0
      %466 = vmatprep.subr.mxu0 0.0
      %467 = vmatpush1.msra.mxu0 0.0
      %468 = vmatprep.subr.mxu0 0.0
      %469 = vmatpush1.msra.mxu0 0.0
      %470 = vmatprep.subr.mxu0 0.0
      %471 = vmatpush1.msra.mxu0 0.0
      %472 = vmatprep.subr.mxu0 0.0
      %473 = vmatpush1.msra.mxu0 0.0
      %474 = vmatprep.subr.mxu0 0.0
      %475 = vmatpush1.msra.mxu0 0.0
      %476 = vmatprep.subr.mxu0 0.0
      %477 = vmatpush1.msra.mxu0 0.0
      %478 = vmatprep.subr.mxu0 0.0
      %479 = vmatpush1.msra.mxu0 0.0
      %480 = vmatprep.subr.mxu0 0.0
      %481 = vmatpush1.msra.mxu0 0.0
      %482 = vmatprep.subr.mxu0 0.0
      %483 = vmatpush1.msra.mxu0 0.0
      %484 = vmatprep.subr.mxu0 0.0
      %485 = vmatpush1.msra.mxu0 0.0
      %486 = vmatprep.subr.mxu0 0.0
      %487 = vmatpush1.msra.mxu0 0.0
      %488 = vmatprep.subr.mxu0 0.0
      %489 = vmatpush1.msra.mxu0 0.0
      %490 = vmatprep.subr.mxu0 0.0
      %491 = vmatpush1.msra.mxu0 0.0
      %492 = vmatprep.subr.mxu0 0.0
      %493 = vmatpush1.msra.mxu0 0.0
      %494 = vmatprep.subr.mxu0 0.0
      %495 = vmatpush1.msra.mxu0 0.0
      %496 = vmatprep.subr.mxu0 0.0
      %497 = vmatpush1.msra.mxu0 0.0
      %498 = vmatprep.subr.mxu0 0.0
      %499 = vmatpush1.msra.mxu0 0.0
      %500 = vmatprep.subr.mxu0 0.0
      %501 = vmatpush1.msra.mxu0 0.0
      %502 = vmatprep.subr.mxu0 0.0
      %503 = vmatpush1.msra.mxu0 0.0
      %504 = vmatprep.subr.mxu0 0.0
      %505 = vmatpush1.msra.mxu0 0.0
      %506 = vmatprep.subr.mxu0 0.0
      %507 = vmatpush1.msra.mxu0 0.0
      %508 = vmatprep.subr.mxu0 0.0
      %509 = vmatpush1.msra.mxu0 0.0
      %510 = vmatprep.subr.mxu0 0.0
      %511 = vmatpush1.msra.mxu0 0.0
      %512 = vmatprep.subr.mxu0 0.0
      %513 = vmatpush1.msra.mxu0 0.0
      %514 = vmatprep.subr.mxu0 0.0
      %515 = vmatpush1.msra.mxu0 0.0
      %516 = vmatprep.subr.mxu0 0.0
      %517 = vmatpush1.msra.mxu0 0.0
      %518 = vmatprep.subr.mxu0 0.0
      %519 = vmatpush1.msra.mxu0 0.0
      %520 = vmatprep.subr.mxu0 0.0
      %521 = vmatpush1.msra.mxu0 0.0
      %522 = vmatprep.subr.mxu0 0.0
      %523 = vmatpush1.msra.mxu0 0.0
      %524 = vmatprep.subr.mxu0 0.0
      %525 = vmatpush1.msra.mxu0 0.0
      %526 = vmatprep.mubr.f32.mxu0 0.0
      %527 = vmatmul.mubr.f32.gmra.mrb[0].mxu0 %v448
      %v528 = vpop.f32.mrb[0].mxu0
      %v529 = vadd.f32 %v429, %v528
      %v530 = vpop.f32.mrb[0].mxu0
      %531 = vmatprep.mubr.f32.mxu0 0.0
      %532 = vmatmul.mubr.f32.gmra.mrb[0].mxu0 %v451
      %v533 = vpop.f32.mrb[0].mxu0
      %v534 = vadd.f32 %v434, %v533
      %v535 = vpop.f32.mrb[0].mxu0
      %536 = vmatprep.mubr.f32.mxu0 0.0
      %537 = vmatmul.mubr.f32.gmra.mrb[0].mxu0 %v454
      %v538 = vpop.f32.mrb[0].mxu0
      %v539 = vadd.f32 %v439, %v538
      %v540 = vpop.f32.mrb[0].mxu0
      %541 = vmatprep.mubr.f32.mxu0 0.0
      %542 = vmatmul.mubr.f32.gmra.mrb[0].mxu0 %v457
      %v543 = vpop.f32.mrb[0].mxu0
      %v544 = vadd.f32 %v444, %v543
      %v545 = vpop.f32.mrb[0].mxu0
      %546 = vdwg.mxu0
      %547 = vrot.lane.b32.xlu0 %v333, 127
      %v548 = vpop.permute.xlu0 %547
      %550 = vrot.lane.b32.xlu0 %v333, 99
      %v551 = vpop.permute.xlu0 %550
      %vm553 = vcmask 809984
      %v554 = vsel %vm553, %v548, %v551
      %s555 = scalar_lea.vmem %s1, 64
      %v556 = vld [vmem:[%s555] sm:$0xff]
      %v557 = vld [vmem:[%s555 + $0x8] sm:$0xff]
      %v558 = vld [vmem:[%s555 + $0x10] sm:$0xff]
      %v559 = vld [vmem:[%s555 + $0x18] sm:$0xff]
      %v561 = vsel %vm345, %v556, 0
      %v564 = vsel %vm345, %v557, 0
      %v567 = vsel %vm345, %v558, 0
      %v570 = vsel %vm345, %v559, 0
      %v573 = vsel %vm358, %v554, 0
      %575 = vmatprep.subr.mxu0 0.0
      %576 = vmatpush1.msra.mxu0 %v573
      %577 = vmatprep.subr.mxu0 0.0
      %578 = vmatpush1.msra.mxu0 0.0
      %579 = vmatprep.subr.mxu0 0.0
      %580 = vmatpush1.msra.mxu0 0.0
      %581 = vmatprep.subr.mxu0 0.0
      %582 = vmatpush1.msra.mxu0 0.0
      %583 = vmatprep.subr.mxu0 0.0
      %584 = vmatpush1.msra.mxu0 0.0
      %585 = vmatprep.subr.mxu0 0.0
      %586 = vmatpush1.msra.mxu0 0.0
      %587 = vmatprep.subr.mxu0 0.0
      %588 = vmatpush1.msra.mxu0 0.0
      %589 = vmatprep.subr.mxu0 0.0
      %590 = vmatpush1.msra.mxu0 0.0
      %591 = vmatprep.subr.mxu0 0.0
      %592 = vmatpush1.msra.mxu0 0.0
      %593 = vmatprep.subr.mxu0 0.0
      %594 = vmatpush1.msra.mxu0 0.0
      %595 = vmatprep.subr.mxu0 0.0
      %596 = vmatpush1.msra.mxu0 0.0
      %597 = vmatprep.subr.mxu0 0.0
      %598 = vmatpush1.msra.mxu0 0.0
      %599 = vmatprep.subr.mxu0 0.0
      %600 = vmatpush1.msra.mxu0 0.0
      %601 = vmatprep.subr.mxu0 0.0
      %602 = vmatpush1.msra.mxu0 0.0
      %603 = vmatprep.subr.mxu0 0.0
      %604 = vmatpush1.msra.mxu0 0.0
      %605 = vmatprep.subr.mxu0 0.0
      %606 = vmatpush1.msra.mxu0 0.0
      %607 = vmatprep.subr.mxu0 0.0
      %608 = vmatpush1.msra.mxu0 0.0
      %609 = vmatprep.subr.mxu0 0.0
      %610 = vmatpush1.msra.mxu0 0.0
      %611 = vmatprep.subr.mxu0 0.0
      %612 = vmatpush1.msra.mxu0 0.0
      %613 = vmatprep.subr.mxu0 0.0
      %614 = vmatpush1.msra.mxu0 0.0
      %615 = vmatprep.subr.mxu0 0.0
      %616 = vmatpush1.msra.mxu0 0.0
      %617 = vmatprep.subr.mxu0 0.0
      %618 = vmatpush1.msra.mxu0 0.0
      %619 = vmatprep.subr.mxu0 0.0
      %620 = vmatpush1.msra.mxu0 0.0
      %621 = vmatprep.subr.mxu0 0.0
      %622 = vmatpush1.msra.mxu0 0.0
      %623 = vmatprep.subr.mxu0 0.0
      %624 = vmatpush1.msra.mxu0 0.0
      %625 = vmatprep.subr.mxu0 0.0
      %626 = vmatpush1.msra.mxu0 0.0
      %627 = vmatprep.subr.mxu0 0.0
      %628 = vmatpush1.msra.mxu0 0.0
      %629 = vmatprep.subr.mxu0 0.0
      %630 = vmatpush1.msra.mxu0 0.0
      %631 = vmatprep.subr.mxu0 0.0
      %632 = vmatpush1.msra.mxu0 0.0
      %633 = vmatprep.subr.mxu0 0.0
      %634 = vmatpush1.msra.mxu0 0.0
      %635 = vmatprep.subr.mxu0 0.0
      %636 = vmatpush1.msra.mxu0 0.0
      %637 = vmatprep.subr.mxu0 0.0
      %638 = vmatpush1.msra.mxu0 0.0
      %639 = vmatprep.mubr.f32.mxu0 0.0
      %640 = vmatmul.mubr.f32.gmra.mrb[0].mxu0 %v561
      %v641 = vpop.f32.mrb[0].mxu0
      %v642 = vadd.f32 0.0, %v641
      %v643 = vpop.f32.mrb[0].mxu0
      %644 = vmatprep.mubr.f32.mxu0 0.0
      %645 = vmatmul.mubr.f32.gmra.mrb[0].mxu0 %v564
      %v646 = vpop.f32.mrb[0].mxu0
      %v647 = vadd.f32 0.0, %v646
      %v648 = vpop.f32.mrb[0].mxu0
      %649 = vmatprep.mubr.f32.mxu0 0.0
      %650 = vmatmul.mubr.f32.gmra.mrb[0].mxu0 %v567
      %v651 = vpop.f32.mrb[0].mxu0
      %v652 = vadd.f32 0.0, %v651
      %v653 = vpop.f32.mrb[0].mxu0
      %654 = vmatprep.mubr.f32.mxu0 0.0
      %655 = vmatmul.mubr.f32.gmra.mrb[0].mxu0 %v570
      %v656 = vpop.f32.mrb[0].mxu0
      %v657 = vadd.f32 0.0, %v656
      %v658 = vpop.f32.mrb[0].mxu0
      %659 = vdwg.mxu0
      %v660 = vadd.f32 %v529, %v642
      %v661 = vadd.f32 %v534, %v647
      %v662 = vadd.f32 %v539, %v652
      %v663 = vadd.f32 %v544, %v657
      %s664 = scalar_lea.vmem %s327, 8
      %v665 = vld [vmem:[%s664] sm:$0x7]
      %s666 = scalar_lea.vmem %s1, 96
      %v667 = vld [vmem:[%s666] sm:$0xff]
      %v668 = vld [vmem:[%s666 + $0x8] sm:$0xff]
      %v669 = vld [vmem:[%s666 + $0x10] sm:$0xff]
      %v670 = vld [vmem:[%s666 + $0x18] sm:$0xff]
      %v672 = vsel %vm345, %v667, 0
      %v675 = vsel %vm345, %v668, 0
      %v678 = vsel %vm345, %v669, 0
      %v681 = vsel %vm345, %v670, 0
      %v684 = vsel %vm358, %v665, 0
      %686 = vmatprep.subr.mxu0 0.0
      %687 = vmatpush1.msra.mxu0 %v684
      %688 = vmatprep.subr.mxu0 0.0
      %689 = vmatpush1.msra.mxu0 0.0
      %690 = vmatprep.subr.mxu0 0.0
      %691 = vmatpush1.msra.mxu0 0.0
      %692 = vmatprep.subr.mxu0 0.0
      %693 = vmatpush1.msra.mxu0 0.0
      %694 = vmatprep.subr.mxu0 0.0
      %695 = vmatpush1.msra.mxu0 0.0
      %696 = vmatprep.subr.mxu0 0.0
      %697 = vmatpush1.msra.mxu0 0.0
      %698 = vmatprep.subr.mxu0 0.0
      %699 = vmatpush1.msra.mxu0 0.0
      %700 = vmatprep.subr.mxu0 0.0
      %701 = vmatpush1.msra.mxu0 0.0
      %702 = vmatprep.subr.mxu0 0.0
      %703 = vmatpush1.msra.mxu0 0.0
      %704 = vmatprep.subr.mxu0 0.0
      %705 = vmatpush1.msra.mxu0 0.0
      %706 = vmatprep.subr.mxu0 0.0
      %707 = vmatpush1.msra.mxu0 0.0
      %708 = vmatprep.subr.mxu0 0.0
      %709 = vmatpush1.msra.mxu0 0.0
      %710 = vmatprep.subr.mxu0 0.0
      %711 = vmatpush1.msra.mxu0 0.0
      %712 = vmatprep.subr.mxu0 0.0
      %713 = vmatpush1.msra.mxu0 0.0
      %714 = vmatprep.subr.mxu0 0.0
      %715 = vmatpush1.msra.mxu0 0.0
      %716 = vmatprep.subr.mxu0 0.0
      %717 = vmatpush1.msra.mxu0 0.0
      %718 = vmatprep.subr.mxu0 0.0
      %719 = vmatpush1.msra.mxu0 0.0
      %720 = vmatprep.subr.mxu0 0.0
      %721 = vmatpush1.msra.mxu0 0.0
      %722 = vmatprep.subr.mxu0 0.0
      %723 = vmatpush1.msra.mxu0 0.0
      %724 = vmatprep.subr.mxu0 0.0
      %725 = vmatpush1.msra.mxu0 0.0
      %726 = vmatprep.subr.mxu0 0.0
      %727 = vmatpush1.msra.mxu0 0.0
      %728 = vmatprep.subr.mxu0 0.0
      %729 = vmatpush1.msra.mxu0 0.0
      %730 = vmatprep.subr.mxu0 0.0
      %731 = vmatpush1.msra.mxu0 0.0
      %732 = vmatprep.subr.mxu0 0.0
      %733 = vmatpush1.msra.mxu0 0.0
      %734 = vmatprep.subr.mxu0 0.0
      %735 = vmatpush1.msra.mxu0 0.0
      %736 = vmatprep.subr.mxu0 0.0
      %737 = vmatpush1.msra.mxu0 0.0
      %738 = vmatprep.subr.mxu0 0.0
      %739 = vmatpush1.msra.mxu0 0.0
      %740 = vmatprep.subr.mxu0 0.0
      %741 = vmatpush1.msra.mxu0 0.0
      %742 = vmatprep.subr.mxu0 0.0
      %743 = vmatpush1.msra.mxu0 0.0
      %744 = vmatprep.subr.mxu0 0.0
      %745 = vmatpush1.msra.mxu0 0.0
      %746 = vmatprep.subr.mxu0 0.0
      %747 = vmatpush1.msra.mxu0 0.0
      %748 = vmatprep.subr.mxu0 0.0
      %749 = vmatpush1.msra.mxu0 0.0
      %750 = vmatprep.mubr.f32.mxu0 0.0
      %751 = vmatmul.mubr.f32.gmra.mrb[0].mxu0 %v672
      %v752 = vpop.f32.mrb[0].mxu0
      %v753 = vadd.f32 0.0, %v752
      %v754 = vpop.f32.mrb[0].mxu0
      %755 = vmatprep.mubr.f32.mxu0 0.0
      %756 = vmatmul.mubr.f32.gmra.mrb[0].mxu0 %v675
      %v757 = vpop.f32.mrb[0].mxu0
      %v758 = vadd.f32 0.0, %v757
      %v759 = vpop.f32.mrb[0].mxu0
      %760 = vmatprep.mubr.f32.mxu0 0.0
      %761 = vmatmul.mubr.f32.gmra.mrb[0].mxu0 %v678
      %v762 = vpop.f32.mrb[0].mxu0
      %v763 = vadd.f32 0.0, %v762
      %v764 = vpop.f32.mrb[0].mxu0
      %765 = vmatprep.mubr.f32.mxu0 0.0
      %766 = vmatmul.mubr.f32.gmra.mrb[0].mxu0 %v681
      %v767 = vpop.f32.mrb[0].mxu0
      %v768 = vadd.f32 0.0, %v767
      %v769 = vpop.f32.mrb[0].mxu0
      %770 = vdwg.mxu0
      %v771 = vadd.f32 %v660, %v753
      %v772 = vadd.f32 %v661, %v758
      %v773 = vadd.f32 %v662, %v763
      %v774 = vadd.f32 %v663, %v768
      %s775 = scalar_lea.vmem %s327, 12
      %v776 = vld [vmem:[%s775] sm:$0x7]
      %s777 = scalar_lea.vmem %s1, 128
      %v778 = vld [vmem:[%s777] sm:$0xff]
      %v779 = vld [vmem:[%s777 + $0x8] sm:$0xff]
      %v780 = vld [vmem:[%s777 + $0x10] sm:$0xff]
      %v781 = vld [vmem:[%s777 + $0x18] sm:$0xff]
      %v783 = vsel %vm345, %v778, 0
      %v786 = vsel %vm345, %v779, 0
      %v789 = vsel %vm345, %v780, 0
      %v792 = vsel %vm345, %v781, 0
      %v795 = vsel %vm358, %v776, 0
      %797 = vmatprep.subr.mxu0 0.0
      %798 = vmatpush1.msra.mxu0 %v795
      %799 = vmatprep.subr.mxu0 0.0
      %800 = vmatpush1.msra.mxu0 0.0
      %801 = vmatprep.subr.mxu0 0.0
      %802 = vmatpush1.msra.mxu0 0.0
      %803 = vmatprep.subr.mxu0 0.0
      %804 = vmatpush1.msra.mxu0 0.0
      %805 = vmatprep.subr.mxu0 0.0
      %806 = vmatpush1.msra.mxu0 0.0
      %807 = vmatprep.subr.mxu0 0.0
      %808 = vmatpush1.msra.mxu0 0.0
      %809 = vmatprep.subr.mxu0 0.0
      %810 = vmatpush1.msra.mxu0 0.0
      %811 = vmatprep.subr.mxu0 0.0
      %812 = vmatpush1.msra.mxu0 0.0
      %813 = vmatprep.subr.mxu0 0.0
      %814 = vmatpush1.msra.mxu0 0.0
      %815 = vmatprep.subr.mxu0 0.0
      %816 = vmatpush1.msra.mxu0 0.0
      %817 = vmatprep.subr.mxu0 0.0
      %818 = vmatpush1.msra.mxu0 0.0
      %819 = vmatprep.subr.mxu0 0.0
      %820 = vmatpush1.msra.mxu0 0.0
      %821 = vmatprep.subr.mxu0 0.0
      %822 = vmatpush1.msra.mxu0 0.0
      %823 = vmatprep.subr.mxu0 0.0
      %824 = vmatpush1.msra.mxu0 0.0
      %825 = vmatprep.subr.mxu0 0.0
      %826 = vmatpush1.msra.mxu0 0.0
      %827 = vmatprep.subr.mxu0 0.0
      %828 = vmatpush1.msra.mxu0 0.0
      %829 = vmatprep.subr.mxu0 0.0
      %830 = vmatpush1.msra.mxu0 0.0
      %831 = vmatprep.subr.mxu0 0.0
      %832 = vmatpush1.msra.mxu0 0.0
      %833 = vmatprep.subr.mxu0 0.0
      %834 = vmatpush1.msra.mxu0 0.0
      %835 = vmatprep.subr.mxu0 0.0
      %836 = vmatpush1.msra.mxu0 0.0
      %837 = vmatprep.subr.mxu0 0.0
      %838 = vmatpush1.msra.mxu0 0.0
      %839 = vmatprep.subr.mxu0 0.0
      %840 = vmatpush1.msra.mxu0 0.0
      %841 = vmatprep.subr.mxu0 0.0
      %842 = vmatpush1.msra.mxu0 0.0
      %843 = vmatprep.subr.mxu0 0.0
      %844 = vmatpush1.msra.mxu0 0.0
      %845 = vmatprep.subr.mxu0 0.0
      %846 = vmatpush1.msra.mxu0 0.0
      %847 = vmatprep.subr.mxu0 0.0
      %848 = vmatpush1.msra.mxu0 0.0
      %849 = vmatprep.subr.mxu0 0.0
      %850 = vmatpush1.msra.mxu0 0.0
      %851 = vmatprep.subr.mxu0 0.0
      %852 = vmatpush1.msra.mxu0 0.0
      %853 = vmatprep.subr.mxu0 0.0
      %854 = vmatpush1.msra.mxu0 0.0
      %855 = vmatprep.subr.mxu0 0.0
      %856 = vmatpush1.msra.mxu0 0.0
      %857 = vmatprep.subr.mxu0 0.0
      %858 = vmatpush1.msra.mxu0 0.0
      %859 = vmatprep.subr.mxu0 0.0
      %860 = vmatpush1.msra.mxu0 0.0
      %861 = vmatprep.mubr.f32.mxu0 0.0
      %862 = vmatmul.mubr.f32.gmra.mrb[0].mxu0 %v783
      %v863 = vpop.f32.mrb[0].mxu0
      %v864 = vadd.f32 0.0, %v863
      %v865 = vpop.f32.mrb[0].mxu0
      %866 = vmatprep.mubr.f32.mxu0 0.0
      %867 = vmatmul.mubr.f32.gmra.mrb[0].mxu0 %v786
      %v868 = vpop.f32.mrb[0].mxu0
      %v869 = vadd.f32 0.0, %v868
      %v870 = vpop.f32.mrb[0].mxu0
      %871 = vmatprep.mubr.f32.mxu0 0.0
      %872 = vmatmul.mubr.f32.gmra.mrb[0].mxu0 %v789
      %v873 = vpop.f32.mrb[0].mxu0
      %v874 = vadd.f32 0.0, %v873
      %v875 = vpop.f32.mrb[0].mxu0
      %876 = vmatprep.mubr.f32.mxu0 0.0
      %877 = vmatmul.mubr.f32.gmra.mrb[0].mxu0 %v792
      %v878 = vpop.f32.mrb[0].mxu0
      %v879 = vadd.f32 0.0, %v878
      %v880 = vpop.f32.mrb[0].mxu0
      %881 = vdwg.mxu0
      %v882 = vadd.f32 %v771, %v864
      %v883 = vadd.f32 %v772, %v869
      %v884 = vadd.f32 %v773, %v874
      %v885 = vadd.f32 %v774, %v879
      %886 = vrot.lane.b32.xlu0 %v665, 127
      %v887 = vpop.permute.xlu0 %886
      %889 = vrot.lane.b32.xlu0 %v665, 99
      %v890 = vpop.permute.xlu0 %889
      %v892 = vsel %vm553, %v887, %v890
      %s893 = scalar_lea.vmem %s1, 160
      %v894 = vld [vmem:[%s893] sm:$0xff]
      %v895 = vld [vmem:[%s893 + $0x8] sm:$0xff]
      %v896 = vld [vmem:[%s893 + $0x10] sm:$0xff]
      %v897 = vld [vmem:[%s893 + $0x18] sm:$0xff]
      %v899 = vsel %vm345, %v894, 0
      %v902 = vsel %vm345, %v895, 0
      %v905 = vsel %vm345, %v896, 0
      %v908 = vsel %vm345, %v897, 0
      %v911 = vsel %vm358, %v892, 0
      %913 = vmatprep.subr.mxu0 0.0
      %914 = vmatpush1.msra.mxu0 %v911
      %915 = vmatprep.subr.mxu0 0.0
      %916 = vmatpush1.msra.mxu0 0.0
      %917 = vmatprep.subr.mxu0 0.0
      %918 = vmatpush1.msra.mxu0 0.0
      %919 = vmatprep.subr.mxu0 0.0
      %920 = vmatpush1.msra.mxu0 0.0
      %921 = vmatprep.subr.mxu0 0.0
      %922 = vmatpush1.msra.mxu0 0.0
      %923 = vmatprep.subr.mxu0 0.0
      %924 = vmatpush1.msra.mxu0 0.0
      %925 = vmatprep.subr.mxu0 0.0
      %926 = vmatpush1.msra.mxu0 0.0
      %927 = vmatprep.subr.mxu0 0.0
      %928 = vmatpush1.msra.mxu0 0.0
      %929 = vmatprep.subr.mxu0 0.0
      %930 = vmatpush1.msra.mxu0 0.0
      %931 = vmatprep.subr.mxu0 0.0
      %932 = vmatpush1.msra.mxu0 0.0
      %933 = vmatprep.subr.mxu0 0.0
      %934 = vmatpush1.msra.mxu0 0.0
      %935 = vmatprep.subr.mxu0 0.0
      %936 = vmatpush1.msra.mxu0 0.0
      %937 = vmatprep.subr.mxu0 0.0
      %938 = vmatpush1.msra.mxu0 0.0
      %939 = vmatprep.subr.mxu0 0.0
      %940 = vmatpush1.msra.mxu0 0.0
      %941 = vmatprep.subr.mxu0 0.0
      %942 = vmatpush1.msra.mxu0 0.0
      %943 = vmatprep.subr.mxu0 0.0
      %944 = vmatpush1.msra.mxu0 0.0
      %945 = vmatprep.subr.mxu0 0.0
      %946 = vmatpush1.msra.mxu0 0.0
      %947 = vmatprep.subr.mxu0 0.0
      %948 = vmatpush1.msra.mxu0 0.0
      %949 = vmatprep.subr.mxu0 0.0
      %950 = vmatpush1.msra.mxu0 0.0
      %951 = vmatprep.subr.mxu0 0.0
      %952 = vmatpush1.msra.mxu0 0.0
      %953 = vmatprep.subr.mxu0 0.0
      %954 = vmatpush1.msra.mxu0 0.0
      %955 = vmatprep.subr.mxu0 0.0
      %956 = vmatpush1.msra.mxu0 0.0
      %957 = vmatprep.subr.mxu0 0.0
      %958 = vmatpush1.msra.mxu0 0.0
      %959 = vmatprep.subr.mxu0 0.0
      %960 = vmatpush1.msra.mxu0 0.0
      %961 = vmatprep.subr.mxu0 0.0
      %962 = vmatpush1.msra.mxu0 0.0
      %963 = vmatprep.subr.mxu0 0.0
      %964 = vmatpush1.msra.mxu0 0.0
      %965 = vmatprep.subr.mxu0 0.0
      %966 = vmatpush1.msra.mxu0 0.0
      %967 = vmatprep.subr.mxu0 0.0
      %968 = vmatpush1.msra.mxu0 0.0
      %969 = vmatprep.subr.mxu0 0.0
      %970 = vmatpush1.msra.mxu0 0.0
      %971 = vmatprep.subr.mxu0 0.0
      %972 = vmatpush1.msra.mxu0 0.0
      %973 = vmatprep.subr.mxu0 0.0
      %974 = vmatpush1.msra.mxu0 0.0
      %975 = vmatprep.subr.mxu0 0.0
      %976 = vmatpush1.msra.mxu0 0.0
      %977 = vmatprep.mubr.f32.mxu0 0.0
      %978 = vmatmul.mubr.f32.gmra.mrb[0].mxu0 %v899
      %v979 = vpop.f32.mrb[0].mxu0
      %v980 = vadd.f32 0.0, %v979
      %v981 = vpop.f32.mrb[0].mxu0
      %982 = vmatprep.mubr.f32.mxu0 0.0
      %983 = vmatmul.mubr.f32.gmra.mrb[0].mxu0 %v902
      %v984 = vpop.f32.mrb[0].mxu0
      %v985 = vadd.f32 0.0, %v984
      %v986 = vpop.f32.mrb[0].mxu0
      %987 = vmatprep.mubr.f32.mxu0 0.0
      %988 = vmatmul.mubr.f32.gmra.mrb[0].mxu0 %v905
      %v989 = vpop.f32.mrb[0].mxu0
      %v990 = vadd.f32 0.0, %v989
      %v991 = vpop.f32.mrb[0].mxu0
      %992 = vmatprep.mubr.f32.mxu0 0.0
      %993 = vmatmul.mubr.f32.gmra.mrb[0].mxu0 %v908
      %v994 = vpop.f32.mrb[0].mxu0
      %v995 = vadd.f32 0.0, %v994
      %v996 = vpop.f32.mrb[0].mxu0
      %997 = vdwg.mxu0
      %v998 = vadd.f32 %v882, %v980
      %v999 = vadd.f32 %v883, %v985
      %v1000 = vadd.f32 %v884, %v990
      %v1001 = vadd.f32 %v885, %v995
      %1002 = vrot.lane.b32.xlu0 %v333, 118
      %v1003 = vpop.permute.xlu0 %1002
      %1005 = vrot.lane.b32.xlu0 %v333, 90
      %v1006 = vpop.permute.xlu0 %1005
      %vm1008 = vcmask 736256
      %v1009 = vsel %vm1008, %v1003, %v1006
      %s1010 = scalar_lea.vmem %s1, 192
      %v1011 = vld [vmem:[%s1010] sm:$0xff]
      %v1012 = vld [vmem:[%s1010 + $0x8] sm:$0xff]
      %v1013 = vld [vmem:[%s1010 + $0x10] sm:$0xff]
      %v1014 = vld [vmem:[%s1010 + $0x18] sm:$0xff]
      %v1016 = vsel %vm345, %v1011, 0
      %v1019 = vsel %vm345, %v1012, 0
      %v1022 = vsel %vm345, %v1013, 0
      %v1025 = vsel %vm345, %v1014, 0
      %v1028 = vsel %vm358, %v1009, 0
      %1030 = vmatprep.subr.mxu0 0.0
      %1031 = vmatpush1.msra.mxu0 %v1028
      %1032 = vmatprep.subr.mxu0 0.0
      %1033 = vmatpush1.msra.mxu0 0.0
      %1034 = vmatprep.subr.mxu0 0.0
      %1035 = vmatpush1.msra.mxu0 0.0
      %1036 = vmatprep.subr.mxu0 0.0
      %1037 = vmatpush1.msra.mxu0 0.0
      %1038 = vmatprep.subr.mxu0 0.0
      %1039 = vmatpush1.msra.mxu0 0.0
      %1040 = vmatprep.subr.mxu0 0.0
      %1041 = vmatpush1.msra.mxu0 0.0
      %1042 = vmatprep.subr.mxu0 0.0
      %1043 = vmatpush1.msra.mxu0 0.0
      %1044 = vmatprep.subr.mxu0 0.0
      %1045 = vmatpush1.msra.mxu0 0.0
      %1046 = vmatprep.subr.mxu0 0.0
      %1047 = vmatpush1.msra.mxu0 0.0
      %1048 = vmatprep.subr.mxu0 0.0
      %1049 = vmatpush1.msra.mxu0 0.0
      %1050 = vmatprep.subr.mxu0 0.0
      %1051 = vmatpush1.msra.mxu0 0.0
      %1052 = vmatprep.subr.mxu0 0.0
      %1053 = vmatpush1.msra.mxu0 0.0
      %1054 = vmatprep.subr.mxu0 0.0
      %1055 = vmatpush1.msra.mxu0 0.0
      %1056 = vmatprep.subr.mxu0 0.0
      %1057 = vmatpush1.msra.mxu0 0.0
      %1058 = vmatprep.subr.mxu0 0.0
      %1059 = vmatpush1.msra.mxu0 0.0
      %1060 = vmatprep.subr.mxu0 0.0
      %1061 = vmatpush1.msra.mxu0 0.0
      %1062 = vmatprep.subr.mxu0 0.0
      %1063 = vmatpush1.msra.mxu0 0.0
      %1064 = vmatprep.subr.mxu0 0.0
      %1065 = vmatpush1.msra.mxu0 0.0
      %1066 = vmatprep.subr.mxu0 0.0
      %1067 = vmatpush1.msra.mxu0 0.0
      %1068 = vmatprep.subr.mxu0 0.0
      %1069 = vmatpush1.msra.mxu0 0.0
      %1070 = vmatprep.subr.mxu0 0.0
      %1071 = vmatpush1.msra.mxu0 0.0
      %1072 = vmatprep.subr.mxu0 0.0
      %1073 = vmatpush1.msra.mxu0 0.0
      %1074 = vmatprep.subr.mxu0 0.0
      %1075 = vmatpush1.msra.mxu0 0.0
      %1076 = vmatprep.subr.mxu0 0.0
      %1077 = vmatpush1.msra.mxu0 0.0
      %1078 = vmatprep.subr.mxu0 0.0
      %1079 = vmatpush1.msra.mxu0 0.0
      %1080 = vmatprep.subr.mxu0 0.0
      %1081 = vmatpush1.msra.mxu0 0.0
      %1082 = vmatprep.subr.mxu0 0.0
      %1083 = vmatpush1.msra.mxu0 0.0
      %1084 = vmatprep.subr.mxu0 0.0
      %1085 = vmatpush1.msra.mxu0 0.0
      %1086 = vmatprep.subr.mxu0 0.0
      %1087 = vmatpush1.msra.mxu0 0.0
      %1088 = vmatprep.subr.mxu0 0.0
      %1089 = vmatpush1.msra.mxu0 0.0
      %1090 = vmatprep.subr.mxu0 0.0
      %1091 = vmatpush1.msra.mxu0 0.0
      %1092 = vmatprep.subr.mxu0 0.0
      %1093 = vmatpush1.msra.mxu0 0.0
      %1094 = vmatprep.mubr.f32.mxu0 0.0
      %1095 = vmatmul.mubr.f32.gmra.mrb[0].mxu0 %v1016
      %v1096 = vpop.f32.mrb[0].mxu0
      %v1097 = vadd.f32 0.0, %v1096
      %v1098 = vpop.f32.mrb[0].mxu0
      %1099 = vmatprep.mubr.f32.mxu0 0.0
      %1100 = vmatmul.mubr.f32.gmra.mrb[0].mxu0 %v1019
      %v1101 = vpop.f32.mrb[0].mxu0
      %v1102 = vadd.f32 0.0, %v1101
      %v1103 = vpop.f32.mrb[0].mxu0
      %1104 = vmatprep.mubr.f32.mxu0 0.0
      %1105 = vmatmul.mubr.f32.gmra.mrb[0].mxu0 %v1022
      %v1106 = vpop.f32.mrb[0].mxu0
      %v1107 = vadd.f32 0.0, %v1106
      %v1108 = vpop.f32.mrb[0].mxu0
      %1109 = vmatprep.mubr.f32.mxu0 0.0
      %1110 = vmatmul.mubr.f32.gmra.mrb[0].mxu0 %v1025
      %v1111 = vpop.f32.mrb[0].mxu0
      %v1112 = vadd.f32 0.0, %v1111
      %v1113 = vpop.f32.mrb[0].mxu0
      %1114 = vdwg.mxu0
      %v1115 = vadd.f32 %v998, %v1097
      %v1116 = vadd.f32 %v999, %v1102
      %v1117 = vadd.f32 %v1000, %v1107
      %v1118 = vadd.f32 %v1001, %v1112
      %1119 = vrot.lane.b32.xlu0 %v339, 118
      %v1120 = vpop.permute.xlu0 %1119
      %1122 = vrot.lane.b32.xlu0 %v339, 90
      %v1123 = vpop.permute.xlu0 %1122
      %v1125 = vsel %vm1008, %v1120, %v1123
      %s1126 = scalar_lea.vmem %s1, 224
      %v1127 = vld [vmem:[%s1126] sm:$0xff]
      %v1128 = vld [vmem:[%s1126 + $0x8] sm:$0xff]
      %v1129 = vld [vmem:[%s1126 + $0x10] sm:$0xff]
      %v1130 = vld [vmem:[%s1126 + $0x18] sm:$0xff]
      %v1132 = vsel %vm345, %v1127, 0
      %v1135 = vsel %vm345, %v1128, 0
      %v1138 = vsel %vm345, %v1129, 0
      %v1141 = vsel %vm345, %v1130, 0
      %v1144 = vsel %vm358, %v1125, 0
      %1146 = vmatprep.subr.mxu0 0.0
      %1147 = vmatpush1.msra.mxu0 %v1144
      %1148 = vmatprep.subr.mxu0 0.0
      %1149 = vmatpush1.msra.mxu0 0.0
      %1150 = vmatprep.subr.mxu0 0.0
      %1151 = vmatpush1.msra.mxu0 0.0
      %1152 = vmatprep.subr.mxu0 0.0
      %1153 = vmatpush1.msra.mxu0 0.0
      %1154 = vmatprep.subr.mxu0 0.0
      %1155 = vmatpush1.msra.mxu0 0.0
      %1156 = vmatprep.subr.mxu0 0.0
      %1157 = vmatpush1.msra.mxu0 0.0
      %1158 = vmatprep.subr.mxu0 0.0
      %1159 = vmatpush1.msra.mxu0 0.0
      %1160 = vmatprep.subr.mxu0 0.0
      %1161 = vmatpush1.msra.mxu0 0.0
      %1162 = vmatprep.subr.mxu0 0.0
      %1163 = vmatpush1.msra.mxu0 0.0
      %1164 = vmatprep.subr.mxu0 0.0
      %1165 = vmatpush1.msra.mxu0 0.0
      %1166 = vmatprep.subr.mxu0 0.0
      %1167 = vmatpush1.msra.mxu0 0.0
      %1168 = vmatprep.subr.mxu0 0.0
      %1169 = vmatpush1.msra.mxu0 0.0
      %1170 = vmatprep.subr.mxu0 0.0
      %1171 = vmatpush1.msra.mxu0 0.0
      %1172 = vmatprep.subr.mxu0 0.0
      %1173 = vmatpush1.msra.mxu0 0.0
      %1174 = vmatprep.subr.mxu0 0.0
      %1175 = vmatpush1.msra.mxu0 0.0
      %1176 = vmatprep.subr.mxu0 0.0
      %1177 = vmatpush1.msra.mxu0 0.0
      %1178 = vmatprep.subr.mxu0 0.0
      %1179 = vmatpush1.msra.mxu0 0.0
      %1180 = vmatprep.subr.mxu0 0.0
      %1181 = vmatpush1.msra.mxu0 0.0
      %1182 = vmatprep.subr.mxu0 0.0
      %1183 = vmatpush1.msra.mxu0 0.0
      %1184 = vmatprep.subr.mxu0 0.0
      %1185 = vmatpush1.msra.mxu0 0.0
      %1186 = vmatprep.subr.mxu0 0.0
      %1187 = vmatpush1.msra.mxu0 0.0
      %1188 = vmatprep.subr.mxu0 0.0
      %1189 = vmatpush1.msra.mxu0 0.0
      %1190 = vmatprep.subr.mxu0 0.0
      %1191 = vmatpush1.msra.mxu0 0.0
      %1192 = vmatprep.subr.mxu0 0.0
      %1193 = vmatpush1.msra.mxu0 0.0
      %1194 = vmatprep.subr.mxu0 0.0
      %1195 = vmatpush1.msra.mxu0 0.0
      %1196 = vmatprep.subr.mxu0 0.0
      %1197 = vmatpush1.msra.mxu0 0.0
      %1198 = vmatprep.subr.mxu0 0.0
      %1199 = vmatpush1.msra.mxu0 0.0
      %1200 = vmatprep.subr.mxu0 0.0
      %1201 = vmatpush1.msra.mxu0 0.0
      %1202 = vmatprep.subr.mxu0 0.0
      %1203 = vmatpush1.msra.mxu0 0.0
      %1204 = vmatprep.subr.mxu0 0.0
      %1205 = vmatpush1.msra.mxu0 0.0
      %1206 = vmatprep.subr.mxu0 0.0
      %1207 = vmatpush1.msra.mxu0 0.0
      %1208 = vmatprep.subr.mxu0 0.0
      %1209 = vmatpush1.msra.mxu0 0.0
      %1210 = vmatprep.mubr.f32.mxu0 0.0
      %1211 = vmatmul.mubr.f32.gmra.mrb[0].mxu0 %v1132
      %v1212 = vpop.f32.mrb[0].mxu0
      %v1213 = vadd.f32 0.0, %v1212
      %v1214 = vpop.f32.mrb[0].mxu0
      %1215 = vmatprep.mubr.f32.mxu0 0.0
      %1216 = vmatmul.mubr.f32.gmra.mrb[0].mxu0 %v1135
      %v1217 = vpop.f32.mrb[0].mxu0
      %v1218 = vadd.f32 0.0, %v1217
      %v1219 = vpop.f32.mrb[0].mxu0
      %1220 = vmatprep.mubr.f32.mxu0 0.0
      %1221 = vmatmul.mubr.f32.gmra.mrb[0].mxu0 %v1138
      %v1222 = vpop.f32.mrb[0].mxu0
      %v1223 = vadd.f32 0.0, %v1222
      %v1224 = vpop.f32.mrb[0].mxu0
      %1225 = vmatprep.mubr.f32.mxu0 0.0
      %1226 = vmatmul.mubr.f32.gmra.mrb[0].mxu0 %v1141
      %v1227 = vpop.f32.mrb[0].mxu0
      %v1228 = vadd.f32 0.0, %v1227
      %v1229 = vpop.f32.mrb[0].mxu0
      %1230 = vdwg.mxu0
      %v1231 = vadd.f32 %v1115, %v1213
      %v1232 = vadd.f32 %v1116, %v1218
      %v1233 = vadd.f32 %v1117, %v1223
      %v1234 = vadd.f32 %v1118, %v1228
      %1235 = vrot.lane.b32.xlu0 %v333, 117
      %v1236 = vpop.permute.xlu0 %1235
      %1238 = vrot.lane.b32.xlu0 %v333, 89
      %v1239 = vpop.permute.xlu0 %1238
      %vm1241 = vcmask 728064
      %v1242 = vsel %vm1241, %v1236, %v1239
      %s1243 = scalar_lea.vmem %s1, 256
      %v1244 = vld [vmem:[%s1243] sm:$0xff]
      %v1245 = vld [vmem:[%s1243 + $0x8] sm:$0xff]
      %v1246 = vld [vmem:[%s1243 + $0x10] sm:$0xff]
      %v1247 = vld [vmem:[%s1243 + $0x18] sm:$0xff]
      %v1249 = vsel %vm345, %v1244, 0
      %v1252 = vsel %vm345, %v1245, 0
      %v1255 = vsel %vm345, %v1246, 0
      %v1258 = vsel %vm345, %v1247, 0
      %v1261 = vsel %vm358, %v1242, 0
      %1263 = vmatprep.subr.mxu0 0.0
      %1264 = vmatpush1.msra.mxu0 %v1261
      %1265 = vmatprep.subr.mxu0 0.0
      %1266 = vmatpush1.msra.mxu0 0.0
      %1267 = vmatprep.subr.mxu0 0.0
      %1268 = vmatpush1.msra.mxu0 0.0
      %1269 = vmatprep.subr.mxu0 0.0
      %1270 = vmatpush1.msra.mxu0 0.0
      %1271 = vmatprep.subr.mxu0 0.0
      %1272 = vmatpush1.msra.mxu0 0.0
      %1273 = vmatprep.subr.mxu0 0.0
      %1274 = vmatpush1.msra.mxu0 0.0
      %1275 = vmatprep.subr.mxu0 0.0
      %1276 = vmatpush1.msra.mxu0 0.0
      %1277 = vmatprep.subr.mxu0 0.0
      %1278 = vmatpush1.msra.mxu0 0.0
      %1279 = vmatprep.subr.mxu0 0.0
      %1280 = vmatpush1.msra.mxu0 0.0
      %1281 = vmatprep.subr.mxu0 0.0
      %1282 = vmatpush1.msra.mxu0 0.0
      %1283 = vmatprep.subr.mxu0 0.0
      %1284 = vmatpush1.msra.mxu0 0.0
      %1285 = vmatprep.subr.mxu0 0.0
      %1286 = vmatpush1.msra.mxu0 0.0
      %1287 = vmatprep.subr.mxu0 0.0
      %1288 = vmatpush1.msra.mxu0 0.0
      %1289 = vmatprep.subr.mxu0 0.0
      %1290 = vmatpush1.msra.mxu0 0.0
      %1291 = vmatprep.subr.mxu0 0.0
      %1292 = vmatpush1.msra.mxu0 0.0
      %1293 = vmatprep.subr.mxu0 0.0
      %1294 = vmatpush1.msra.mxu0 0.0
      %1295 = vmatprep.subr.mxu0 0.0
      %1296 = vmatpush1.msra.mxu0 0.0
      %1297 = vmatprep.subr.mxu0 0.0
      %1298 = vmatpush1.msra.mxu0 0.0
      %1299 = vmatprep.subr.mxu0 0.0
      %1300 = vmatpush1.msra.mxu0 0.0
      %1301 = vmatprep.subr.mxu0 0.0
      %1302 = vmatpush1.msra.mxu0 0.0
      %1303 = vmatprep.subr.mxu0 0.0
      %1304 = vmatpush1.msra.mxu0 0.0
      %1305 = vmatprep.subr.mxu0 0.0
      %1306 = vmatpush1.msra.mxu0 0.0
      %1307 = vmatprep.subr.mxu0 0.0
      %1308 = vmatpush1.msra.mxu0 0.0
      %1309 = vmatprep.subr.mxu0 0.0
      %1310 = vmatpush1.msra.mxu0 0.0
      %1311 = vmatprep.subr.mxu0 0.0
      %1312 = vmatpush1.msra.mxu0 0.0
      %1313 = vmatprep.subr.mxu0 0.0
      %1314 = vmatpush1.msra.mxu0 0.0
      %1315 = vmatprep.subr.mxu0 0.0
      %1316 = vmatpush1.msra.mxu0 0.0
      %1317 = vmatprep.subr.mxu0 0.0
      %1318 = vmatpush1.msra.mxu0 0.0
      %1319 = vmatprep.subr.mxu0 0.0
      %1320 = vmatpush1.msra.mxu0 0.0
      %1321 = vmatprep.subr.mxu0 0.0
      %1322 = vmatpush1.msra.mxu0 0.0
      %1323 = vmatprep.subr.mxu0 0.0
      %1324 = vmatpush1.msra.mxu0 0.0
      %1325 = vmatprep.subr.mxu0 0.0
      %1326 = vmatpush1.msra.mxu0 0.0
      %1327 = vmatprep.mubr.f32.mxu0 0.0
      %1328 = vmatmul.mubr.f32.gmra.mrb[0].mxu0 %v1249
      %v1329 = vpop.f32.mrb[0].mxu0
      %v1330 = vadd.f32 0.0, %v1329
      %v1331 = vpop.f32.mrb[0].mxu0
      %1332 = vmatprep.mubr.f32.mxu0 0.0
      %1333 = vmatmul.mubr.f32.gmra.mrb[0].mxu0 %v1252
      %v1334 = vpop.f32.mrb[0].mxu0
      %v1335 = vadd.f32 0.0, %v1334
      %v1336 = vpop.f32.mrb[0].mxu0
      %1337 = vmatprep.mubr.f32.mxu0 0.0
      %1338 = vmatmul.mubr.f32.gmra.mrb[0].mxu0 %v1255
      %v1339 = vpop.f32.mrb[0].mxu0
      %v1340 = vadd.f32 0.0, %v1339
      %v1341 = vpop.f32.mrb[0].mxu0
      %1342 = vmatprep.mubr.f32.mxu0 0.0
      %1343 = vmatmul.mubr.f32.gmra.mrb[0].mxu0 %v1258
      %v1344 = vpop.f32.mrb[0].mxu0
      %v1345 = vadd.f32 0.0, %v1344
      %v1346 = vpop.f32.mrb[0].mxu0
      %1347 = vdwg.mxu0
      %v1348 = vadd.f32 %v1231, %v1330
      %v1349 = vadd.f32 %v1232, %v1335
      %v1350 = vadd.f32 %v1233, %v1340
      %v1351 = vadd.f32 %v1234, %v1345
      %v1352 = vld [vmem:[%s2] sm:$0xff]
      %v1353 = vld [vmem:[%s2 + $0x8] sm:$0xff]
      %v1354 = vld [vmem:[%s2 + $0x10] sm:$0xff]
      %v1355 = vld [vmem:[%s2 + $0x18] sm:$0xff]
      %1357 = vset.pattern.permute.xlu0 0
      %1358 = vperm.xlu0 %1357, %v1352
      %v1359 = vpop.permute.xlu0 %1358
      %1362 = vset.pattern.permute.xlu0 0
      %1363 = vperm.xlu0 %1362, %v1353
      %v1364 = vpop.permute.xlu0 %1363
      %1367 = vset.pattern.permute.xlu0 0
      %1368 = vperm.xlu0 %1367, %v1354
      %v1369 = vpop.permute.xlu0 %1368
      %1372 = vset.pattern.permute.xlu0 0
      %1373 = vperm.xlu0 %1372, %v1355
      %v1374 = vpop.permute.xlu0 %1373
      %v1376 = vadd.f32 %v1348, %v1359
      %v1377 = vadd.f32 %v1349, %v1364
      %v1378 = vadd.f32 %v1350, %v1369
      %v1379 = vadd.f32 %v1351, %v1374
      %v1380 = vmax.f32 %v1376, 0.0
      %v1381 = vmax.f32 %v1377, 0.0
      %v1382 = vmax.f32 %v1378, 0.0
      %v1383 = vmax.f32 %v1379, 0.0
      %v1384 = vld [vmem:[%s3] sm:$0xff]
      %v1385 = vld [vmem:[%s3 + $0x8] sm:$0xff]
      %v1386 = vld [vmem:[%s3 + $0x10] sm:$0xff]
      %v1387 = vld [vmem:[%s3 + $0x18] sm:$0xff]
      %1392 = vrot.lane.b32.xlu0 %v1380, 127
      %v1393 = vpop.permute.xlu0 %1392
      %1394 = vrot.lane.b32.xlu0 %v1381, 127
      %v1395 = vpop.permute.xlu0 %1394
      %1396 = vrot.lane.b32.xlu0 %v1382, 127
      %v1397 = vpop.permute.xlu0 %1396
      %1398 = vrot.lane.b32.xlu0 %v1383, 127
      %v1399 = vpop.permute.xlu0 %1398
      %1404 = vrot.lane.b32.xlu0 %v1380, 99
      %v1405 = vpop.permute.xlu0 %1404
      %1406 = vrot.lane.b32.xlu0 %v1381, 99
      %v1407 = vpop.permute.xlu0 %1406
      %1408 = vrot.lane.b32.xlu0 %v1382, 99
      %v1409 = vpop.permute.xlu0 %1408
      %1410 = vrot.lane.b32.xlu0 %v1383, 99
      %v1411 = vpop.permute.xlu0 %1410
      %v1416 = vsel %vm553, %v1393, %v1405
      %v1417 = vsel %vm553, %v1395, %v1407
      %v1418 = vsel %vm553, %v1397, %v1409
      %v1419 = vsel %vm553, %v1399, %v1411
      %s1420 = scalar_lea.vmem %s3, 32
      %v1421 = vld [vmem:[%s1420] sm:$0xff]
      %v1422 = vld [vmem:[%s1420 + $0x8] sm:$0xff]
      %v1423 = vld [vmem:[%s1420 + $0x10] sm:$0xff]
      %v1424 = vld [vmem:[%s1420 + $0x18] sm:$0xff]
      %vm1425 = vcmask 261120
      %v1427 = vsel %vm1425, %v1421, 0
      %v1430 = vsel %vm1425, %v1422, 0
      %v1433 = vsel %vm1425, %v1423, 0
      %v1436 = vsel %vm1425, %v1424, 0
      %1438 = vmatprep.subr.mxu0 0.0
      %1439 = vmatpush1.msra.mxu0 %v1416
      %1440 = vmatprep.subr.mxu0 0.0
      %1441 = vmatpush1.msra.mxu0 %v1417
      %1442 = vmatprep.subr.mxu0 0.0
      %1443 = vmatpush1.msra.mxu0 %v1418
      %1444 = vmatprep.subr.mxu0 0.0
      %1445 = vmatpush1.msra.mxu0 %v1419
      %1446 = vmatprep.subr.mxu0 0.0
      %1447 = vmatpush1.msra.mxu0 0.0
      %1448 = vmatprep.subr.mxu0 0.0
      %1449 = vmatpush1.msra.mxu0 0.0
      %1450 = vmatprep.subr.mxu0 0.0
      %1451 = vmatpush1.msra.mxu0 0.0
      %1452 = vmatprep.subr.mxu0 0.0
      %1453 = vmatpush1.msra.mxu0 0.0
      %1454 = vmatprep.subr.mxu0 0.0
      %1455 = vmatpush1.msra.mxu0 0.0
      %1456 = vmatprep.subr.mxu0 0.0
      %1457 = vmatpush1.msra.mxu0 0.0
      %1458 = vmatprep.subr.mxu0 0.0
      %1459 = vmatpush1.msra.mxu0 0.0
      %1460 = vmatprep.subr.mxu0 0.0
      %1461 = vmatpush1.msra.mxu0 0.0
      %1462 = vmatprep.subr.mxu0 0.0
      %1463 = vmatpush1.msra.mxu0 0.0
      %1464 = vmatprep.subr.mxu0 0.0
      %1465 = vmatpush1.msra.mxu0 0.0
      %1466 = vmatprep.subr.mxu0 0.0
      %1467 = vmatpush1.msra.mxu0 0.0
      %1468 = vmatprep.subr.mxu0 0.0
      %1469 = vmatpush1.msra.mxu0 0.0
      %1470 = vmatprep.subr.mxu0 0.0
      %1471 = vmatpush1.msra.mxu0 0.0
      %1472 = vmatprep.subr.mxu0 0.0
      %1473 = vmatpush1.msra.mxu0 0.0
      %1474 = vmatprep.subr.mxu0 0.0
      %1475 = vmatpush1.msra.mxu0 0.0
      %1476 = vmatprep.subr.mxu0 0.0
      %1477 = vmatpush1.msra.mxu0 0.0
      %1478 = vmatprep.subr.mxu0 0.0
      %1479 = vmatpush1.msra.mxu0 0.0
      %1480 = vmatprep.subr.mxu0 0.0
      %1481 = vmatpush1.msra.mxu0 0.0
      %1482 = vmatprep.subr.mxu0 0.0
      %1483 = vmatpush1.msra.mxu0 0.0
      %1484 = vmatprep.subr.mxu0 0.0
      %1485 = vmatpush1.msra.mxu0 0.0
      %1486 = vmatprep.subr.mxu0 0.0
      %1487 = vmatpush1.msra.mxu0 0.0
      %1488 = vmatprep.subr.mxu0 0.0
      %1489 = vmatpush1.msra.mxu0 0.0
      %1490 = vmatprep.subr.mxu0 0.0
      %1491 = vmatpush1.msra.mxu0 0.0
      %1492 = vmatprep.subr.mxu0 0.0
      %1493 = vmatpush1.msra.mxu0 0.0
      %1494 = vmatprep.subr.mxu0 0.0
      %1495 = vmatpush1.msra.mxu0 0.0
      %1496 = vmatprep.subr.mxu0 0.0
      %1497 = vmatpush1.msra.mxu0 0.0
      %1498 = vmatprep.subr.mxu0 0.0
      %1499 = vmatpush1.msra.mxu0 0.0
      %1500 = vmatprep.subr.mxu0 0.0
      %1501 = vmatpush1.msra.mxu0 0.0
      %1502 = vmatprep.mubr.f32.mxu0 0.0
      %1503 = vmatmul.mubr.f32.gmra.mrb[0].mxu0 %v1427
      %v1504 = vpop.f32.mrb[0].mxu0
      %v1505 = vadd.f32 0.0, %v1504
      %v1506 = vpop.f32.mrb[0].mxu0
      %1507 = vmatprep.mubr.f32.mxu0 0.0
      %1508 = vmatmul.mubr.f32.gmra.mrb[0].mxu0 %v1430
      %v1509 = vpop.f32.mrb[0].mxu0
      %v1510 = vadd.f32 0.0, %v1509
      %v1511 = vpop.f32.mrb[0].mxu0
      %1512 = vmatprep.mubr.f32.mxu0 0.0
      %1513 = vmatmul.mubr.f32.gmra.mrb[0].mxu0 %v1433
      %v1514 = vpop.f32.mrb[0].mxu0
      %v1515 = vadd.f32 0.0, %v1514
      %v1516 = vpop.f32.mrb[0].mxu0
      %1517 = vmatprep.mubr.f32.mxu0 0.0
      %1518 = vmatmul.mubr.f32.gmra.mrb[0].mxu0 %v1436
      %v1519 = vpop.f32.mrb[0].mxu0
      %v1520 = vadd.f32 0.0, %v1519
      %v1521 = vpop.f32.mrb[0].mxu0
      %1522 = vdwg.mxu0
      %v1524 = vsel %vm1425, %v1384, 0
      %v1527 = vsel %vm1425, %v1385, 0
      %v1530 = vsel %vm1425, %v1386, 0
      %v1533 = vsel %vm1425, %v1387, 0
      %1535 = vmatprep.subr.mxu0 0.0
      %1536 = vmatpush1.msra.mxu0 %v1380
      %1537 = vmatprep.subr.mxu0 0.0
      %1538 = vmatpush1.msra.mxu0 %v1381
      %1539 = vmatprep.subr.mxu0 0.0
      %1540 = vmatpush1.msra.mxu0 %v1382
      %1541 = vmatprep.subr.mxu0 0.0
      %1542 = vmatpush1.msra.mxu0 %v1383
      %1543 = vmatprep.subr.mxu0 0.0
      %1544 = vmatpush1.msra.mxu0 0.0
      %1545 = vmatprep.subr.mxu0 0.0
      %1546 = vmatpush1.msra.mxu0 0.0
      %1547 = vmatprep.subr.mxu0 0.0
      %1548 = vmatpush1.msra.mxu0 0.0
      %1549 = vmatprep.subr.mxu0 0.0
      %1550 = vmatpush1.msra.mxu0 0.0
      %1551 = vmatprep.subr.mxu0 0.0
      %1552 = vmatpush1.msra.mxu0 0.0
      %1553 = vmatprep.subr.mxu0 0.0
      %1554 = vmatpush1.msra.mxu0 0.0
      %1555 = vmatprep.subr.mxu0 0.0
      %1556 = vmatpush1.msra.mxu0 0.0
      %1557 = vmatprep.subr.mxu0 0.0
      %1558 = vmatpush1.msra.mxu0 0.0
      %1559 = vmatprep.subr.mxu0 0.0
      %1560 = vmatpush1.msra.mxu0 0.0
      %1561 = vmatprep.subr.mxu0 0.0
      %1562 = vmatpush1.msra.mxu0 0.0
      %1563 = vmatprep.subr.mxu0 0.0
      %1564 = vmatpush1.msra.mxu0 0.0
      %1565 = vmatprep.subr.mxu0 0.0
      %1566 = vmatpush1.msra.mxu0 0.0
      %1567 = vmatprep.subr.mxu0 0.0
      %1568 = vmatpush1.msra.mxu0 0.0
      %1569 = vmatprep.subr.mxu0 0.0
      %1570 = vmatpush1.msra.mxu0 0.0
      %1571 = vmatprep.subr.mxu0 0.0
      %1572 = vmatpush1.msra.mxu0 0.0
      %1573 = vmatprep.subr.mxu0 0.0
      %1574 = vmatpush1.msra.mxu0 0.0
      %1575 = vmatprep.subr.mxu0 0.0
      %1576 = vmatpush1.msra.mxu0 0.0
      %1577 = vmatprep.subr.mxu0 0.0
      %1578 = vmatpush1.msra.mxu0 0.0
      %1579 = vmatprep.subr.mxu0 0.0
      %1580 = vmatpush1.msra.mxu0 0.0
      %1581 = vmatprep.subr.mxu0 0.0
      %1582 = vmatpush1.msra.mxu0 0.0
      %1583 = vmatprep.subr.mxu0 0.0
      %1584 = vmatpush1.msra.mxu0 0.0
      %1585 = vmatprep.subr.mxu0 0.0
      %1586 = vmatpush1.msra.mxu0 0.0
      %1587 = vmatprep.subr.mxu0 0.0
      %1588 = vmatpush1.msra.mxu0 0.0
      %1589 = vmatprep.subr.mxu0 0.0
      %1590 = vmatpush1.msra.mxu0 0.0
      %1591 = vmatprep.subr.mxu0 0.0
      %1592 = vmatpush1.msra.mxu0 0.0
      %1593 = vmatprep.subr.mxu0 0.0
      %1594 = vmatpush1.msra.mxu0 0.0
      %1595 = vmatprep.subr.mxu0 0.0
      %1596 = vmatpush1.msra.mxu0 0.0
      %1597 = vmatprep.subr.mxu0 0.0
      %1598 = vmatpush1.msra.mxu0 0.0
      %1599 = vmatprep.mubr.f32.mxu0 0.0
      %1600 = vmatmul.mubr.f32.gmra.mrb[0].mxu0 %v1524
      %v1601 = vpop.f32.mrb[0].mxu0
      %v1602 = vadd.f32 %v1505, %v1601
      %v1603 = vpop.f32.mrb[0].mxu0
      %1604 = vmatprep.mubr.f32.mxu0 0.0
      %1605 = vmatmul.mubr.f32.gmra.mrb[0].mxu0 %v1527
      %v1606 = vpop.f32.mrb[0].mxu0
      %v1607 = vadd.f32 %v1510, %v1606
      %v1608 = vpop.f32.mrb[0].mxu0
      %1609 = vmatprep.mubr.f32.mxu0 0.0
      %1610 = vmatmul.mubr.f32.gmra.mrb[0].mxu0 %v1530
      %v1611 = vpop.f32.mrb[0].mxu0
      %v1612 = vadd.f32 %v1515, %v1611
      %v1613 = vpop.f32.mrb[0].mxu0
      %1614 = vmatprep.mubr.f32.mxu0 0.0
      %1615 = vmatmul.mubr.f32.gmra.mrb[0].mxu0 %v1533
      %v1616 = vpop.f32.mrb[0].mxu0
      %v1617 = vadd.f32 %v1520, %v1616
      %v1618 = vpop.f32.mrb[0].mxu0
      %1619 = vdwg.mxu0
      %1620 = vrot.lane.b32.xlu0 %v1380, 126
      %v1621 = vpop.permute.xlu0 %1620
      %1622 = vrot.lane.b32.xlu0 %v1381, 126
      %v1623 = vpop.permute.xlu0 %1622
      %1624 = vrot.lane.b32.xlu0 %v1382, 126
      %v1625 = vpop.permute.xlu0 %1624
      %1626 = vrot.lane.b32.xlu0 %v1383, 126
      %v1627 = vpop.permute.xlu0 %1626
      %1632 = vrot.lane.b32.xlu0 %v1380, 98
      %v1633 = vpop.permute.xlu0 %1632
      %1634 = vrot.lane.b32.xlu0 %v1381, 98
      %v1635 = vpop.permute.xlu0 %1634
      %1636 = vrot.lane.b32.xlu0 %v1382, 98
      %v1637 = vpop.permute.xlu0 %1636
      %1638 = vrot.lane.b32.xlu0 %v1383, 98
      %v1639 = vpop.permute.xlu0 %1638
      %vm1644 = vcmask 801792
      %v1645 = vsel %vm1644, %v1621, %v1633
      %v1646 = vsel %vm1644, %v1623, %v1635
      %v1647 = vsel %vm1644, %v1625, %v1637
      %v1648 = vsel %vm1644, %v1627, %v1639
      %s1649 = scalar_lea.vmem %s3, 64
      %v1650 = vld [vmem:[%s1649] sm:$0xff]
      %v1651 = vld [vmem:[%s1649 + $0x8] sm:$0xff]
      %v1652 = vld [vmem:[%s1649 + $0x10] sm:$0xff]
      %v1653 = vld [vmem:[%s1649 + $0x18] sm:$0xff]
      %v1655 = vsel %vm1425, %v1650, 0
      %v1658 = vsel %vm1425, %v1651, 0
      %v1661 = vsel %vm1425, %v1652, 0
      %v1664 = vsel %vm1425, %v1653, 0
      %1666 = vmatprep.subr.mxu0 0.0
      %1667 = vmatpush1.msra.mxu0 %v1645
      %1668 = vmatprep.subr.mxu0 0.0
      %1669 = vmatpush1.msra.mxu0 %v1646
      %1670 = vmatprep.subr.mxu0 0.0
      %1671 = vmatpush1.msra.mxu0 %v1647
      %1672 = vmatprep.subr.mxu0 0.0
      %1673 = vmatpush1.msra.mxu0 %v1648
      %1674 = vmatprep.subr.mxu0 0.0
      %1675 = vmatpush1.msra.mxu0 0.0
      %1676 = vmatprep.subr.mxu0 0.0
      %1677 = vmatpush1.msra.mxu0 0.0
      %1678 = vmatprep.subr.mxu0 0.0
      %1679 = vmatpush1.msra.mxu0 0.0
      %1680 = vmatprep.subr.mxu0 0.0
      %1681 = vmatpush1.msra.mxu0 0.0
      %1682 = vmatprep.subr.mxu0 0.0
      %1683 = vmatpush1.msra.mxu0 0.0
      %1684 = vmatprep.subr.mxu0 0.0
      %1685 = vmatpush1.msra.mxu0 0.0
      %1686 = vmatprep.subr.mxu0 0.0
      %1687 = vmatpush1.msra.mxu0 0.0
      %1688 = vmatprep.subr.mxu0 0.0
      %1689 = vmatpush1.msra.mxu0 0.0
      %1690 = vmatprep.subr.mxu0 0.0
      %1691 = vmatpush1.msra.mxu0 0.0
      %1692 = vmatprep.subr.mxu0 0.0
      %1693 = vmatpush1.msra.mxu0 0.0
      %1694 = vmatprep.subr.mxu0 0.0
      %1695 = vmatpush1.msra.mxu0 0.0
      %1696 = vmatprep.subr.mxu0 0.0
      %1697 = vmatpush1.msra.mxu0 0.0
      %1698 = vmatprep.subr.mxu0 0.0
      %1699 = vmatpush1.msra.mxu0 0.0
      %1700 = vmatprep.subr.mxu0 0.0
      %1701 = vmatpush1.msra.mxu0 0.0
      %1702 = vmatprep.subr.mxu0 0.0
      %1703 = vmatpush1.msra.mxu0 0.0
      %1704 = vmatprep.subr.mxu0 0.0
      %1705 = vmatpush1.msra.mxu0 0.0
      %1706 = vmatprep.subr.mxu0 0.0
      %1707 = vmatpush1.msra.mxu0 0.0
      %1708 = vmatprep.subr.mxu0 0.0
      %1709 = vmatpush1.msra.mxu0 0.0
      %1710 = vmatprep.subr.mxu0 0.0
      %1711 = vmatpush1.msra.mxu0 0.0
      %1712 = vmatprep.subr.mxu0 0.0
      %1713 = vmatpush1.msra.mxu0 0.0
      %1714 = vmatprep.subr.mxu0 0.0
      %1715 = vmatpush1.msra.mxu0 0.0
      %1716 = vmatprep.subr.mxu0 0.0
      %1717 = vmatpush1.msra.mxu0 0.0
      %1718 = vmatprep.subr.mxu0 0.0
      %1719 = vmatpush1.msra.mxu0 0.0
      %1720 = vmatprep.subr.mxu0 0.0
      %1721 = vmatpush1.msra.mxu0 0.0
      %1722 = vmatprep.subr.mxu0 0.0
      %1723 = vmatpush1.msra.mxu0 0.0
      %1724 = vmatprep.subr.mxu0 0.0
      %1725 = vmatpush1.msra.mxu0 0.0
      %1726 = vmatprep.subr.mxu0 0.0
      %1727 = vmatpush1.msra.mxu0 0.0
      %1728 = vmatprep.subr.mxu0 0.0
      %1729 = vmatpush1.msra.mxu0 0.0
      %1730 = vmatprep.mubr.f32.mxu0 0.0
      %1731 = vmatmul.mubr.f32.gmra.mrb[0].mxu0 %v1655
      %v1732 = vpop.f32.mrb[0].mxu0
      %v1733 = vadd.f32 0.0, %v1732
      %v1734 = vpop.f32.mrb[0].mxu0
      %1735 = vmatprep.mubr.f32.mxu0 0.0
      %1736 = vmatmul.mubr.f32.gmra.mrb[0].mxu0 %v1658
      %v1737 = vpop.f32.mrb[0].mxu0
      %v1738 = vadd.f32 0.0, %v1737
      %v1739 = vpop.f32.mrb[0].mxu0
      %1740 = vmatprep.mubr.f32.mxu0 0.0
      %1741 = vmatmul.mubr.f32.gmra.mrb[0].mxu0 %v1661
      %v1742 = vpop.f32.mrb[0].mxu0
      %v1743 = vadd.f32 0.0, %v1742
      %v1744 = vpop.f32.mrb[0].mxu0
      %1745 = vmatprep.mubr.f32.mxu0 0.0
      %1746 = vmatmul.mubr.f32.gmra.mrb[0].mxu0 %v1664
      %v1747 = vpop.f32.mrb[0].mxu0
      %v1748 = vadd.f32 0.0, %v1747
      %v1749 = vpop.f32.mrb[0].mxu0
      %1750 = vdwg.mxu0
      %v1751 = vadd.f32 %v1602, %v1733
      %v1752 = vadd.f32 %v1607, %v1738
      %v1753 = vadd.f32 %v1612, %v1743
      %v1754 = vadd.f32 %v1617, %v1748
      %1755 = vrot.lane.b32.xlu0 %v1380, 118
      %v1756 = vpop.permute.xlu0 %1755
      %1757 = vrot.lane.b32.xlu0 %v1381, 118
      %v1758 = vpop.permute.xlu0 %1757
      %1759 = vrot.lane.b32.xlu0 %v1382, 118
      %v1760 = vpop.permute.xlu0 %1759
      %1761 = vrot.lane.b32.xlu0 %v1383, 118
      %v1762 = vpop.permute.xlu0 %1761
      %1767 = vrot.lane.b32.xlu0 %v1380, 90
      %v1768 = vpop.permute.xlu0 %1767
      %1769 = vrot.lane.b32.xlu0 %v1381, 90
      %v1770 = vpop.permute.xlu0 %1769
      %1771 = vrot.lane.b32.xlu0 %v1382, 90
      %v1772 = vpop.permute.xlu0 %1771
      %1773 = vrot.lane.b32.xlu0 %v1383, 90
      %v1774 = vpop.permute.xlu0 %1773
      %v1779 = vsel %vm1008, %v1756, %v1768
      %v1780 = vsel %vm1008, %v1758, %v1770
      %v1781 = vsel %vm1008, %v1760, %v1772
      %v1782 = vsel %vm1008, %v1762, %v1774
      %s1783 = scalar_lea.vmem %s3, 96
      %v1784 = vld [vmem:[%s1783] sm:$0xff]
      %v1785 = vld [vmem:[%s1783 + $0x8] sm:$0xff]
      %v1786 = vld [vmem:[%s1783 + $0x10] sm:$0xff]
      %v1787 = vld [vmem:[%s1783 + $0x18] sm:$0xff]
      %v1789 = vsel %vm1425, %v1784, 0
      %v1792 = vsel %vm1425, %v1785, 0
      %v1795 = vsel %vm1425, %v1786, 0
      %v1798 = vsel %vm1425, %v1787, 0
      %1800 = vmatprep.subr.mxu0 0.0
      %1801 = vmatpush1.msra.mxu0 %v1779
      %1802 = vmatprep.subr.mxu0 0.0
      %1803 = vmatpush1.msra.mxu0 %v1780
      %1804 = vmatprep.subr.mxu0 0.0
      %1805 = vmatpush1.msra.mxu0 %v1781
      %1806 = vmatprep.subr.mxu0 0.0
      %1807 = vmatpush1.msra.mxu0 %v1782
      %1808 = vmatprep.subr.mxu0 0.0
      %1809 = vmatpush1.msra.mxu0 0.0
      %1810 = vmatprep.subr.mxu0 0.0
      %1811 = vmatpush1.msra.mxu0 0.0
      %1812 = vmatprep.subr.mxu0 0.0
      %1813 = vmatpush1.msra.mxu0 0.0
      %1814 = vmatprep.subr.mxu0 0.0
      %1815 = vmatpush1.msra.mxu0 0.0
      %1816 = vmatprep.subr.mxu0 0.0
      %1817 = vmatpush1.msra.mxu0 0.0
      %1818 = vmatprep.subr.mxu0 0.0
      %1819 = vmatpush1.msra.mxu0 0.0
      %1820 = vmatprep.subr.mxu0 0.0
      %1821 = vmatpush1.msra.mxu0 0.0
      %1822 = vmatprep.subr.mxu0 0.0
      %1823 = vmatpush1.msra.mxu0 0.0
      %1824 = vmatprep.subr.mxu0 0.0
      %1825 = vmatpush1.msra.mxu0 0.0
      %1826 = vmatprep.subr.mxu0 0.0
      %1827 = vmatpush1.msra.mxu0 0.0
      %1828 = vmatprep.subr.mxu0 0.0
      %1829 = vmatpush1.msra.mxu0 0.0
      %1830 = vmatprep.subr.mxu0 0.0
      %1831 = vmatpush1.msra.mxu0 0.0
      %1832 = vmatprep.subr.mxu0 0.0
      %1833 = vmatpush1.msra.mxu0 0.0
      %1834 = vmatprep.subr.mxu0 0.0
      %1835 = vmatpush1.msra.mxu0 0.0
      %1836 = vmatprep.subr.mxu0 0.0
      %1837 = vmatpush1.msra.mxu0 0.0
      %1838 = vmatprep.subr.mxu0 0.0
      %1839 = vmatpush1.msra.mxu0 0.0
      %1840 = vmatprep.subr.mxu0 0.0
      %1841 = vmatpush1.msra.mxu0 0.0
      %1842 = vmatprep.subr.mxu0 0.0
      %1843 = vmatpush1.msra.mxu0 0.0
      %1844 = vmatprep.subr.mxu0 0.0
      %1845 = vmatpush1.msra.mxu0 0.0
      %1846 = vmatprep.subr.mxu0 0.0
      %1847 = vmatpush1.msra.mxu0 0.0
      %1848 = vmatprep.subr.mxu0 0.0
      %1849 = vmatpush1.msra.mxu0 0.0
      %1850 = vmatprep.subr.mxu0 0.0
      %1851 = vmatpush1.msra.mxu0 0.0
      %1852 = vmatprep.subr.mxu0 0.0
      %1853 = vmatpush1.msra.mxu0 0.0
      %1854 = vmatprep.subr.mxu0 0.0
      %1855 = vmatpush1.msra.mxu0 0.0
      %1856 = vmatprep.subr.mxu0 0.0
      %1857 = vmatpush1.msra.mxu0 0.0
      %1858 = vmatprep.subr.mxu0 0.0
      %1859 = vmatpush1.msra.mxu0 0.0
      %1860 = vmatprep.subr.mxu0 0.0
      %1861 = vmatpush1.msra.mxu0 0.0
      %1862 = vmatprep.subr.mxu0 0.0
      %1863 = vmatpush1.msra.mxu0 0.0
      %1864 = vmatprep.mubr.f32.mxu0 0.0
      %1865 = vmatmul.mubr.f32.gmra.mrb[0].mxu0 %v1789
      %v1866 = vpop.f32.mrb[0].mxu0
      %v1867 = vadd.f32 0.0, %v1866
      %v1868 = vpop.f32.mrb[0].mxu0
      %1869 = vmatprep.mubr.f32.mxu0 0.0
      %1870 = vmatmul.mubr.f32.gmra.mrb[0].mxu0 %v1792
      %v1871 = vpop.f32.mrb[0].mxu0
      %v1872 = vadd.f32 0.0, %v1871
      %v1873 = vpop.f32.mrb[0].mxu0
      %1874 = vmatprep.mubr.f32.mxu0 0.0
      %1875 = vmatmul.mubr.f32.gmra.mrb[0].mxu0 %v1795
      %v1876 = vpop.f32.mrb[0].mxu0
      %v1877 = vadd.f32 0.0, %v1876
      %v1878 = vpop.f32.mrb[0].mxu0
      %1879 = vmatprep.mubr.f32.mxu0 0.0
      %1880 = vmatmul.mubr.f32.gmra.mrb[0].mxu0 %v1798
      %v1881 = vpop.f32.mrb[0].mxu0
      %v1882 = vadd.f32 0.0, %v1881
      %v1883 = vpop.f32.mrb[0].mxu0
      %1884 = vdwg.mxu0
      %v1885 = vadd.f32 %v1751, %v1867
      %v1886 = vadd.f32 %v1752, %v1872
      %v1887 = vadd.f32 %v1753, %v1877
      %v1888 = vadd.f32 %v1754, %v1882
      %1889 = vrot.lane.b32.xlu0 %v1380, 117
      %v1890 = vpop.permute.xlu0 %1889
      %1891 = vrot.lane.b32.xlu0 %v1381, 117
      %v1892 = vpop.permute.xlu0 %1891
      %1893 = vrot.lane.b32.xlu0 %v1382, 117
      %v1894 = vpop.permute.xlu0 %1893
      %1895 = vrot.lane.b32.xlu0 %v1383, 117
      %v1896 = vpop.permute.xlu0 %1895
      %1901 = vrot.lane.b32.xlu0 %v1380, 89
      %v1902 = vpop.permute.xlu0 %1901
      %1903 = vrot.lane.b32.xlu0 %v1381, 89
      %v1904 = vpop.permute.xlu0 %1903
      %1905 = vrot.lane.b32.xlu0 %v1382, 89
      %v1906 = vpop.permute.xlu0 %1905
      %1907 = vrot.lane.b32.xlu0 %v1383, 89
      %v1908 = vpop.permute.xlu0 %1907
      %v1913 = vsel %vm1241, %v1890, %v1902
      %v1914 = vsel %vm1241, %v1892, %v1904
      %v1915 = vsel %vm1241, %v1894, %v1906
      %v1916 = vsel %vm1241, %v1896, %v1908
      %s1917 = scalar_lea.vmem %s3, 128
      %v1918 = vld [vmem:[%s1917] sm:$0xff]
      %v1919 = vld [vmem:[%s1917 + $0x8] sm:$0xff]
      %v1920 = vld [vmem:[%s1917 + $0x10] sm:$0xff]
      %v1921 = vld [vmem:[%s1917 + $0x18] sm:$0xff]
      %v1923 = vsel %vm1425, %v1918, 0
      %v1926 = vsel %vm1425, %v1919, 0
      %v1929 = vsel %vm1425, %v1920, 0
      %v1932 = vsel %vm1425, %v1921, 0
      %1934 = vmatprep.subr.mxu0 0.0
      %1935 = vmatpush1.msra.mxu0 %v1913
      %1936 = vmatprep.subr.mxu0 0.0
      %1937 = vmatpush1.msra.mxu0 %v1914
      %1938 = vmatprep.subr.mxu0 0.0
      %1939 = vmatpush1.msra.mxu0 %v1915
      %1940 = vmatprep.subr.mxu0 0.0
      %1941 = vmatpush1.msra.mxu0 %v1916
      %1942 = vmatprep.subr.mxu0 0.0
      %1943 = vmatpush1.msra.mxu0 0.0
      %1944 = vmatprep.subr.mxu0 0.0
      %1945 = vmatpush1.msra.mxu0 0.0
      %1946 = vmatprep.subr.mxu0 0.0
      %1947 = vmatpush1.msra.mxu0 0.0
      %1948 = vmatprep.subr.mxu0 0.0
      %1949 = vmatpush1.msra.mxu0 0.0
      %1950 = vmatprep.subr.mxu0 0.0
      %1951 = vmatpush1.msra.mxu0 0.0
      %1952 = vmatprep.subr.mxu0 0.0
      %1953 = vmatpush1.msra.mxu0 0.0
      %1954 = vmatprep.subr.mxu0 0.0
      %1955 = vmatpush1.msra.mxu0 0.0
      %1956 = vmatprep.subr.mxu0 0.0
      %1957 = vmatpush1.msra.mxu0 0.0
      %1958 = vmatprep.subr.mxu0 0.0
      %1959 = vmatpush1.msra.mxu0 0.0
      %1960 = vmatprep.subr.mxu0 0.0
      %1961 = vmatpush1.msra.mxu0 0.0
      %1962 = vmatprep.subr.mxu0 0.0
      %1963 = vmatpush1.msra.mxu0 0.0
      %1964 = vmatprep.subr.mxu0 0.0
      %1965 = vmatpush1.msra.mxu0 0.0
      %1966 = vmatprep.subr.mxu0 0.0
      %1967 = vmatpush1.msra.mxu0 0.0
      %1968 = vmatprep.subr.mxu0 0.0
      %1969 = vmatpush1.msra.mxu0 0.0
      %1970 = vmatprep.subr.mxu0 0.0
      %1971 = vmatpush1.msra.mxu0 0.0
      %1972 = vmatprep.subr.mxu0 0.0
      %1973 = vmatpush1.msra.mxu0 0.0
      %1974 = vmatprep.subr.mxu0 0.0
      %1975 = vmatpush1.msra.mxu0 0.0
      %1976 = vmatprep.subr.mxu0 0.0
      %1977 = vmatpush1.msra.mxu0 0.0
      %1978 = vmatprep.subr.mxu0 0.0
      %1979 = vmatpush1.msra.mxu0 0.0
      %1980 = vmatprep.subr.mxu0 0.0
      %1981 = vmatpush1.msra.mxu0 0.0
      %1982 = vmatprep.subr.mxu0 0.0
      %1983 = vmatpush1.msra.mxu0 0.0
      %1984 = vmatprep.subr.mxu0 0.0
      %1985 = vmatpush1.msra.mxu0 0.0
      %1986 = vmatprep.subr.mxu0 0.0
      %1987 = vmatpush1.msra.mxu0 0.0
      %1988 = vmatprep.subr.mxu0 0.0
      %1989 = vmatpush1.msra.mxu0 0.0
      %1990 = vmatprep.subr.mxu0 0.0
      %1991 = vmatpush1.msra.mxu0 0.0
      %1992 = vmatprep.subr.mxu0 0.0
      %1993 = vmatpush1.msra.mxu0 0.0
      %1994 = vmatprep.subr.mxu0 0.0
      %1995 = vmatpush1.msra.mxu0 0.0
      %1996 = vmatprep.subr.mxu0 0.0
      %1997 = vmatpush1.msra.mxu0 0.0
      %1998 = vmatprep.mubr.f32.mxu0 0.0
      %1999 = vmatmul.mubr.f32.gmra.mrb[0].mxu0 %v1923
      %v2000 = vpop.f32.mrb[0].mxu0
      %v2001 = vadd.f32 0.0, %v2000
      %v2002 = vpop.f32.mrb[0].mxu0
      %2003 = vmatprep.mubr.f32.mxu0 0.0
      %2004 = vmatmul.mubr.f32.gmra.mrb[0].mxu0 %v1926
      %v2005 = vpop.f32.mrb[0].mxu0
      %v2006 = vadd.f32 0.0, %v2005
      %v2007 = vpop.f32.mrb[0].mxu0
      %2008 = vmatprep.mubr.f32.mxu0 0.0
      %2009 = vmatmul.mubr.f32.gmra.mrb[0].mxu0 %v1929
      %v2010 = vpop.f32.mrb[0].mxu0
      %v2011 = vadd.f32 0.0, %v2010
      %v2012 = vpop.f32.mrb[0].mxu0
      %2013 = vmatprep.mubr.f32.mxu0 0.0
      %2014 = vmatmul.mubr.f32.gmra.mrb[0].mxu0 %v1932
      %v2015 = vpop.f32.mrb[0].mxu0
      %v2016 = vadd.f32 0.0, %v2015
      %v2017 = vpop.f32.mrb[0].mxu0
      %2018 = vdwg.mxu0
      %v2019 = vadd.f32 %v1885, %v2001
      %v2020 = vadd.f32 %v1886, %v2006
      %v2021 = vadd.f32 %v1887, %v2011
      %v2022 = vadd.f32 %v1888, %v2016
      %2023 = vrot.lane.b32.xlu0 %v1380, 116
      %v2024 = vpop.permute.xlu0 %2023
      %2025 = vrot.lane.b32.xlu0 %v1381, 116
      %v2026 = vpop.permute.xlu0 %2025
      %2027 = vrot.lane.b32.xlu0 %v1382, 116
      %v2028 = vpop.permute.xlu0 %2027
      %2029 = vrot.lane.b32.xlu0 %v1383, 116
      %v2030 = vpop.permute.xlu0 %2029
      %2035 = vrot.lane.b32.xlu0 %v1380, 88
      %v2036 = vpop.permute.xlu0 %2035
      %2037 = vrot.lane.b32.xlu0 %v1381, 88
      %v2038 = vpop.permute.xlu0 %2037
      %2039 = vrot.lane.b32.xlu0 %v1382, 88
      %v2040 = vpop.permute.xlu0 %2039
      %2041 = vrot.lane.b32.xlu0 %v1383, 88
      %v2042 = vpop.permute.xlu0 %2041
      %vm2047 = vcmask 719872
      %v2048 = vsel %vm2047, %v2024, %v2036
      %v2049 = vsel %vm2047, %v2026, %v2038
      %v2050 = vsel %vm2047, %v2028, %v2040
      %v2051 = vsel %vm2047, %v2030, %v2042
      %s2052 = scalar_lea.vmem %s3, 160
      %v2053 = vld [vmem:[%s2052] sm:$0xff]
      %v2054 = vld [vmem:[%s2052 + $0x8] sm:$0xff]
      %v2055 = vld [vmem:[%s2052 + $0x10] sm:$0xff]
      %v2056 = vld [vmem:[%s2052 + $0x18] sm:$0xff]
      %v2058 = vsel %vm1425, %v2053, 0
      %v2061 = vsel %vm1425, %v2054, 0
      %v2064 = vsel %vm1425, %v2055, 0
      %v2067 = vsel %vm1425, %v2056, 0
      %2069 = vmatprep.subr.mxu0 0.0
      %2070 = vmatpush1.msra.mxu0 %v2048
      %2071 = vmatprep.subr.mxu0 0.0
      %2072 = vmatpush1.msra.mxu0 %v2049
      %2073 = vmatprep.subr.mxu0 0.0
      %2074 = vmatpush1.msra.mxu0 %v2050
      %2075 = vmatprep.subr.mxu0 0.0
      %2076 = vmatpush1.msra.mxu0 %v2051
      %2077 = vmatprep.subr.mxu0 0.0
      %2078 = vmatpush1.msra.mxu0 0.0
      %2079 = vmatprep.subr.mxu0 0.0
      %2080 = vmatpush1.msra.mxu0 0.0
      %2081 = vmatprep.subr.mxu0 0.0
      %2082 = vmatpush1.msra.mxu0 0.0
      %2083 = vmatprep.subr.mxu0 0.0
      %2084 = vmatpush1.msra.mxu0 0.0
      %2085 = vmatprep.subr.mxu0 0.0
      %2086 = vmatpush1.msra.mxu0 0.0
      %2087 = vmatprep.subr.mxu0 0.0
      %2088 = vmatpush1.msra.mxu0 0.0
      %2089 = vmatprep.subr.mxu0 0.0
      %2090 = vmatpush1.msra.mxu0 0.0
      %2091 = vmatprep.subr.mxu0 0.0
      %2092 = vmatpush1.msra.mxu0 0.0
      %2093 = vmatprep.subr.mxu0 0.0
      %2094 = vmatpush1.msra.mxu0 0.0
      %2095 = vmatprep.subr.mxu0 0.0
      %2096 = vmatpush1.msra.mxu0 0.0
      %2097 = vmatprep.subr.mxu0 0.0
      %2098 = vmatpush1.msra.mxu0 0.0
      %2099 = vmatprep.subr.mxu0 0.0
      %2100 = vmatpush1.msra.mxu0 0.0
      %2101 = vmatprep.subr.mxu0 0.0
      %2102 = vmatpush1.msra.mxu0 0.0
      %2103 = vmatprep.subr.mxu0 0.0
      %2104 = vmatpush1.msra.mxu0 0.0
      %2105 = vmatprep.subr.mxu0 0.0
      %2106 = vmatpush1.msra.mxu0 0.0
      %2107 = vmatprep.subr.mxu0 0.0
      %2108 = vmatpush1.msra.mxu0 0.0
      %2109 = vmatprep.subr.mxu0 0.0
      %2110 = vmatpush1.msra.mxu0 0.0
      %2111 = vmatprep.subr.mxu0 0.0
      %2112 = vmatpush1.msra.mxu0 0.0
      %2113 = vmatprep.subr.mxu0 0.0
      %2114 = vmatpush1.msra.mxu0 0.0
      %2115 = vmatprep.subr.mxu0 0.0
      %2116 = vmatpush1.msra.mxu0 0.0
      %2117 = vmatprep.subr.mxu0 0.0
      %2118 = vmatpush1.msra.mxu0 0.0
      %2119 = vmatprep.subr.mxu0 0.0
      %2120 = vmatpush1.msra.mxu0 0.0
      %2121 = vmatprep.subr.mxu0 0.0
      %2122 = vmatpush1.msra.mxu0 0.0
      %2123 = vmatprep.subr.mxu0 0.0
      %2124 = vmatpush1.msra.mxu0 0.0
      %2125 = vmatprep.subr.mxu0 0.0
      %2126 = vmatpush1.msra.mxu0 0.0
      %2127 = vmatprep.subr.mxu0 0.0
      %2128 = vmatpush1.msra.mxu0 0.0
      %2129 = vmatprep.subr.mxu0 0.0
      %2130 = vmatpush1.msra.mxu0 0.0
      %2131 = vmatprep.subr.mxu0 0.0
      %2132 = vmatpush1.msra.mxu0 0.0
      %2133 = vmatprep.mubr.f32.mxu0 0.0
      %2134 = vmatmul.mubr.f32.gmra.mrb[0].mxu0 %v2058
      %v2135 = vpop.f32.mrb[0].mxu0
      %v2136 = vadd.f32 0.0, %v2135
      %v2137 = vpop.f32.mrb[0].mxu0
      %2138 = vmatprep.mubr.f32.mxu0 0.0
      %2139 = vmatmul.mubr.f32.gmra.mrb[0].mxu0 %v2061
      %v2140 = vpop.f32.mrb[0].mxu0
      %v2141 = vadd.f32 0.0, %v2140
      %v2142 = vpop.f32.mrb[0].mxu0
      %2143 = vmatprep.mubr.f32.mxu0 0.0
      %2144 = vmatmul.mubr.f32.gmra.mrb[0].mxu0 %v2064
      %v2145 = vpop.f32.mrb[0].mxu0
      %v2146 = vadd.f32 0.0, %v2145
      %v2147 = vpop.f32.mrb[0].mxu0
      %2148 = vmatprep.mubr.f32.mxu0 0.0
      %2149 = vmatmul.mubr.f32.gmra.mrb[0].mxu0 %v2067
      %v2150 = vpop.f32.mrb[0].mxu0
      %v2151 = vadd.f32 0.0, %v2150
      %v2152 = vpop.f32.mrb[0].mxu0
      %2153 = vdwg.mxu0
      %v2154 = vadd.f32 %v2019, %v2136
      %v2155 = vadd.f32 %v2020, %v2141
      %v2156 = vadd.f32 %v2021, %v2146
      %v2157 = vadd.f32 %v2022, %v2151
      %2158 = vrot.lane.b32.xlu0 %v1380, 108
      %v2159 = vpop.permute.xlu0 %2158
      %2160 = vrot.lane.b32.xlu0 %v1381, 108
      %v2161 = vpop.permute.xlu0 %2160
      %2162 = vrot.lane.b32.xlu0 %v1382, 108
      %v2163 = vpop.permute.xlu0 %2162
      %2164 = vrot.lane.b32.xlu0 %v1383, 108
      %v2165 = vpop.permute.xlu0 %2164
      %2170 = vrot.lane.b32.xlu0 %v1380, 80
      %v2171 = vpop.permute.xlu0 %2170
      %2172 = vrot.lane.b32.xlu0 %v1381, 80
      %v2173 = vpop.permute.xlu0 %2172
      %2174 = vrot.lane.b32.xlu0 %v1382, 80
      %v2175 = vpop.permute.xlu0 %2174
      %2176 = vrot.lane.b32.xlu0 %v1383, 80
      %v2177 = vpop.permute.xlu0 %2176
      %vm2182 = vcmask 654336
      %v2183 = vsel %vm2182, %v2159, %v2171
      %v2184 = vsel %vm2182, %v2161, %v2173
      %v2185 = vsel %vm2182, %v2163, %v2175
      %v2186 = vsel %vm2182, %v2165, %v2177
      %s2187 = scalar_lea.vmem %s3, 192
      %v2188 = vld [vmem:[%s2187] sm:$0xff]
      %v2189 = vld [vmem:[%s2187 + $0x8] sm:$0xff]
      %v2190 = vld [vmem:[%s2187 + $0x10] sm:$0xff]
      %v2191 = vld [vmem:[%s2187 + $0x18] sm:$0xff]
      %v2193 = vsel %vm1425, %v2188, 0
      %v2196 = vsel %vm1425, %v2189, 0
      %v2199 = vsel %vm1425, %v2190, 0
      %v2202 = vsel %vm1425, %v2191, 0
      %2204 = vmatprep.subr.mxu0 0.0
      %2205 = vmatpush1.msra.mxu0 %v2183
      %2206 = vmatprep.subr.mxu0 0.0
      %2207 = vmatpush1.msra.mxu0 %v2184
      %2208 = vmatprep.subr.mxu0 0.0
      %2209 = vmatpush1.msra.mxu0 %v2185
      %2210 = vmatprep.subr.mxu0 0.0
      %2211 = vmatpush1.msra.mxu0 %v2186
      %2212 = vmatprep.subr.mxu0 0.0
      %2213 = vmatpush1.msra.mxu0 0.0
      %2214 = vmatprep.subr.mxu0 0.0
      %2215 = vmatpush1.msra.mxu0 0.0
      %2216 = vmatprep.subr.mxu0 0.0
      %2217 = vmatpush1.msra.mxu0 0.0
      %2218 = vmatprep.subr.mxu0 0.0
      %2219 = vmatpush1.msra.mxu0 0.0
      %2220 = vmatprep.subr.mxu0 0.0
      %2221 = vmatpush1.msra.mxu0 0.0
      %2222 = vmatprep.subr.mxu0 0.0
      %2223 = vmatpush1.msra.mxu0 0.0
      %2224 = vmatprep.subr.mxu0 0.0
      %2225 = vmatpush1.msra.mxu0 0.0
      %2226 = vmatprep.subr.mxu0 0.0
      %2227 = vmatpush1.msra.mxu0 0.0
      %2228 = vmatprep.subr.mxu0 0.0
      %2229 = vmatpush1.msra.mxu0 0.0
      %2230 = vmatprep.subr.mxu0 0.0
      %2231 = vmatpush1.msra.mxu0 0.0
      %2232 = vmatprep.subr.mxu0 0.0
      %2233 = vmatpush1.msra.mxu0 0.0
      %2234 = vmatprep.subr.mxu0 0.0
      %2235 = vmatpush1.msra.mxu0 0.0
      %2236 = vmatprep.subr.mxu0 0.0
      %2237 = vmatpush1.msra.mxu0 0.0
      %2238 = vmatprep.subr.mxu0 0.0
      %2239 = vmatpush1.msra.mxu0 0.0
      %2240 = vmatprep.subr.mxu0 0.0
      %2241 = vmatpush1.msra.mxu0 0.0
      %2242 = vmatprep.subr.mxu0 0.0
      %2243 = vmatpush1.msra.mxu0 0.0
      %2244 = vmatprep.subr.mxu0 0.0
      %2245 = vmatpush1.msra.mxu0 0.0
      %2246 = vmatprep.subr.mxu0 0.0
      %2247 = vmatpush1.msra.mxu0 0.0
      %2248 = vmatprep.subr.mxu0 0.0
      %2249 = vmatpush1.msra.mxu0 0.0
      %2250 = vmatprep.subr.mxu0 0.0
      %2251 = vmatpush1.msra.mxu0 0.0
      %2252 = vmatprep.subr.mxu0 0.0
      %2253 = vmatpush1.msra.mxu0 0.0
      %2254 = vmatprep.subr.mxu0 0.0
      %2255 = vmatpush1.msra.mxu0 0.0
      %2256 = vmatprep.subr.mxu0 0.0
      %2257 = vmatpush1.msra.mxu0 0.0
      %2258 = vmatprep.subr.mxu0 0.0
      %2259 = vmatpush1.msra.mxu0 0.0
      %2260 = vmatprep.subr.mxu0 0.0
      %2261 = vmatpush1.msra.mxu0 0.0
      %2262 = vmatprep.subr.mxu0 0.0
      %2263 = vmatpush1.msra.mxu0 0.0
      %2264 = vmatprep.subr.mxu0 0.0
      %2265 = vmatpush1.msra.mxu0 0.0
      %2266 = vmatprep.subr.mxu0 0.0
      %2267 = vmatpush1.msra.mxu0 0.0
      %2268 = vmatprep.mubr.f32.mxu0 0.0
      %2269 = vmatmul.mubr.f32.gmra.mrb[0].mxu0 %v2193
      %v2270 = vpop.f32.mrb[0].mxu0
      %v2271 = vadd.f32 0.0, %v2270
      %v2272 = vpop.f32.mrb[0].mxu0
      %2273 = vmatprep.mubr.f32.mxu0 0.0
      %2274 = vmatmul.mubr.f32.gmra.mrb[0].mxu0 %v2196
      %v2275 = vpop.f32.mrb[0].mxu0
      %v2276 = vadd.f32 0.0, %v2275
      %v2277 = vpop.f32.mrb[0].mxu0
      %2278 = vmatprep.mubr.f32.mxu0 0.0
      %2279 = vmatmul.mubr.f32.gmra.mrb[0].mxu0 %v2199
      %v2280 = vpop.f32.mrb[0].mxu0
      %v2281 = vadd.f32 0.0, %v2280
      %v2282 = vpop.f32.mrb[0].mxu0
      %2283 = vmatprep.mubr.f32.mxu0 0.0
      %2284 = vmatmul.mubr.f32.gmra.mrb[0].mxu0 %v2202
      %v2285 = vpop.f32.mrb[0].mxu0
      %v2286 = vadd.f32 0.0, %v2285
      %v2287 = vpop.f32.mrb[0].mxu0
      %2288 = vdwg.mxu0
      %v2289 = vadd.f32 %v2154, %v2271
      %v2290 = vadd.f32 %v2155, %v2276
      %v2291 = vadd.f32 %v2156, %v2281
      %v2292 = vadd.f32 %v2157, %v2286
      %2293 = vrot.lane.b32.xlu0 %v1380, 107
      %v2294 = vpop.permute.xlu0 %2293
      %2295 = vrot.lane.b32.xlu0 %v1381, 107
      %v2296 = vpop.permute.xlu0 %2295
      %2297 = vrot.lane.b32.xlu0 %v1382, 107
      %v2298 = vpop.permute.xlu0 %2297
      %2299 = vrot.lane.b32.xlu0 %v1383, 107
      %v2300 = vpop.permute.xlu0 %2299
      %2305 = vrot.lane.b32.xlu0 %v1380, 79
      %v2306 = vpop.permute.xlu0 %2305
      %2307 = vrot.lane.b32.xlu0 %v1381, 79
      %v2308 = vpop.permute.xlu0 %2307
      %2309 = vrot.lane.b32.xlu0 %v1382, 79
      %v2310 = vpop.permute.xlu0 %2309
      %2311 = vrot.lane.b32.xlu0 %v1383, 79
      %v2312 = vpop.permute.xlu0 %2311
      %vm2317 = vcmask 646144
      %v2318 = vsel %vm2317, %v2294, %v2306
      %v2319 = vsel %vm2317, %v2296, %v2308
      %v2320 = vsel %vm2317, %v2298, %v2310
      %v2321 = vsel %vm2317, %v2300, %v2312
      %s2322 = scalar_lea.vmem %s3, 224
      %v2323 = vld [vmem:[%s2322] sm:$0xff]
      %v2324 = vld [vmem:[%s2322 + $0x8] sm:$0xff]
      %v2325 = vld [vmem:[%s2322 + $0x10] sm:$0xff]
      %v2326 = vld [vmem:[%s2322 + $0x18] sm:$0xff]
      %v2328 = vsel %vm1425, %v2323, 0
      %v2331 = vsel %vm1425, %v2324, 0
      %v2334 = vsel %vm1425, %v2325, 0
      %v2337 = vsel %vm1425, %v2326, 0
      %2339 = vmatprep.subr.mxu0 0.0
      %2340 = vmatpush1.msra.mxu0 %v2318
      %2341 = vmatprep.subr.mxu0 0.0
      %2342 = vmatpush1.msra.mxu0 %v2319
      %2343 = vmatprep.subr.mxu0 0.0
      %2344 = vmatpush1.msra.mxu0 %v2320
      %2345 = vmatprep.subr.mxu0 0.0
      %2346 = vmatpush1.msra.mxu0 %v2321
      %2347 = vmatprep.subr.mxu0 0.0
      %2348 = vmatpush1.msra.mxu0 0.0
      %2349 = vmatprep.subr.mxu0 0.0
      %2350 = vmatpush1.msra.mxu0 0.0
      %2351 = vmatprep.subr.mxu0 0.0
      %2352 = vmatpush1.msra.mxu0 0.0
      %2353 = vmatprep.subr.mxu0 0.0
      %2354 = vmatpush1.msra.mxu0 0.0
      %2355 = vmatprep.subr.mxu0 0.0
      %2356 = vmatpush1.msra.mxu0 0.0
      %2357 = vmatprep.subr.mxu0 0.0
      %2358 = vmatpush1.msra.mxu0 0.0
      %2359 = vmatprep.subr.mxu0 0.0
      %2360 = vmatpush1.msra.mxu0 0.0
      %2361 = vmatprep.subr.mxu0 0.0
      %2362 = vmatpush1.msra.mxu0 0.0
      %2363 = vmatprep.subr.mxu0 0.0
      %2364 = vmatpush1.msra.mxu0 0.0
      %2365 = vmatprep.subr.mxu0 0.0
      %2366 = vmatpush1.msra.mxu0 0.0
      %2367 = vmatprep.subr.mxu0 0.0
      %2368 = vmatpush1.msra.mxu0 0.0
      %2369 = vmatprep.subr.mxu0 0.0
      %2370 = vmatpush1.msra.mxu0 0.0
      %2371 = vmatprep.subr.mxu0 0.0
      %2372 = vmatpush1.msra.mxu0 0.0
      %2373 = vmatprep.subr.mxu0 0.0
      %2374 = vmatpush1.msra.mxu0 0.0
      %2375 = vmatprep.subr.mxu0 0.0
      %2376 = vmatpush1.msra.mxu0 0.0
      %2377 = vmatprep.subr.mxu0 0.0
      %2378 = vmatpush1.msra.mxu0 0.0
      %2379 = vmatprep.subr.mxu0 0.0
      %2380 = vmatpush1.msra.mxu0 0.0
      %2381 = vmatprep.subr.mxu0 0.0
      %2382 = vmatpush1.msra.mxu0 0.0
      %2383 = vmatprep.subr.mxu0 0.0
      %2384 = vmatpush1.msra.mxu0 0.0
      %2385 = vmatprep.subr.mxu0 0.0
      %2386 = vmatpush1.msra.mxu0 0.0
      %2387 = vmatprep.subr.mxu0 0.0
      %2388 = vmatpush1.msra.mxu0 0.0
      %2389 = vmatprep.subr.mxu0 0.0
      %2390 = vmatpush1.msra.mxu0 0.0
      %2391 = vmatprep.subr.mxu0 0.0
      %2392 = vmatpush1.msra.mxu0 0.0
      %2393 = vmatprep.subr.mxu0 0.0
      %2394 = vmatpush1.msra.mxu0 0.0
      %2395 = vmatprep.subr.mxu0 0.0
      %2396 = vmatpush1.msra.mxu0 0.0
      %2397 = vmatprep.subr.mxu0 0.0
      %2398 = vmatpush1.msra.mxu0 0.0
      %2399 = vmatprep.subr.mxu0 0.0
      %2400 = vmatpush1.msra.mxu0 0.0
      %2401 = vmatprep.subr.mxu0 0.0
      %2402 = vmatpush1.msra.mxu0 0.0
      %2403 = vmatprep.mubr.f32.mxu0 0.0
      %2404 = vmatmul.mubr.f32.gmra.mrb[0].mxu0 %v2328
      %v2405 = vpop.f32.mrb[0].mxu0
      %v2406 = vadd.f32 0.0, %v2405
      %v2407 = vpop.f32.mrb[0].mxu0
      %2408 = vmatprep.mubr.f32.mxu0 0.0
      %2409 = vmatmul.mubr.f32.gmra.mrb[0].mxu0 %v2331
      %v2410 = vpop.f32.mrb[0].mxu0
      %v2411 = vadd.f32 0.0, %v2410
      %v2412 = vpop.f32.mrb[0].mxu0
      %2413 = vmatprep.mubr.f32.mxu0 0.0
      %2414 = vmatmul.mubr.f32.gmra.mrb[0].mxu0 %v2334
      %v2415 = vpop.f32.mrb[0].mxu0
      %v2416 = vadd.f32 0.0, %v2415
      %v2417 = vpop.f32.mrb[0].mxu0
      %2418 = vmatprep.mubr.f32.mxu0 0.0
      %2419 = vmatmul.mubr.f32.gmra.mrb[0].mxu0 %v2337
      %v2420 = vpop.f32.mrb[0].mxu0
      %v2421 = vadd.f32 0.0, %v2420
      %v2422 = vpop.f32.mrb[0].mxu0
      %2423 = vdwg.mxu0
      %v2424 = vadd.f32 %v2289, %v2406
      %v2425 = vadd.f32 %v2290, %v2411
      %v2426 = vadd.f32 %v2291, %v2416
      %v2427 = vadd.f32 %v2292, %v2421
      %2428 = vrot.lane.b32.xlu0 %v1380, 106
      %v2429 = vpop.permute.xlu0 %2428
      %2430 = vrot.lane.b32.xlu0 %v1381, 106
      %v2431 = vpop.permute.xlu0 %2430
      %2432 = vrot.lane.b32.xlu0 %v1382, 106
      %v2433 = vpop.permute.xlu0 %2432
      %2434 = vrot.lane.b32.xlu0 %v1383, 106
      %v2435 = vpop.permute.xlu0 %2434
      %2440 = vrot.lane.b32.xlu0 %v1380, 78
      %v2441 = vpop.permute.xlu0 %2440
      %2442 = vrot.lane.b32.xlu0 %v1381, 78
      %v2443 = vpop.permute.xlu0 %2442
      %2444 = vrot.lane.b32.xlu0 %v1382, 78
      %v2445 = vpop.permute.xlu0 %2444
      %2446 = vrot.lane.b32.xlu0 %v1383, 78
      %v2447 = vpop.permute.xlu0 %2446
      %vm2452 = vcmask 637952
      %v2453 = vsel %vm2452, %v2429, %v2441
      %v2454 = vsel %vm2452, %v2431, %v2443
      %v2455 = vsel %vm2452, %v2433, %v2445
      %v2456 = vsel %vm2452, %v2435, %v2447
      %s2457 = scalar_lea.vmem %s3, 256
      %v2458 = vld [vmem:[%s2457] sm:$0xff]
      %v2459 = vld [vmem:[%s2457 + $0x8] sm:$0xff]
      %v2460 = vld [vmem:[%s2457 + $0x10] sm:$0xff]
      %v2461 = vld [vmem:[%s2457 + $0x18] sm:$0xff]
      %v2463 = vsel %vm1425, %v2458, 0
      %v2466 = vsel %vm1425, %v2459, 0
      %v2469 = vsel %vm1425, %v2460, 0
      %v2472 = vsel %vm1425, %v2461, 0
      %2474 = vmatprep.subr.mxu0 0.0
      %2475 = vmatpush1.msra.mxu0 %v2453
      %2476 = vmatprep.subr.mxu0 0.0
      %2477 = vmatpush1.msra.mxu0 %v2454
      %2478 = vmatprep.subr.mxu0 0.0
      %2479 = vmatpush1.msra.mxu0 %v2455
      %2480 = vmatprep.subr.mxu0 0.0
      %2481 = vmatpush1.msra.mxu0 %v2456
      %2482 = vmatprep.subr.mxu0 0.0
      %2483 = vmatpush1.msra.mxu0 0.0
      %2484 = vmatprep.subr.mxu0 0.0
      %2485 = vmatpush1.msra.mxu0 0.0
      %2486 = vmatprep.subr.mxu0 0.0
      %2487 = vmatpush1.msra.mxu0 0.0
      %2488 = vmatprep.subr.mxu0 0.0
      %2489 = vmatpush1.msra.mxu0 0.0
      %2490 = vmatprep.subr.mxu0 0.0
      %2491 = vmatpush1.msra.mxu0 0.0
      %2492 = vmatprep.subr.mxu0 0.0
      %2493 = vmatpush1.msra.mxu0 0.0
      %2494 = vmatprep.subr.mxu0 0.0
      %2495 = vmatpush1.msra.mxu0 0.0
      %2496 = vmatprep.subr.mxu0 0.0
      %2497 = vmatpush1.msra.mxu0 0.0
      %2498 = vmatprep.subr.mxu0 0.0
      %2499 = vmatpush1.msra.mxu0 0.0
      %2500 = vmatprep.subr.mxu0 0.0
      %2501 = vmatpush1.msra.mxu0 0.0
      %2502 = vmatprep.subr.mxu0 0.0
      %2503 = vmatpush1.msra.mxu0 0.0
      %2504 = vmatprep.subr.mxu0 0.0
      %2505 = vmatpush1.msra.mxu0 0.0
      %2506 = vmatprep.subr.mxu0 0.0
      %2507 = vmatpush1.msra.mxu0 0.0
      %2508 = vmatprep.subr.mxu0 0.0
      %2509 = vmatpush1.msra.mxu0 0.0
      %2510 = vmatprep.subr.mxu0 0.0
      %2511 = vmatpush1.msra.mxu0 0.0
      %2512 = vmatprep.subr.mxu0 0.0
      %2513 = vmatpush1.msra.mxu0 0.0
      %2514 = vmatprep.subr.mxu0 0.0
      %2515 = vmatpush1.msra.mxu0 0.0
      %2516 = vmatprep.subr.mxu0 0.0
      %2517 = vmatpush1.msra.mxu0 0.0
      %2518 = vmatprep.subr.mxu0 0.0
      %2519 = vmatpush1.msra.mxu0 0.0
      %2520 = vmatprep.subr.mxu0 0.0
      %2521 = vmatpush1.msra.mxu0 0.0
      %2522 = vmatprep.subr.mxu0 0.0
      %2523 = vmatpush1.msra.mxu0 0.0
      %2524 = vmatprep.subr.mxu0 0.0
      %2525 = vmatpush1.msra.mxu0 0.0
      %2526 = vmatprep.subr.mxu0 0.0
      %2527 = vmatpush1.msra.mxu0 0.0
      %2528 = vmatprep.subr.mxu0 0.0
      %2529 = vmatpush1.msra.mxu0 0.0
      %2530 = vmatprep.subr.mxu0 0.0
      %2531 = vmatpush1.msra.mxu0 0.0
      %2532 = vmatprep.subr.mxu0 0.0
      %2533 = vmatpush1.msra.mxu0 0.0
      %2534 = vmatprep.subr.mxu0 0.0
      %2535 = vmatpush1.msra.mxu0 0.0
      %2536 = vmatprep.subr.mxu0 0.0
      %2537 = vmatpush1.msra.mxu0 0.0
      %2538 = vmatprep.mubr.f32.mxu0 0.0
      %2539 = vmatmul.mubr.f32.gmra.mrb[0].mxu0 %v2463
      %v2540 = vpop.f32.mrb[0].mxu0
      %v2541 = vadd.f32 0.0, %v2540
      %v2542 = vpop.f32.mrb[0].mxu0
      %2543 = vmatprep.mubr.f32.mxu0 0.0
      %2544 = vmatmul.mubr.f32.gmra.mrb[0].mxu0 %v2466
      %v2545 = vpop.f32.mrb[0].mxu0
      %v2546 = vadd.f32 0.0, %v2545
      %v2547 = vpop.f32.mrb[0].mxu0
      %2548 = vmatprep.mubr.f32.mxu0 0.0
      %2549 = vmatmul.mubr.f32.gmra.mrb[0].mxu0 %v2469
      %v2550 = vpop.f32.mrb[0].mxu0
      %v2551 = vadd.f32 0.0, %v2550
      %v2552 = vpop.f32.mrb[0].mxu0
      %2553 = vmatprep.mubr.f32.mxu0 0.0
      %2554 = vmatmul.mubr.f32.gmra.mrb[0].mxu0 %v2472
      %v2555 = vpop.f32.mrb[0].mxu0
      %v2556 = vadd.f32 0.0, %v2555
      %v2557 = vpop.f32.mrb[0].mxu0
      %2558 = vdwg.mxu0
      %v2559 = vadd.f32 %v2424, %v2541
      %v2560 = vadd.f32 %v2425, %v2546
      %v2561 = vadd.f32 %v2426, %v2551
      %v2562 = vadd.f32 %v2427, %v2556
      %v2563 = vld [vmem:[%s4] sm:$0xff]
      %v2564 = vld [vmem:[%s4 + $0x8] sm:$0xff]
      %v2565 = vld [vmem:[%s4 + $0x10] sm:$0xff]
      %v2566 = vld [vmem:[%s4 + $0x18] sm:$0xff]
      %2568 = vset.pattern.permute.xlu0 0
      %2569 = vperm.xlu0 %2568, %v2563
      %v2570 = vpop.permute.xlu0 %2569
      %2573 = vset.pattern.permute.xlu0 0
      %2574 = vperm.xlu0 %2573, %v2564
      %v2575 = vpop.permute.xlu0 %2574
      %2578 = vset.pattern.permute.xlu0 0
      %2579 = vperm.xlu0 %2578, %v2565
      %v2580 = vpop.permute.xlu0 %2579
      %2583 = vset.pattern.permute.xlu0 0
      %2584 = vperm.xlu0 %2583, %v2566
      %v2585 = vpop.permute.xlu0 %2584
      %v2587 = vadd.f32 %v2559, %v2570
      %v2588 = vadd.f32 %v2560, %v2575
      %v2589 = vadd.f32 %v2561, %v2580
      %v2590 = vadd.f32 %v2562, %v2585
      %v2591 = vmax.f32 %v2587, 0.0
      %v2592 = vmax.f32 %v2588, 0.0
      %v2593 = vmax.f32 %v2589, 0.0
      %v2594 = vmax.f32 %v2590, 0.0
      %v2595 = vld [vmem:[%s5] sm:$0xff]
      %v2596 = vld [vmem:[%s5 + $0x8] sm:$0xff]
      %v2597 = vld [vmem:[%s5 + $0x10] sm:$0xff]
      %v2598 = vld [vmem:[%s5 + $0x18] sm:$0xff]
      %2603 = vrot.lane.b32.xlu0 %v2591, 127
      %v2604 = vpop.permute.xlu0 %2603
      %2605 = vrot.lane.b32.xlu0 %v2592, 127
      %v2606 = vpop.permute.xlu0 %2605
      %2607 = vrot.lane.b32.xlu0 %v2593, 127
      %v2608 = vpop.permute.xlu0 %2607
      %2609 = vrot.lane.b32.xlu0 %v2594, 127
      %v2610 = vpop.permute.xlu0 %2609
      %2615 = vrot.lane.b32.xlu0 %v2591, 99
      %v2616 = vpop.permute.xlu0 %2615
      %2617 = vrot.lane.b32.xlu0 %v2592, 99
      %v2618 = vpop.permute.xlu0 %2617
      %2619 = vrot.lane.b32.xlu0 %v2593, 99
      %v2620 = vpop.permute.xlu0 %2619
      %2621 = vrot.lane.b32.xlu0 %v2594, 99
      %v2622 = vpop.permute.xlu0 %2621
      %v2627 = vsel %vm553, %v2604, %v2616
      %v2628 = vsel %vm553, %v2606, %v2618
      %v2629 = vsel %vm553, %v2608, %v2620
      %v2630 = vsel %vm553, %v2610, %v2622
      %s2631 = scalar_lea.vmem %s5, 32
      %v2632 = vld [vmem:[%s2631] sm:$0xff]
      %v2633 = vld [vmem:[%s2631 + $0x8] sm:$0xff]
      %v2634 = vld [vmem:[%s2631 + $0x10] sm:$0xff]
      %v2635 = vld [vmem:[%s2631 + $0x18] sm:$0xff]
      %v2637 = vsel %vm1425, %v2632, 0
      %v2640 = vsel %vm1425, %v2633, 0
      %v2643 = vsel %vm1425, %v2634, 0
      %v2646 = vsel %vm1425, %v2635, 0
      %2648 = vmatprep.subr.mxu0 0.0
      %2649 = vmatpush1.msra.mxu0 %v2627
      %2650 = vmatprep.subr.mxu0 0.0
      %2651 = vmatpush1.msra.mxu0 %v2628
      %2652 = vmatprep.subr.mxu0 0.0
      %2653 = vmatpush1.msra.mxu0 %v2629
      %2654 = vmatprep.subr.mxu0 0.0
      %2655 = vmatpush1.msra.mxu0 %v2630
      %2656 = vmatprep.subr.mxu0 0.0
      %2657 = vmatpush1.msra.mxu0 0.0
      %2658 = vmatprep.subr.mxu0 0.0
      %2659 = vmatpush1.msra.mxu0 0.0
      %2660 = vmatprep.subr.mxu0 0.0
      %2661 = vmatpush1.msra.mxu0 0.0
      %2662 = vmatprep.subr.mxu0 0.0
      %2663 = vmatpush1.msra.mxu0 0.0
      %2664 = vmatprep.subr.mxu0 0.0
      %2665 = vmatpush1.msra.mxu0 0.0
      %2666 = vmatprep.subr.mxu0 0.0
      %2667 = vmatpush1.msra.mxu0 0.0
      %2668 = vmatprep.subr.mxu0 0.0
      %2669 = vmatpush1.msra.mxu0 0.0
      %2670 = vmatprep.subr.mxu0 0.0
      %2671 = vmatpush1.msra.mxu0 0.0
      %2672 = vmatprep.subr.mxu0 0.0
      %2673 = vmatpush1.msra.mxu0 0.0
      %2674 = vmatprep.subr.mxu0 0.0
      %2675 = vmatpush1.msra.mxu0 0.0
      %2676 = vmatprep.subr.mxu0 0.0
      %2677 = vmatpush1.msra.mxu0 0.0
      %2678 = vmatprep.subr.mxu0 0.0
      %2679 = vmatpush1.msra.mxu0 0.0
      %2680 = vmatprep.subr.mxu0 0.0
      %2681 = vmatpush1.msra.mxu0 0.0
      %2682 = vmatprep.subr.mxu0 0.0
      %2683 = vmatpush1.msra.mxu0 0.0
      %2684 = vmatprep.subr.mxu0 0.0
      %2685 = vmatpush1.msra.mxu0 0.0
      %2686 = vmatprep.subr.mxu0 0.0
      %2687 = vmatpush1.msra.mxu0 0.0
      %2688 = vmatprep.subr.mxu0 0.0
      %2689 = vmatpush1.msra.mxu0 0.0
      %2690 = vmatprep.subr.mxu0 0.0
      %2691 = vmatpush1.msra.mxu0 0.0
      %2692 = vmatprep.subr.mxu0 0.0
      %2693 = vmatpush1.msra.mxu0 0.0
      %2694 = vmatprep.subr.mxu0 0.0
      %2695 = vmatpush1.msra.mxu0 0.0
      %2696 = vmatprep.subr.mxu0 0.0
      %2697 = vmatpush1.msra.mxu0 0.0
      %2698 = vmatprep.subr.mxu0 0.0
      %2699 = vmatpush1.msra.mxu0 0.0
      %2700 = vmatprep.subr.mxu0 0.0
      %2701 = vmatpush1.msra.mxu0 0.0
      %2702 = vmatprep.subr.mxu0 0.0
      %2703 = vmatpush1.msra.mxu0 0.0
      %2704 = vmatprep.subr.mxu0 0.0
      %2705 = vmatpush1.msra.mxu0 0.0
      %2706 = vmatprep.subr.mxu0 0.0
      %2707 = vmatpush1.msra.mxu0 0.0
      %2708 = vmatprep.subr.mxu0 0.0
      %2709 = vmatpush1.msra.mxu0 0.0
      %2710 = vmatprep.subr.mxu0 0.0
      %2711 = vmatpush1.msra.mxu0 0.0
      %2712 = vmatprep.mubr.f32.mxu0 0.0
      %2713 = vmatmul.mubr.f32.gmra.mrb[0].mxu0 %v2637
      %v2714 = vpop.f32.mrb[0].mxu0
      %v2715 = vadd.f32 0.0, %v2714
      %v2716 = vpop.f32.mrb[0].mxu0
      %2717 = vmatprep.mubr.f32.mxu0 0.0
      %2718 = vmatmul.mubr.f32.gmra.mrb[0].mxu0 %v2640
      %v2719 = vpop.f32.mrb[0].mxu0
      %v2720 = vadd.f32 0.0, %v2719
      %v2721 = vpop.f32.mrb[0].mxu0
      %2722 = vmatprep.mubr.f32.mxu0 0.0
      %2723 = vmatmul.mubr.f32.gmra.mrb[0].mxu0 %v2643
      %v2724 = vpop.f32.mrb[0].mxu0
      %v2725 = vadd.f32 0.0, %v2724
      %v2726 = vpop.f32.mrb[0].mxu0
      %2727 = vmatprep.mubr.f32.mxu0 0.0
      %2728 = vmatmul.mubr.f32.gmra.mrb[0].mxu0 %v2646
      %v2729 = vpop.f32.mrb[0].mxu0
      %v2730 = vadd.f32 0.0, %v2729
      %v2731 = vpop.f32.mrb[0].mxu0
      %2732 = vdwg.mxu0
      %v2734 = vsel %vm1425, %v2595, 0
      %v2737 = vsel %vm1425, %v2596, 0
      %v2740 = vsel %vm1425, %v2597, 0
      %v2743 = vsel %vm1425, %v2598, 0
      %2745 = vmatprep.subr.mxu0 0.0
      %2746 = vmatpush1.msra.mxu0 %v2591
      %2747 = vmatprep.subr.mxu0 0.0
      %2748 = vmatpush1.msra.mxu0 %v2592
      %2749 = vmatprep.subr.mxu0 0.0
      %2750 = vmatpush1.msra.mxu0 %v2593
      %2751 = vmatprep.subr.mxu0 0.0
      %2752 = vmatpush1.msra.mxu0 %v2594
      %2753 = vmatprep.subr.mxu0 0.0
      %2754 = vmatpush1.msra.mxu0 0.0
      %2755 = vmatprep.subr.mxu0 0.0
      %2756 = vmatpush1.msra.mxu0 0.0
      %2757 = vmatprep.subr.mxu0 0.0
      %2758 = vmatpush1.msra.mxu0 0.0
      %2759 = vmatprep.subr.mxu0 0.0
      %2760 = vmatpush1.msra.mxu0 0.0
      %2761 = vmatprep.subr.mxu0 0.0
      %2762 = vmatpush1.msra.mxu0 0.0
      %2763 = vmatprep.subr.mxu0 0.0
      %2764 = vmatpush1.msra.mxu0 0.0
      %2765 = vmatprep.subr.mxu0 0.0
      %2766 = vmatpush1.msra.mxu0 0.0
      %2767 = vmatprep.subr.mxu0 0.0
      %2768 = vmatpush1.msra.mxu0 0.0
      %2769 = vmatprep.subr.mxu0 0.0
      %2770 = vmatpush1.msra.mxu0 0.0
      %2771 = vmatprep.subr.mxu0 0.0
      %2772 = vmatpush1.msra.mxu0 0.0
      %2773 = vmatprep.subr.mxu0 0.0
      %2774 = vmatpush1.msra.mxu0 0.0
      %2775 = vmatprep.subr.mxu0 0.0
      %2776 = vmatpush1.msra.mxu0 0.0
      %2777 = vmatprep.subr.mxu0 0.0
      %2778 = vmatpush1.msra.mxu0 0.0
      %2779 = vmatprep.subr.mxu0 0.0
      %2780 = vmatpush1.msra.mxu0 0.0
      %2781 = vmatprep.subr.mxu0 0.0
      %2782 = vmatpush1.msra.mxu0 0.0
      %2783 = vmatprep.subr.mxu0 0.0
      %2784 = vmatpush1.msra.mxu0 0.0
      %2785 = vmatprep.subr.mxu0 0.0
      %2786 = vmatpush1.msra.mxu0 0.0
      %2787 = vmatprep.subr.mxu0 0.0
      %2788 = vmatpush1.msra.mxu0 0.0
      %2789 = vmatprep.subr.mxu0 0.0
      %2790 = vmatpush1.msra.mxu0 0.0
      %2791 = vmatprep.subr.mxu0 0.0
      %2792 = vmatpush1.msra.mxu0 0.0
      %2793 = vmatprep.subr.mxu0 0.0
      %2794 = vmatpush1.msra.mxu0 0.0
      %2795 = vmatprep.subr.mxu0 0.0
      %2796 = vmatpush1.msra.mxu0 0.0
      %2797 = vmatprep.subr.mxu0 0.0
      %2798 = vmatpush1.msra.mxu0 0.0
      %2799 = vmatprep.subr.mxu0 0.0
      %2800 = vmatpush1.msra.mxu0 0.0
      %2801 = vmatprep.subr.mxu0 0.0
      %2802 = vmatpush1.msra.mxu0 0.0
      %2803 = vmatprep.subr.mxu0 0.0
      %2804 = vmatpush1.msra.mxu0 0.0
      %2805 = vmatprep.subr.mxu0 0.0
      %2806 = vmatpush1.msra.mxu0 0.0
      %2807 = vmatprep.subr.mxu0 0.0
      %2808 = vmatpush1.msra.mxu0 0.0
      %2809 = vmatprep.mubr.f32.mxu0 0.0
      %2810 = vmatmul.mubr.f32.gmra.mrb[0].mxu0 %v2734
      %v2811 = vpop.f32.mrb[0].mxu0
      %v2812 = vadd.f32 %v2715, %v2811
      %v2813 = vpop.f32.mrb[0].mxu0
      %2814 = vmatprep.mubr.f32.mxu0 0.0
      %2815 = vmatmul.mubr.f32.gmra.mrb[0].mxu0 %v2737
      %v2816 = vpop.f32.mrb[0].mxu0
      %v2817 = vadd.f32 %v2720, %v2816
      %v2818 = vpop.f32.mrb[0].mxu0
      %2819 = vmatprep.mubr.f32.mxu0 0.0
      %2820 = vmatmul.mubr.f32.gmra.mrb[0].mxu0 %v2740
      %v2821 = vpop.f32.mrb[0].mxu0
      %v2822 = vadd.f32 %v2725, %v2821
      %v2823 = vpop.f32.mrb[0].mxu0
      %2824 = vmatprep.mubr.f32.mxu0 0.0
      %2825 = vmatmul.mubr.f32.gmra.mrb[0].mxu0 %v2743
      %v2826 = vpop.f32.mrb[0].mxu0
      %v2827 = vadd.f32 %v2730, %v2826
      %v2828 = vpop.f32.mrb[0].mxu0
      %2829 = vdwg.mxu0
      %2830 = vrot.lane.b32.xlu0 %v2591, 126
      %v2831 = vpop.permute.xlu0 %2830
      %2832 = vrot.lane.b32.xlu0 %v2592, 126
      %v2833 = vpop.permute.xlu0 %2832
      %2834 = vrot.lane.b32.xlu0 %v2593, 126
      %v2835 = vpop.permute.xlu0 %2834
      %2836 = vrot.lane.b32.xlu0 %v2594, 126
      %v2837 = vpop.permute.xlu0 %2836
      %2842 = vrot.lane.b32.xlu0 %v2591, 98
      %v2843 = vpop.permute.xlu0 %2842
      %2844 = vrot.lane.b32.xlu0 %v2592, 98
      %v2845 = vpop.permute.xlu0 %2844
      %2846 = vrot.lane.b32.xlu0 %v2593, 98
      %v2847 = vpop.permute.xlu0 %2846
      %2848 = vrot.lane.b32.xlu0 %v2594, 98
      %v2849 = vpop.permute.xlu0 %2848
      %v2854 = vsel %vm1644, %v2831, %v2843
      %v2855 = vsel %vm1644, %v2833, %v2845
      %v2856 = vsel %vm1644, %v2835, %v2847
      %v2857 = vsel %vm1644, %v2837, %v2849
      %s2858 = scalar_lea.vmem %s5, 64
      %v2859 = vld [vmem:[%s2858] sm:$0xff]
      %v2860 = vld [vmem:[%s2858 + $0x8] sm:$0xff]
      %v2861 = vld [vmem:[%s2858 + $0x10] sm:$0xff]
      %v2862 = vld [vmem:[%s2858 + $0x18] sm:$0xff]
      %v2864 = vsel %vm1425, %v2859, 0
      %v2867 = vsel %vm1425, %v2860, 0
      %v2870 = vsel %vm1425, %v2861, 0
      %v2873 = vsel %vm1425, %v2862, 0
      %2875 = vmatprep.subr.mxu0 0.0
      %2876 = vmatpush1.msra.mxu0 %v2854
      %2877 = vmatprep.subr.mxu0 0.0
      %2878 = vmatpush1.msra.mxu0 %v2855
      %2879 = vmatprep.subr.mxu0 0.0
      %2880 = vmatpush1.msra.mxu0 %v2856
      %2881 = vmatprep.subr.mxu0 0.0
      %2882 = vmatpush1.msra.mxu0 %v2857
      %2883 = vmatprep.subr.mxu0 0.0
      %2884 = vmatpush1.msra.mxu0 0.0
      %2885 = vmatprep.subr.mxu0 0.0
      %2886 = vmatpush1.msra.mxu0 0.0
      %2887 = vmatprep.subr.mxu0 0.0
      %2888 = vmatpush1.msra.mxu0 0.0
      %2889 = vmatprep.subr.mxu0 0.0
      %2890 = vmatpush1.msra.mxu0 0.0
      %2891 = vmatprep.subr.mxu0 0.0
      %2892 = vmatpush1.msra.mxu0 0.0
      %2893 = vmatprep.subr.mxu0 0.0
      %2894 = vmatpush1.msra.mxu0 0.0
      %2895 = vmatprep.subr.mxu0 0.0
      %2896 = vmatpush1.msra.mxu0 0.0
      %2897 = vmatprep.subr.mxu0 0.0
      %2898 = vmatpush1.msra.mxu0 0.0
      %2899 = vmatprep.subr.mxu0 0.0
      %2900 = vmatpush1.msra.mxu0 0.0
      %2901 = vmatprep.subr.mxu0 0.0
      %2902 = vmatpush1.msra.mxu0 0.0
      %2903 = vmatprep.subr.mxu0 0.0
      %2904 = vmatpush1.msra.mxu0 0.0
      %2905 = vmatprep.subr.mxu0 0.0
      %2906 = vmatpush1.msra.mxu0 0.0
      %2907 = vmatprep.subr.mxu0 0.0
      %2908 = vmatpush1.msra.mxu0 0.0
      %2909 = vmatprep.subr.mxu0 0.0
      %2910 = vmatpush1.msra.mxu0 0.0
      %2911 = vmatprep.subr.mxu0 0.0
      %2912 = vmatpush1.msra.mxu0 0.0
      %2913 = vmatprep.subr.mxu0 0.0
      %2914 = vmatpush1.msra.mxu0 0.0
      %2915 = vmatprep.subr.mxu0 0.0
      %2916 = vmatpush1.msra.mxu0 0.0
      %2917 = vmatprep.subr.mxu0 0.0
      %2918 = vmatpush1.msra.mxu0 0.0
      %2919 = vmatprep.subr.mxu0 0.0
      %2920 = vmatpush1.msra.mxu0 0.0
      %2921 = vmatprep.subr.mxu0 0.0
      %2922 = vmatpush1.msra.mxu0 0.0
      %2923 = vmatprep.subr.mxu0 0.0
      %2924 = vmatpush1.msra.mxu0 0.0
      %2925 = vmatprep.subr.mxu0 0.0
      %2926 = vmatpush1.msra.mxu0 0.0
      %2927 = vmatprep.subr.mxu0 0.0
      %2928 = vmatpush1.msra.mxu0 0.0
      %2929 = vmatprep.subr.mxu0 0.0
      %2930 = vmatpush1.msra.mxu0 0.0
      %2931 = vmatprep.subr.mxu0 0.0
      %2932 = vmatpush1.msra.mxu0 0.0
      %2933 = vmatprep.subr.mxu0 0.0
      %2934 = vmatpush1.msra.mxu0 0.0
      %2935 = vmatprep.subr.mxu0 0.0
      %2936 = vmatpush1.msra.mxu0 0.0
      %2937 = vmatprep.subr.mxu0 0.0
      %2938 = vmatpush1.msra.mxu0 0.0
      %2939 = vmatprep.mubr.f32.mxu0 0.0
      %2940 = vmatmul.mubr.f32.gmra.mrb[0].mxu0 %v2864
      %v2941 = vpop.f32.mrb[0].mxu0
      %v2942 = vadd.f32 0.0, %v2941
      %v2943 = vpop.f32.mrb[0].mxu0
      %2944 = vmatprep.mubr.f32.mxu0 0.0
      %2945 = vmatmul.mubr.f32.gmra.mrb[0].mxu0 %v2867
      %v2946 = vpop.f32.mrb[0].mxu0
      %v2947 = vadd.f32 0.0, %v2946
      %v2948 = vpop.f32.mrb[0].mxu0
      %2949 = vmatprep.mubr.f32.mxu0 0.0
      %2950 = vmatmul.mubr.f32.gmra.mrb[0].mxu0 %v2870
      %v2951 = vpop.f32.mrb[0].mxu0
      %v2952 = vadd.f32 0.0, %v2951
      %v2953 = vpop.f32.mrb[0].mxu0
      %2954 = vmatprep.mubr.f32.mxu0 0.0
      %2955 = vmatmul.mubr.f32.gmra.mrb[0].mxu0 %v2873
      %v2956 = vpop.f32.mrb[0].mxu0
      %v2957 = vadd.f32 0.0, %v2956
      %v2958 = vpop.f32.mrb[0].mxu0
      %2959 = vdwg.mxu0
      %v2960 = vadd.f32 %v2812, %v2942
      %v2961 = vadd.f32 %v2817, %v2947
      %v2962 = vadd.f32 %v2822, %v2952
      %v2963 = vadd.f32 %v2827, %v2957
      %2964 = vrot.lane.b32.xlu0 %v2591, 118
      %v2965 = vpop.permute.xlu0 %2964
      %2966 = vrot.lane.b32.xlu0 %v2592, 118
      %v2967 = vpop.permute.xlu0 %2966
      %2968 = vrot.lane.b32.xlu0 %v2593, 118
      %v2969 = vpop.permute.xlu0 %2968
      %2970 = vrot.lane.b32.xlu0 %v2594, 118
      %v2971 = vpop.permute.xlu0 %2970
      %2976 = vrot.lane.b32.xlu0 %v2591, 90
      %v2977 = vpop.permute.xlu0 %2976
      %2978 = vrot.lane.b32.xlu0 %v2592, 90
      %v2979 = vpop.permute.xlu0 %2978
      %2980 = vrot.lane.b32.xlu0 %v2593, 90
      %v2981 = vpop.permute.xlu0 %2980
      %2982 = vrot.lane.b32.xlu0 %v2594, 90
      %v2983 = vpop.permute.xlu0 %2982
      %v2988 = vsel %vm1008, %v2965, %v2977
      %v2989 = vsel %vm1008, %v2967, %v2979
      %v2990 = vsel %vm1008, %v2969, %v2981
      %v2991 = vsel %vm1008, %v2971, %v2983
      %s2992 = scalar_lea.vmem %s5, 96
      %v2993 = vld [vmem:[%s2992] sm:$0xff]
      %v2994 = vld [vmem:[%s2992 + $0x8] sm:$0xff]
      %v2995 = vld [vmem:[%s2992 + $0x10] sm:$0xff]
      %v2996 = vld [vmem:[%s2992 + $0x18] sm:$0xff]
      %v2998 = vsel %vm1425, %v2993, 0
      %v3001 = vsel %vm1425, %v2994, 0
      %v3004 = vsel %vm1425, %v2995, 0
      %v3007 = vsel %vm1425, %v2996, 0
      %3009 = vmatprep.subr.mxu0 0.0
      %3010 = vmatpush1.msra.mxu0 %v2988
      %3011 = vmatprep.subr.mxu0 0.0
      %3012 = vmatpush1.msra.mxu0 %v2989
      %3013 = vmatprep.subr.mxu0 0.0
      %3014 = vmatpush1.msra.mxu0 %v2990
      %3015 = vmatprep.subr.mxu0 0.0
      %3016 = vmatpush1.msra.mxu0 %v2991
      %3017 = vmatprep.subr.mxu0 0.0
      %3018 = vmatpush1.msra.mxu0 0.0
      %3019 = vmatprep.subr.mxu0 0.0
      %3020 = vmatpush1.msra.mxu0 0.0
      %3021 = vmatprep.subr.mxu0 0.0
      %3022 = vmatpush1.msra.mxu0 0.0
      %3023 = vmatprep.subr.mxu0 0.0
      %3024 = vmatpush1.msra.mxu0 0.0
      %3025 = vmatprep.subr.mxu0 0.0
      %3026 = vmatpush1.msra.mxu0 0.0
      %3027 = vmatprep.subr.mxu0 0.0
      %3028 = vmatpush1.msra.mxu0 0.0
      %3029 = vmatprep.subr.mxu0 0.0
      %3030 = vmatpush1.msra.mxu0 0.0
      %3031 = vmatprep.subr.mxu0 0.0
      %3032 = vmatpush1.msra.mxu0 0.0
      %3033 = vmatprep.subr.mxu0 0.0
      %3034 = vmatpush1.msra.mxu0 0.0
      %3035 = vmatprep.subr.mxu0 0.0
      %3036 = vmatpush1.msra.mxu0 0.0
      %3037 = vmatprep.subr.mxu0 0.0
      %3038 = vmatpush1.msra.mxu0 0.0
      %3039 = vmatprep.subr.mxu0 0.0
      %3040 = vmatpush1.msra.mxu0 0.0
      %3041 = vmatprep.subr.mxu0 0.0
      %3042 = vmatpush1.msra.mxu0 0.0
      %3043 = vmatprep.subr.mxu0 0.0
      %3044 = vmatpush1.msra.mxu0 0.0
      %3045 = vmatprep.subr.mxu0 0.0
      %3046 = vmatpush1.msra.mxu0 0.0
      %3047 = vmatprep.subr.mxu0 0.0
      %3048 = vmatpush1.msra.mxu0 0.0
      %3049 = vmatprep.subr.mxu0 0.0
      %3050 = vmatpush1.msra.mxu0 0.0
      %3051 = vmatprep.subr.mxu0 0.0
      %3052 = vmatpush1.msra.mxu0 0.0
      %3053 = vmatprep.subr.mxu0 0.0
      %3054 = vmatpush1.msra.mxu0 0.0
      %3055 = vmatprep.subr.mxu0 0.0
      %3056 = vmatpush1.msra.mxu0 0.0
      %3057 = vmatprep.subr.mxu0 0.0
      %3058 = vmatpush1.msra.mxu0 0.0
      %3059 = vmatprep.subr.mxu0 0.0
      %3060 = vmatpush1.msra.mxu0 0.0
      %3061 = vmatprep.subr.mxu0 0.0
      %3062 = vmatpush1.msra.mxu0 0.0
      %3063 = vmatprep.subr.mxu0 0.0
      %3064 = vmatpush1.msra.mxu0 0.0
      %3065 = vmatprep.subr.mxu0 0.0
      %3066 = vmatpush1.msra.mxu0 0.0
      %3067 = vmatprep.subr.mxu0 0.0
      %3068 = vmatpush1.msra.mxu0 0.0
      %3069 = vmatprep.subr.mxu0 0.0
      %3070 = vmatpush1.msra.mxu0 0.0
      %3071 = vmatprep.subr.mxu0 0.0
      %3072 = vmatpush1.msra.mxu0 0.0
      %3073 = vmatprep.mubr.f32.mxu0 0.0
      %3074 = vmatmul.mubr.f32.gmra.mrb[0].mxu0 %v2998
      %v3075 = vpop.f32.mrb[0].mxu0
      %v3076 = vadd.f32 0.0, %v3075
      %v3077 = vpop.f32.mrb[0].mxu0
      %3078 = vmatprep.mubr.f32.mxu0 0.0
      %3079 = vmatmul.mubr.f32.gmra.mrb[0].mxu0 %v3001
      %v3080 = vpop.f32.mrb[0].mxu0
      %v3081 = vadd.f32 0.0, %v3080
      %v3082 = vpop.f32.mrb[0].mxu0
      %3083 = vmatprep.mubr.f32.mxu0 0.0
      %3084 = vmatmul.mubr.f32.gmra.mrb[0].mxu0 %v3004
      %v3085 = vpop.f32.mrb[0].mxu0
      %v3086 = vadd.f32 0.0, %v3085
      %v3087 = vpop.f32.mrb[0].mxu0
      %3088 = vmatprep.mubr.f32.mxu0 0.0
      %3089 = vmatmul.mubr.f32.gmra.mrb[0].mxu0 %v3007
      %v3090 = vpop.f32.mrb[0].mxu0
      %v3091 = vadd.f32 0.0, %v3090
      %v3092 = vpop.f32.mrb[0].mxu0
      %3093 = vdwg.mxu0
      %v3094 = vadd.f32 %v2960, %v3076
      %v3095 = vadd.f32 %v2961, %v3081
      %v3096 = vadd.f32 %v2962, %v3086
      %v3097 = vadd.f32 %v2963, %v3091
      %3098 = vrot.lane.b32.xlu0 %v2591, 117
      %v3099 = vpop.permute.xlu0 %3098
      %3100 = vrot.lane.b32.xlu0 %v2592, 117
      %v3101 = vpop.permute.xlu0 %3100
      %3102 = vrot.lane.b32.xlu0 %v2593, 117
      %v3103 = vpop.permute.xlu0 %3102
      %3104 = vrot.lane.b32.xlu0 %v2594, 117
      %v3105 = vpop.permute.xlu0 %3104
      %3110 = vrot.lane.b32.xlu0 %v2591, 89
      %v3111 = vpop.permute.xlu0 %3110
      %3112 = vrot.lane.b32.xlu0 %v2592, 89
      %v3113 = vpop.permute.xlu0 %3112
      %3114 = vrot.lane.b32.xlu0 %v2593, 89
      %v3115 = vpop.permute.xlu0 %3114
      %3116 = vrot.lane.b32.xlu0 %v2594, 89
      %v3117 = vpop.permute.xlu0 %3116
      %v3122 = vsel %vm1241, %v3099, %v3111
      %v3123 = vsel %vm1241, %v3101, %v3113
      %v3124 = vsel %vm1241, %v3103, %v3115
      %v3125 = vsel %vm1241, %v3105, %v3117
      %s3126 = scalar_lea.vmem %s5, 128
      %v3127 = vld [vmem:[%s3126] sm:$0xff]
      %v3128 = vld [vmem:[%s3126 + $0x8] sm:$0xff]
      %v3129 = vld [vmem:[%s3126 + $0x10] sm:$0xff]
      %v3130 = vld [vmem:[%s3126 + $0x18] sm:$0xff]
      %v3132 = vsel %vm1425, %v3127, 0
      %v3135 = vsel %vm1425, %v3128, 0
      %v3138 = vsel %vm1425, %v3129, 0
      %v3141 = vsel %vm1425, %v3130, 0
      %3143 = vmatprep.subr.mxu0 0.0
      %3144 = vmatpush1.msra.mxu0 %v3122
      %3145 = vmatprep.subr.mxu0 0.0
      %3146 = vmatpush1.msra.mxu0 %v3123
      %3147 = vmatprep.subr.mxu0 0.0
      %3148 = vmatpush1.msra.mxu0 %v3124
      %3149 = vmatprep.subr.mxu0 0.0
      %3150 = vmatpush1.msra.mxu0 %v3125
      %3151 = vmatprep.subr.mxu0 0.0
      %3152 = vmatpush1.msra.mxu0 0.0
      %3153 = vmatprep.subr.mxu0 0.0
      %3154 = vmatpush1.msra.mxu0 0.0
      %3155 = vmatprep.subr.mxu0 0.0
      %3156 = vmatpush1.msra.mxu0 0.0
      %3157 = vmatprep.subr.mxu0 0.0
      %3158 = vmatpush1.msra.mxu0 0.0
      %3159 = vmatprep.subr.mxu0 0.0
      %3160 = vmatpush1.msra.mxu0 0.0
      %3161 = vmatprep.subr.mxu0 0.0
      %3162 = vmatpush1.msra.mxu0 0.0
      %3163 = vmatprep.subr.mxu0 0.0
      %3164 = vmatpush1.msra.mxu0 0.0
      %3165 = vmatprep.subr.mxu0 0.0
      %3166 = vmatpush1.msra.mxu0 0.0
      %3167 = vmatprep.subr.mxu0 0.0
      %3168 = vmatpush1.msra.mxu0 0.0
      %3169 = vmatprep.subr.mxu0 0.0
      %3170 = vmatpush1.msra.mxu0 0.0
      %3171 = vmatprep.subr.mxu0 0.0
      %3172 = vmatpush1.msra.mxu0 0.0
      %3173 = vmatprep.subr.mxu0 0.0
      %3174 = vmatpush1.msra.mxu0 0.0
      %3175 = vmatprep.subr.mxu0 0.0
      %3176 = vmatpush1.msra.mxu0 0.0
      %3177 = vmatprep.subr.mxu0 0.0
      %3178 = vmatpush1.msra.mxu0 0.0
      %3179 = vmatprep.subr.mxu0 0.0
      %3180 = vmatpush1.msra.mxu0 0.0
      %3181 = vmatprep.subr.mxu0 0.0
      %3182 = vmatpush1.msra.mxu0 0.0
      %3183 = vmatprep.subr.mxu0 0.0
      %3184 = vmatpush1.msra.mxu0 0.0
      %3185 = vmatprep.subr.mxu0 0.0
      %3186 = vmatpush1.msra.mxu0 0.0
      %3187 = vmatprep.subr.mxu0 0.0
      %3188 = vmatpush1.msra.mxu0 0.0
      %3189 = vmatprep.subr.mxu0 0.0
      %3190 = vmatpush1.msra.mxu0 0.0
      %3191 = vmatprep.subr.mxu0 0.0
      %3192 = vmatpush1.msra.mxu0 0.0
      %3193 = vmatprep.subr.mxu0 0.0
      %3194 = vmatpush1.msra.mxu0 0.0
      %3195 = vmatprep.subr.mxu0 0.0
      %3196 = vmatpush1.msra.mxu0 0.0
      %3197 = vmatprep.subr.mxu0 0.0
      %3198 = vmatpush1.msra.mxu0 0.0
      %3199 = vmatprep.subr.mxu0 0.0
      %3200 = vmatpush1.msra.mxu0 0.0
      %3201 = vmatprep.subr.mxu0 0.0
      %3202 = vmatpush1.msra.mxu0 0.0
      %3203 = vmatprep.subr.mxu0 0.0
      %3204 = vmatpush1.msra.mxu0 0.0
      %3205 = vmatprep.subr.mxu0 0.0
      %3206 = vmatpush1.msra.mxu0 0.0
      %3207 = vmatprep.mubr.f32.mxu0 0.0
      %3208 = vmatmul.mubr.f32.gmra.mrb[0].mxu0 %v3132
      %v3209 = vpop.f32.mrb[0].mxu0
      %v3210 = vadd.f32 0.0, %v3209
      %v3211 = vpop.f32.mrb[0].mxu0
      %3212 = vmatprep.mubr.f32.mxu0 0.0
      %3213 = vmatmul.mubr.f32.gmra.mrb[0].mxu0 %v3135
      %v3214 = vpop.f32.mrb[0].mxu0
      %v3215 = vadd.f32 0.0, %v3214
      %v3216 = vpop.f32.mrb[0].mxu0
      %3217 = vmatprep.mubr.f32.mxu0 0.0
      %3218 = vmatmul.mubr.f32.gmra.mrb[0].mxu0 %v3138
      %v3219 = vpop.f32.mrb[0].mxu0
      %v3220 = vadd.f32 0.0, %v3219
      %v3221 = vpop.f32.mrb[0].mxu0
      %3222 = vmatprep.mubr.f32.mxu0 0.0
      %3223 = vmatmul.mubr.f32.gmra.mrb[0].mxu0 %v3141
      %v3224 = vpop.f32.mrb[0].mxu0
      %v3225 = vadd.f32 0.0, %v3224
      %v3226 = vpop.f32.mrb[0].mxu0
      %3227 = vdwg.mxu0
      %v3228 = vadd.f32 %v3094, %v3210
      %v3229 = vadd.f32 %v3095, %v3215
      %v3230 = vadd.f32 %v3096, %v3220
      %v3231 = vadd.f32 %v3097, %v3225
      %3232 = vrot.lane.b32.xlu0 %v2591, 116
      %v3233 = vpop.permute.xlu0 %3232
      %3234 = vrot.lane.b32.xlu0 %v2592, 116
      %v3235 = vpop.permute.xlu0 %3234
      %3236 = vrot.lane.b32.xlu0 %v2593, 116
      %v3237 = vpop.permute.xlu0 %3236
      %3238 = vrot.lane.b32.xlu0 %v2594, 116
      %v3239 = vpop.permute.xlu0 %3238
      %3244 = vrot.lane.b32.xlu0 %v2591, 88
      %v3245 = vpop.permute.xlu0 %3244
      %3246 = vrot.lane.b32.xlu0 %v2592, 88
      %v3247 = vpop.permute.xlu0 %3246
      %3248 = vrot.lane.b32.xlu0 %v2593, 88
      %v3249 = vpop.permute.xlu0 %3248
      %3250 = vrot.lane.b32.xlu0 %v2594, 88
      %v3251 = vpop.permute.xlu0 %3250
      %v3256 = vsel %vm2047, %v3233, %v3245
      %v3257 = vsel %vm2047, %v3235, %v3247
      %v3258 = vsel %vm2047, %v3237, %v3249
      %v3259 = vsel %vm2047, %v3239, %v3251
      %s3260 = scalar_lea.vmem %s5, 160
      %v3261 = vld [vmem:[%s3260] sm:$0xff]
      %v3262 = vld [vmem:[%s3260 + $0x8] sm:$0xff]
      %v3263 = vld [vmem:[%s3260 + $0x10] sm:$0xff]
      %v3264 = vld [vmem:[%s3260 + $0x18] sm:$0xff]
      %v3266 = vsel %vm1425, %v3261, 0
      %v3269 = vsel %vm1425, %v3262, 0
      %v3272 = vsel %vm1425, %v3263, 0
      %v3275 = vsel %vm1425, %v3264, 0
      %3277 = vmatprep.subr.mxu0 0.0
      %3278 = vmatpush1.msra.mxu0 %v3256
      %3279 = vmatprep.subr.mxu0 0.0
      %3280 = vmatpush1.msra.mxu0 %v3257
      %3281 = vmatprep.subr.mxu0 0.0
      %3282 = vmatpush1.msra.mxu0 %v3258
      %3283 = vmatprep.subr.mxu0 0.0
      %3284 = vmatpush1.msra.mxu0 %v3259
      %3285 = vmatprep.subr.mxu0 0.0
      %3286 = vmatpush1.msra.mxu0 0.0
      %3287 = vmatprep.subr.mxu0 0.0
      %3288 = vmatpush1.msra.mxu0 0.0
      %3289 = vmatprep.subr.mxu0 0.0
      %3290 = vmatpush1.msra.mxu0 0.0
      %3291 = vmatprep.subr.mxu0 0.0
      %3292 = vmatpush1.msra.mxu0 0.0
      %3293 = vmatprep.subr.mxu0 0.0
      %3294 = vmatpush1.msra.mxu0 0.0
      %3295 = vmatprep.subr.mxu0 0.0
      %3296 = vmatpush1.msra.mxu0 0.0
      %3297 = vmatprep.subr.mxu0 0.0
      %3298 = vmatpush1.msra.mxu0 0.0
      %3299 = vmatprep.subr.mxu0 0.0
      %3300 = vmatpush1.msra.mxu0 0.0
      %3301 = vmatprep.subr.mxu0 0.0
      %3302 = vmatpush1.msra.mxu0 0.0
      %3303 = vmatprep.subr.mxu0 0.0
      %3304 = vmatpush1.msra.mxu0 0.0
      %3305 = vmatprep.subr.mxu0 0.0
      %3306 = vmatpush1.msra.mxu0 0.0
      %3307 = vmatprep.subr.mxu0 0.0
      %3308 = vmatpush1.msra.mxu0 0.0
      %3309 = vmatprep.subr.mxu0 0.0
      %3310 = vmatpush1.msra.mxu0 0.0
      %3311 = vmatprep.subr.mxu0 0.0
      %3312 = vmatpush1.msra.mxu0 0.0
      %3313 = vmatprep.subr.mxu0 0.0
      %3314 = vmatpush1.msra.mxu0 0.0
      %3315 = vmatprep.subr.mxu0 0.0
      %3316 = vmatpush1.msra.mxu0 0.0
      %3317 = vmatprep.subr.mxu0 0.0
      %3318 = vmatpush1.msra.mxu0 0.0
      %3319 = vmatprep.subr.mxu0 0.0
      %3320 = vmatpush1.msra.mxu0 0.0
      %3321 = vmatprep.subr.mxu0 0.0
      %3322 = vmatpush1.msra.mxu0 0.0
      %3323 = vmatprep.subr.mxu0 0.0
      %3324 = vmatpush1.msra.mxu0 0.0
      %3325 = vmatprep.subr.mxu0 0.0
      %3326 = vmatpush1.msra.mxu0 0.0
      %3327 = vmatprep.subr.mxu0 0.0
      %3328 = vmatpush1.msra.mxu0 0.0
      %3329 = vmatprep.subr.mxu0 0.0
      %3330 = vmatpush1.msra.mxu0 0.0
      %3331 = vmatprep.subr.mxu0 0.0
      %3332 = vmatpush1.msra.mxu0 0.0
      %3333 = vmatprep.subr.mxu0 0.0
      %3334 = vmatpush1.msra.mxu0 0.0
      %3335 = vmatprep.subr.mxu0 0.0
      %3336 = vmatpush1.msra.mxu0 0.0
      %3337 = vmatprep.subr.mxu0 0.0
      %3338 = vmatpush1.msra.mxu0 0.0
      %3339 = vmatprep.subr.mxu0 0.0
      %3340 = vmatpush1.msra.mxu0 0.0
      %3341 = vmatprep.mubr.f32.mxu0 0.0
      %3342 = vmatmul.mubr.f32.gmra.mrb[0].mxu0 %v3266
      %v3343 = vpop.f32.mrb[0].mxu0
      %v3344 = vadd.f32 0.0, %v3343
      %v3345 = vpop.f32.mrb[0].mxu0
      %3346 = vmatprep.mubr.f32.mxu0 0.0
      %3347 = vmatmul.mubr.f32.gmra.mrb[0].mxu0 %v3269
      %v3348 = vpop.f32.mrb[0].mxu0
      %v3349 = vadd.f32 0.0, %v3348
      %v3350 = vpop.f32.mrb[0].mxu0
      %3351 = vmatprep.mubr.f32.mxu0 0.0
      %3352 = vmatmul.mubr.f32.gmra.mrb[0].mxu0 %v3272
      %v3353 = vpop.f32.mrb[0].mxu0
      %v3354 = vadd.f32 0.0, %v3353
      %v3355 = vpop.f32.mrb[0].mxu0
      %3356 = vmatprep.mubr.f32.mxu0 0.0
      %3357 = vmatmul.mubr.f32.gmra.mrb[0].mxu0 %v3275
      %v3358 = vpop.f32.mrb[0].mxu0
      %v3359 = vadd.f32 0.0, %v3358
      %v3360 = vpop.f32.mrb[0].mxu0
      %3361 = vdwg.mxu0
      %v3362 = vadd.f32 %v3228, %v3344
      %v3363 = vadd.f32 %v3229, %v3349
      %v3364 = vadd.f32 %v3230, %v3354
      %v3365 = vadd.f32 %v3231, %v3359
      %3366 = vrot.lane.b32.xlu0 %v2591, 108
      %v3367 = vpop.permute.xlu0 %3366
      %3368 = vrot.lane.b32.xlu0 %v2592, 108
      %v3369 = vpop.permute.xlu0 %3368
      %3370 = vrot.lane.b32.xlu0 %v2593, 108
      %v3371 = vpop.permute.xlu0 %3370
      %3372 = vrot.lane.b32.xlu0 %v2594, 108
      %v3373 = vpop.permute.xlu0 %3372
      %3378 = vrot.lane.b32.xlu0 %v2591, 80
      %v3379 = vpop.permute.xlu0 %3378
      %3380 = vrot.lane.b32.xlu0 %v2592, 80
      %v3381 = vpop.permute.xlu0 %3380
      %3382 = vrot.lane.b32.xlu0 %v2593, 80
      %v3383 = vpop.permute.xlu0 %3382
      %3384 = vrot.lane.b32.xlu0 %v2594, 80
      %v3385 = vpop.permute.xlu0 %3384
      %v3390 = vsel %vm2182, %v3367, %v3379
      %v3391 = vsel %vm2182, %v3369, %v3381
      %v3392 = vsel %vm2182, %v3371, %v3383
      %v3393 = vsel %vm2182, %v3373, %v3385
      %s3394 = scalar_lea.vmem %s5, 192
      %v3395 = vld [vmem:[%s3394] sm:$0xff]
      %v3396 = vld [vmem:[%s3394 + $0x8] sm:$0xff]
      %v3397 = vld [vmem:[%s3394 + $0x10] sm:$0xff]
      %v3398 = vld [vmem:[%s3394 + $0x18] sm:$0xff]
      %v3400 = vsel %vm1425, %v3395, 0
      %v3403 = vsel %vm1425, %v3396, 0
      %v3406 = vsel %vm1425, %v3397, 0
      %v3409 = vsel %vm1425, %v3398, 0
      %3411 = vmatprep.subr.mxu0 0.0
      %3412 = vmatpush1.msra.mxu0 %v3390
      %3413 = vmatprep.subr.mxu0 0.0
      %3414 = vmatpush1.msra.mxu0 %v3391
      %3415 = vmatprep.subr.mxu0 0.0
      %3416 = vmatpush1.msra.mxu0 %v3392
      %3417 = vmatprep.subr.mxu0 0.0
      %3418 = vmatpush1.msra.mxu0 %v3393
      %3419 = vmatprep.subr.mxu0 0.0
      %3420 = vmatpush1.msra.mxu0 0.0
      %3421 = vmatprep.subr.mxu0 0.0
      %3422 = vmatpush1.msra.mxu0 0.0
      %3423 = vmatprep.subr.mxu0 0.0
      %3424 = vmatpush1.msra.mxu0 0.0
      %3425 = vmatprep.subr.mxu0 0.0
      %3426 = vmatpush1.msra.mxu0 0.0
      %3427 = vmatprep.subr.mxu0 0.0
      %3428 = vmatpush1.msra.mxu0 0.0
      %3429 = vmatprep.subr.mxu0 0.0
      %3430 = vmatpush1.msra.mxu0 0.0
      %3431 = vmatprep.subr.mxu0 0.0
      %3432 = vmatpush1.msra.mxu0 0.0
      %3433 = vmatprep.subr.mxu0 0.0
      %3434 = vmatpush1.msra.mxu0 0.0
      %3435 = vmatprep.subr.mxu0 0.0
      %3436 = vmatpush1.msra.mxu0 0.0
      %3437 = vmatprep.subr.mxu0 0.0
      %3438 = vmatpush1.msra.mxu0 0.0
      %3439 = vmatprep.subr.mxu0 0.0
      %3440 = vmatpush1.msra.mxu0 0.0
      %3441 = vmatprep.subr.mxu0 0.0
      %3442 = vmatpush1.msra.mxu0 0.0
      %3443 = vmatprep.subr.mxu0 0.0
      %3444 = vmatpush1.msra.mxu0 0.0
      %3445 = vmatprep.subr.mxu0 0.0
      %3446 = vmatpush1.msra.mxu0 0.0
      %3447 = vmatprep.subr.mxu0 0.0
      %3448 = vmatpush1.msra.mxu0 0.0
      %3449 = vmatprep.subr.mxu0 0.0
      %3450 = vmatpush1.msra.mxu0 0.0
      %3451 = vmatprep.subr.mxu0 0.0
      %3452 = vmatpush1.msra.mxu0 0.0
      %3453 = vmatprep.subr.mxu0 0.0
      %3454 = vmatpush1.msra.mxu0 0.0
      %3455 = vmatprep.subr.mxu0 0.0
      %3456 = vmatpush1.msra.mxu0 0.0
      %3457 = vmatprep.subr.mxu0 0.0
      %3458 = vmatpush1.msra.mxu0 0.0
      %3459 = vmatprep.subr.mxu0 0.0
      %3460 = vmatpush1.msra.mxu0 0.0
      %3461 = vmatprep.subr.mxu0 0.0
      %3462 = vmatpush1.msra.mxu0 0.0
      %3463 = vmatprep.subr.mxu0 0.0
      %3464 = vmatpush1.msra.mxu0 0.0
      %3465 = vmatprep.subr.mxu0 0.0
      %3466 = vmatpush1.msra.mxu0 0.0
      %3467 = vmatprep.subr.mxu0 0.0
      %3468 = vmatpush1.msra.mxu0 0.0
      %3469 = vmatprep.subr.mxu0 0.0
      %3470 = vmatpush1.msra.mxu0 0.0
      %3471 = vmatprep.subr.mxu0 0.0
      %3472 = vmatpush1.msra.mxu0 0.0
      %3473 = vmatprep.subr.mxu0 0.0
      %3474 = vmatpush1.msra.mxu0 0.0
      %3475 = vmatprep.mubr.f32.mxu0 0.0
      %3476 = vmatmul.mubr.f32.gmra.mrb[0].mxu0 %v3400
      %v3477 = vpop.f32.mrb[0].mxu0
      %v3478 = vadd.f32 0.0, %v3477
      %v3479 = vpop.f32.mrb[0].mxu0
      %3480 = vmatprep.mubr.f32.mxu0 0.0
      %3481 = vmatmul.mubr.f32.gmra.mrb[0].mxu0 %v3403
      %v3482 = vpop.f32.mrb[0].mxu0
      %v3483 = vadd.f32 0.0, %v3482
      %v3484 = vpop.f32.mrb[0].mxu0
      %3485 = vmatprep.mubr.f32.mxu0 0.0
      %3486 = vmatmul.mubr.f32.gmra.mrb[0].mxu0 %v3406
      %v3487 = vpop.f32.mrb[0].mxu0
      %v3488 = vadd.f32 0.0, %v3487
      %v3489 = vpop.f32.mrb[0].mxu0
      %3490 = vmatprep.mubr.f32.mxu0 0.0
      %3491 = vmatmul.mubr.f32.gmra.mrb[0].mxu0 %v3409
      %v3492 = vpop.f32.mrb[0].mxu0
      %v3493 = vadd.f32 0.0, %v3492
      %v3494 = vpop.f32.mrb[0].mxu0
      %3495 = vdwg.mxu0
      %v3496 = vadd.f32 %v3362, %v3478
      %v3497 = vadd.f32 %v3363, %v3483
      %v3498 = vadd.f32 %v3364, %v3488
      %v3499 = vadd.f32 %v3365, %v3493
      %3500 = vrot.lane.b32.xlu0 %v2591, 107
      %v3501 = vpop.permute.xlu0 %3500
      %3502 = vrot.lane.b32.xlu0 %v2592, 107
      %v3503 = vpop.permute.xlu0 %3502
      %3504 = vrot.lane.b32.xlu0 %v2593, 107
      %v3505 = vpop.permute.xlu0 %3504
      %3506 = vrot.lane.b32.xlu0 %v2594, 107
      %v3507 = vpop.permute.xlu0 %3506
      %3512 = vrot.lane.b32.xlu0 %v2591, 79
      %v3513 = vpop.permute.xlu0 %3512
      %3514 = vrot.lane.b32.xlu0 %v2592, 79
      %v3515 = vpop.permute.xlu0 %3514
      %3516 = vrot.lane.b32.xlu0 %v2593, 79
      %v3517 = vpop.permute.xlu0 %3516
      %3518 = vrot.lane.b32.xlu0 %v2594, 79
      %v3519 = vpop.permute.xlu0 %3518
      %v3524 = vsel %vm2317, %v3501, %v3513
      %v3525 = vsel %vm2317, %v3503, %v3515
      %v3526 = vsel %vm2317, %v3505, %v3517
      %v3527 = vsel %vm2317, %v3507, %v3519
      %s3528 = scalar_lea.vmem %s5, 224
      %v3529 = vld [vmem:[%s3528] sm:$0xff]
      %v3530 = vld [vmem:[%s3528 + $0x8] sm:$0xff]
      %v3531 = vld [vmem:[%s3528 + $0x10] sm:$0xff]
      %v3532 = vld [vmem:[%s3528 + $0x18] sm:$0xff]
      %v3534 = vsel %vm1425, %v3529, 0
      %v3537 = vsel %vm1425, %v3530, 0
      %v3540 = vsel %vm1425, %v3531, 0
      %v3543 = vsel %vm1425, %v3532, 0
      %3545 = vmatprep.subr.mxu0 0.0
      %3546 = vmatpush1.msra.mxu0 %v3524
      %3547 = vmatprep.subr.mxu0 0.0
      %3548 = vmatpush1.msra.mxu0 %v3525
      %3549 = vmatprep.subr.mxu0 0.0
      %3550 = vmatpush1.msra.mxu0 %v3526
      %3551 = vmatprep.subr.mxu0 0.0
      %3552 = vmatpush1.msra.mxu0 %v3527
      %3553 = vmatprep.subr.mxu0 0.0
      %3554 = vmatpush1.msra.mxu0 0.0
      %3555 = vmatprep.subr.mxu0 0.0
      %3556 = vmatpush1.msra.mxu0 0.0
      %3557 = vmatprep.subr.mxu0 0.0
      %3558 = vmatpush1.msra.mxu0 0.0
      %3559 = vmatprep.subr.mxu0 0.0
      %3560 = vmatpush1.msra.mxu0 0.0
      %3561 = vmatprep.subr.mxu0 0.0
      %3562 = vmatpush1.msra.mxu0 0.0
      %3563 = vmatprep.subr.mxu0 0.0
      %3564 = vmatpush1.msra.mxu0 0.0
      %3565 = vmatprep.subr.mxu0 0.0
      %3566 = vmatpush1.msra.mxu0 0.0
      %3567 = vmatprep.subr.mxu0 0.0
      %3568 = vmatpush1.msra.mxu0 0.0
      %3569 = vmatprep.subr.mxu0 0.0
      %3570 = vmatpush1.msra.mxu0 0.0
      %3571 = vmatprep.subr.mxu0 0.0
      %3572 = vmatpush1.msra.mxu0 0.0
      %3573 = vmatprep.subr.mxu0 0.0
      %3574 = vmatpush1.msra.mxu0 0.0
      %3575 = vmatprep.subr.mxu0 0.0
      %3576 = vmatpush1.msra.mxu0 0.0
      %3577 = vmatprep.subr.mxu0 0.0
      %3578 = vmatpush1.msra.mxu0 0.0
      %3579 = vmatprep.subr.mxu0 0.0
      %3580 = vmatpush1.msra.mxu0 0.0
      %3581 = vmatprep.subr.mxu0 0.0
      %3582 = vmatpush1.msra.mxu0 0.0
      %3583 = vmatprep.subr.mxu0 0.0
      %3584 = vmatpush1.msra.mxu0 0.0
      %3585 = vmatprep.subr.mxu0 0.0
      %3586 = vmatpush1.msra.mxu0 0.0
      %3587 = vmatprep.subr.mxu0 0.0
      %3588 = vmatpush1.msra.mxu0 0.0
      %3589 = vmatprep.subr.mxu0 0.0
      %3590 = vmatpush1.msra.mxu0 0.0
      %3591 = vmatprep.subr.mxu0 0.0
      %3592 = vmatpush1.msra.mxu0 0.0
      %3593 = vmatprep.subr.mxu0 0.0
      %3594 = vmatpush1.msra.mxu0 0.0
      %3595 = vmatprep.subr.mxu0 0.0
      %3596 = vmatpush1.msra.mxu0 0.0
      %3597 = vmatprep.subr.mxu0 0.0
      %3598 = vmatpush1.msra.mxu0 0.0
      %3599 = vmatprep.subr.mxu0 0.0
      %3600 = vmatpush1.msra.mxu0 0.0
      %3601 = vmatprep.subr.mxu0 0.0
      %3602 = vmatpush1.msra.mxu0 0.0
      %3603 = vmatprep.subr.mxu0 0.0
      %3604 = vmatpush1.msra.mxu0 0.0
      %3605 = vmatprep.subr.mxu0 0.0
      %3606 = vmatpush1.msra.mxu0 0.0
      %3607 = vmatprep.subr.mxu0 0.0
      %3608 = vmatpush1.msra.mxu0 0.0
      %3609 = vmatprep.mubr.f32.mxu0 0.0
      %3610 = vmatmul.mubr.f32.gmra.mrb[0].mxu0 %v3534
      %v3611 = vpop.f32.mrb[0].mxu0
      %v3612 = vadd.f32 0.0, %v3611
      %v3613 = vpop.f32.mrb[0].mxu0
      %3614 = vmatprep.mubr.f32.mxu0 0.0
      %3615 = vmatmul.mubr.f32.gmra.mrb[0].mxu0 %v3537
      %v3616 = vpop.f32.mrb[0].mxu0
      %v3617 = vadd.f32 0.0, %v3616
      %v3618 = vpop.f32.mrb[0].mxu0
      %3619 = vmatprep.mubr.f32.mxu0 0.0
      %3620 = vmatmul.mubr.f32.gmra.mrb[0].mxu0 %v3540
      %v3621 = vpop.f32.mrb[0].mxu0
      %v3622 = vadd.f32 0.0, %v3621
      %v3623 = vpop.f32.mrb[0].mxu0
      %3624 = vmatprep.mubr.f32.mxu0 0.0
      %3625 = vmatmul.mubr.f32.gmra.mrb[0].mxu0 %v3543
      %v3626 = vpop.f32.mrb[0].mxu0
      %v3627 = vadd.f32 0.0, %v3626
      %v3628 = vpop.f32.mrb[0].mxu0
      %3629 = vdwg.mxu0
      %v3630 = vadd.f32 %v3496, %v3612
      %v3631 = vadd.f32 %v3497, %v3617
      %v3632 = vadd.f32 %v3498, %v3622
      %v3633 = vadd.f32 %v3499, %v3627
      %3634 = vrot.lane.b32.xlu0 %v2591, 106
      %v3635 = vpop.permute.xlu0 %3634
      %3636 = vrot.lane.b32.xlu0 %v2592, 106
      %v3637 = vpop.permute.xlu0 %3636
      %3638 = vrot.lane.b32.xlu0 %v2593, 106
      %v3639 = vpop.permute.xlu0 %3638
      %3640 = vrot.lane.b32.xlu0 %v2594, 106
      %v3641 = vpop.permute.xlu0 %3640
      %3646 = vrot.lane.b32.xlu0 %v2591, 78
      %v3647 = vpop.permute.xlu0 %3646
      %3648 = vrot.lane.b32.xlu0 %v2592, 78
      %v3649 = vpop.permute.xlu0 %3648
      %3650 = vrot.lane.b32.xlu0 %v2593, 78
      %v3651 = vpop.permute.xlu0 %3650
      %3652 = vrot.lane.b32.xlu0 %v2594, 78
      %v3653 = vpop.permute.xlu0 %3652
      %v3658 = vsel %vm2452, %v3635, %v3647
      %v3659 = vsel %vm2452, %v3637, %v3649
      %v3660 = vsel %vm2452, %v3639, %v3651
      %v3661 = vsel %vm2452, %v3641, %v3653
      %s3662 = scalar_lea.vmem %s5, 256
      %v3663 = vld [vmem:[%s3662] sm:$0xff]
      %v3664 = vld [vmem:[%s3662 + $0x8] sm:$0xff]
      %v3665 = vld [vmem:[%s3662 + $0x10] sm:$0xff]
      %v3666 = vld [vmem:[%s3662 + $0x18] sm:$0xff]
      %v3668 = vsel %vm1425, %v3663, 0
      %v3671 = vsel %vm1425, %v3664, 0
      %v3674 = vsel %vm1425, %v3665, 0
      %v3677 = vsel %vm1425, %v3666, 0
      %3679 = vmatprep.subr.mxu0 0.0
      %3680 = vmatpush1.msra.mxu0 %v3658
      %3681 = vmatprep.subr.mxu0 0.0
      %3682 = vmatpush1.msra.mxu0 %v3659
      %3683 = vmatprep.subr.mxu0 0.0
      %3684 = vmatpush1.msra.mxu0 %v3660
      %3685 = vmatprep.subr.mxu0 0.0
      %3686 = vmatpush1.msra.mxu0 %v3661
      %3687 = vmatprep.subr.mxu0 0.0
      %3688 = vmatpush1.msra.mxu0 0.0
      %3689 = vmatprep.subr.mxu0 0.0
      %3690 = vmatpush1.msra.mxu0 0.0
      %3691 = vmatprep.subr.mxu0 0.0
      %3692 = vmatpush1.msra.mxu0 0.0
      %3693 = vmatprep.subr.mxu0 0.0
      %3694 = vmatpush1.msra.mxu0 0.0
      %3695 = vmatprep.subr.mxu0 0.0
      %3696 = vmatpush1.msra.mxu0 0.0
      %3697 = vmatprep.subr.mxu0 0.0
      %3698 = vmatpush1.msra.mxu0 0.0
      %3699 = vmatprep.subr.mxu0 0.0
      %3700 = vmatpush1.msra.mxu0 0.0
      %3701 = vmatprep.subr.mxu0 0.0
      %3702 = vmatpush1.msra.mxu0 0.0
      %3703 = vmatprep.subr.mxu0 0.0
      %3704 = vmatpush1.msra.mxu0 0.0
      %3705 = vmatprep.subr.mxu0 0.0
      %3706 = vmatpush1.msra.mxu0 0.0
      %3707 = vmatprep.subr.mxu0 0.0
      %3708 = vmatpush1.msra.mxu0 0.0
      %3709 = vmatprep.subr.mxu0 0.0
      %3710 = vmatpush1.msra.mxu0 0.0
      %3711 = vmatprep.subr.mxu0 0.0
      %3712 = vmatpush1.msra.mxu0 0.0
      %3713 = vmatprep.subr.mxu0 0.0
      %3714 = vmatpush1.msra.mxu0 0.0
      %3715 = vmatprep.subr.mxu0 0.0
      %3716 = vmatpush1.msra.mxu0 0.0
      %3717 = vmatprep.subr.mxu0 0.0
      %3718 = vmatpush1.msra.mxu0 0.0
      %3719 = vmatprep.subr.mxu0 0.0
      %3720 = vmatpush1.msra.mxu0 0.0
      %3721 = vmatprep.subr.mxu0 0.0
      %3722 = vmatpush1.msra.mxu0 0.0
      %3723 = vmatprep.subr.mxu0 0.0
      %3724 = vmatpush1.msra.mxu0 0.0
      %3725 = vmatprep.subr.mxu0 0.0
      %3726 = vmatpush1.msra.mxu0 0.0
      %3727 = vmatprep.subr.mxu0 0.0
      %3728 = vmatpush1.msra.mxu0 0.0
      %3729 = vmatprep.subr.mxu0 0.0
      %3730 = vmatpush1.msra.mxu0 0.0
      %3731 = vmatprep.subr.mxu0 0.0
      %3732 = vmatpush1.msra.mxu0 0.0
      %3733 = vmatprep.subr.mxu0 0.0
      %3734 = vmatpush1.msra.mxu0 0.0
      %3735 = vmatprep.subr.mxu0 0.0
      %3736 = vmatpush1.msra.mxu0 0.0
      %3737 = vmatprep.subr.mxu0 0.0
      %3738 = vmatpush1.msra.mxu0 0.0
      %3739 = vmatprep.subr.mxu0 0.0
      %3740 = vmatpush1.msra.mxu0 0.0
      %3741 = vmatprep.subr.mxu0 0.0
      %3742 = vmatpush1.msra.mxu0 0.0
      %3743 = vmatprep.mubr.f32.mxu0 0.0
      %3744 = vmatmul.mubr.f32.gmra.mrb[0].mxu0 %v3668
      %v3745 = vpop.f32.mrb[0].mxu0
      %v3746 = vadd.f32 0.0, %v3745
      %v3747 = vpop.f32.mrb[0].mxu0
      %3748 = vmatprep.mubr.f32.mxu0 0.0
      %3749 = vmatmul.mubr.f32.gmra.mrb[0].mxu0 %v3671
      %v3750 = vpop.f32.mrb[0].mxu0
      %v3751 = vadd.f32 0.0, %v3750
      %v3752 = vpop.f32.mrb[0].mxu0
      %3753 = vmatprep.mubr.f32.mxu0 0.0
      %3754 = vmatmul.mubr.f32.gmra.mrb[0].mxu0 %v3674
      %v3755 = vpop.f32.mrb[0].mxu0
      %v3756 = vadd.f32 0.0, %v3755
      %v3757 = vpop.f32.mrb[0].mxu0
      %3758 = vmatprep.mubr.f32.mxu0 0.0
      %3759 = vmatmul.mubr.f32.gmra.mrb[0].mxu0 %v3677
      %v3760 = vpop.f32.mrb[0].mxu0
      %v3761 = vadd.f32 0.0, %v3760
      %v3762 = vpop.f32.mrb[0].mxu0
      %3763 = vdwg.mxu0
      %v3764 = vadd.f32 %v3630, %v3746
      %v3765 = vadd.f32 %v3631, %v3751
      %v3766 = vadd.f32 %v3632, %v3756
      %v3767 = vadd.f32 %v3633, %v3761
      %v3768 = vld [vmem:[%s6] sm:$0xff]
      %v3769 = vld [vmem:[%s6 + $0x8] sm:$0xff]
      %v3770 = vld [vmem:[%s6 + $0x10] sm:$0xff]
      %v3771 = vld [vmem:[%s6 + $0x18] sm:$0xff]
      %3773 = vset.pattern.permute.xlu0 0
      %3774 = vperm.xlu0 %3773, %v3768
      %v3775 = vpop.permute.xlu0 %3774
      %3778 = vset.pattern.permute.xlu0 0
      %3779 = vperm.xlu0 %3778, %v3769
      %v3780 = vpop.permute.xlu0 %3779
      %3783 = vset.pattern.permute.xlu0 0
      %3784 = vperm.xlu0 %3783, %v3770
      %v3785 = vpop.permute.xlu0 %3784
      %3788 = vset.pattern.permute.xlu0 0
      %3789 = vperm.xlu0 %3788, %v3771
      %v3790 = vpop.permute.xlu0 %3789
      %v3792 = vadd.f32 %v3764, %v3775
      %v3793 = vadd.f32 %v3765, %v3780
      %v3794 = vadd.f32 %v3766, %v3785
      %v3795 = vadd.f32 %v3767, %v3790
      %v3796 = vmax.f32 %v3792, 0.0
      %v3797 = vmax.f32 %v3793, 0.0
      %v3798 = vmax.f32 %v3794, 0.0
      %v3799 = vmax.f32 %v3795, 0.0
      %v3800 = vld [vmem:[%s7] sm:$0xff]
      %v3801 = vld [vmem:[%s7 + $0x8] sm:$0xff]
      %v3802 = vld [vmem:[%s7 + $0x10] sm:$0xff]
      %v3803 = vld [vmem:[%s7 + $0x18] sm:$0xff]
      %3808 = vrot.lane.b32.xlu0 %v3796, 127
      %v3809 = vpop.permute.xlu0 %3808
      %3810 = vrot.lane.b32.xlu0 %v3797, 127
      %v3811 = vpop.permute.xlu0 %3810
      %3812 = vrot.lane.b32.xlu0 %v3798, 127
      %v3813 = vpop.permute.xlu0 %3812
      %3814 = vrot.lane.b32.xlu0 %v3799, 127
      %v3815 = vpop.permute.xlu0 %3814
      %3820 = vrot.lane.b32.xlu0 %v3796, 99
      %v3821 = vpop.permute.xlu0 %3820
      %3822 = vrot.lane.b32.xlu0 %v3797, 99
      %v3823 = vpop.permute.xlu0 %3822
      %3824 = vrot.lane.b32.xlu0 %v3798, 99
      %v3825 = vpop.permute.xlu0 %3824
      %3826 = vrot.lane.b32.xlu0 %v3799, 99
      %v3827 = vpop.permute.xlu0 %3826
      %v3832 = vsel %vm553, %v3809, %v3821
      %v3833 = vsel %vm553, %v3811, %v3823
      %v3834 = vsel %vm553, %v3813, %v3825
      %v3835 = vsel %vm553, %v3815, %v3827
      %s3836 = scalar_lea.vmem %s7, 32
      %v3837 = vld [vmem:[%s3836] sm:$0xff]
      %v3838 = vld [vmem:[%s3836 + $0x8] sm:$0xff]
      %v3839 = vld [vmem:[%s3836 + $0x10] sm:$0xff]
      %v3840 = vld [vmem:[%s3836 + $0x18] sm:$0xff]
      %v3842 = vsel %vm1425, %v3837, 0
      %v3845 = vsel %vm1425, %v3838, 0
      %v3848 = vsel %vm1425, %v3839, 0
      %v3851 = vsel %vm1425, %v3840, 0
      %3853 = vmatprep.subr.mxu0 0.0
      %3854 = vmatpush1.msra.mxu0 %v3832
      %3855 = vmatprep.subr.mxu0 0.0
      %3856 = vmatpush1.msra.mxu0 %v3833
      %3857 = vmatprep.subr.mxu0 0.0
      %3858 = vmatpush1.msra.mxu0 %v3834
      %3859 = vmatprep.subr.mxu0 0.0
      %3860 = vmatpush1.msra.mxu0 %v3835
      %3861 = vmatprep.subr.mxu0 0.0
      %3862 = vmatpush1.msra.mxu0 0.0
      %3863 = vmatprep.subr.mxu0 0.0
      %3864 = vmatpush1.msra.mxu0 0.0
      %3865 = vmatprep.subr.mxu0 0.0
      %3866 = vmatpush1.msra.mxu0 0.0
      %3867 = vmatprep.subr.mxu0 0.0
      %3868 = vmatpush1.msra.mxu0 0.0
      %3869 = vmatprep.subr.mxu0 0.0
      %3870 = vmatpush1.msra.mxu0 0.0
      %3871 = vmatprep.subr.mxu0 0.0
      %3872 = vmatpush1.msra.mxu0 0.0
      %3873 = vmatprep.subr.mxu0 0.0
      %3874 = vmatpush1.msra.mxu0 0.0
      %3875 = vmatprep.subr.mxu0 0.0
      %3876 = vmatpush1.msra.mxu0 0.0
      %3877 = vmatprep.subr.mxu0 0.0
      %3878 = vmatpush1.msra.mxu0 0.0
      %3879 = vmatprep.subr.mxu0 0.0
      %3880 = vmatpush1.msra.mxu0 0.0
      %3881 = vmatprep.subr.mxu0 0.0
      %3882 = vmatpush1.msra.mxu0 0.0
      %3883 = vmatprep.subr.mxu0 0.0
      %3884 = vmatpush1.msra.mxu0 0.0
      %3885 = vmatprep.subr.mxu0 0.0
      %3886 = vmatpush1.msra.mxu0 0.0
      %3887 = vmatprep.subr.mxu0 0.0
      %3888 = vmatpush1.msra.mxu0 0.0
      %3889 = vmatprep.subr.mxu0 0.0
      %3890 = vmatpush1.msra.mxu0 0.0
      %3891 = vmatprep.subr.mxu0 0.0
      %3892 = vmatpush1.msra.mxu0 0.0
      %3893 = vmatprep.subr.mxu0 0.0
      %3894 = vmatpush1.msra.mxu0 0.0
      %3895 = vmatprep.subr.mxu0 0.0
      %3896 = vmatpush1.msra.mxu0 0.0
      %3897 = vmatprep.subr.mxu0 0.0
      %3898 = vmatpush1.msra.mxu0 0.0
      %3899 = vmatprep.subr.mxu0 0.0
      %3900 = vmatpush1.msra.mxu0 0.0
      %3901 = vmatprep.subr.mxu0 0.0
      %3902 = vmatpush1.msra.mxu0 0.0
      %3903 = vmatprep.subr.mxu0 0.0
      %3904 = vmatpush1.msra.mxu0 0.0
      %3905 = vmatprep.subr.mxu0 0.0
      %3906 = vmatpush1.msra.mxu0 0.0
      %3907 = vmatprep.subr.mxu0 0.0
      %3908 = vmatpush1.msra.mxu0 0.0
      %3909 = vmatprep.subr.mxu0 0.0
      %3910 = vmatpush1.msra.mxu0 0.0
      %3911 = vmatprep.subr.mxu0 0.0
      %3912 = vmatpush1.msra.mxu0 0.0
      %3913 = vmatprep.subr.mxu0 0.0
      %3914 = vmatpush1.msra.mxu0 0.0
      %3915 = vmatprep.subr.mxu0 0.0
      %3916 = vmatpush1.msra.mxu0 0.0
      %3917 = vmatprep.mubr.f32.mxu0 0.0
      %3918 = vmatmul.mubr.f32.gmra.mrb[0].mxu0 %v3842
      %v3919 = vpop.f32.mrb[0].mxu0
      %v3920 = vadd.f32 0.0, %v3919
      %v3921 = vpop.f32.mrb[0].mxu0
      %3922 = vmatprep.mubr.f32.mxu0 0.0
      %3923 = vmatmul.mubr.f32.gmra.mrb[0].mxu0 %v3845
      %v3924 = vpop.f32.mrb[0].mxu0
      %v3925 = vadd.f32 0.0, %v3924
      %v3926 = vpop.f32.mrb[0].mxu0
      %3927 = vmatprep.mubr.f32.mxu0 0.0
      %3928 = vmatmul.mubr.f32.gmra.mrb[0].mxu0 %v3848
      %v3929 = vpop.f32.mrb[0].mxu0
      %v3930 = vadd.f32 0.0, %v3929
      %v3931 = vpop.f32.mrb[0].mxu0
      %3932 = vmatprep.mubr.f32.mxu0 0.0
      %3933 = vmatmul.mubr.f32.gmra.mrb[0].mxu0 %v3851
      %v3934 = vpop.f32.mrb[0].mxu0
      %v3935 = vadd.f32 0.0, %v3934
      %v3936 = vpop.f32.mrb[0].mxu0
      %3937 = vdwg.mxu0
      %v3939 = vsel %vm1425, %v3800, 0
      %v3942 = vsel %vm1425, %v3801, 0
      %v3945 = vsel %vm1425, %v3802, 0
      %v3948 = vsel %vm1425, %v3803, 0
      %3950 = vmatprep.subr.mxu0 0.0
      %3951 = vmatpush1.msra.mxu0 %v3796
      %3952 = vmatprep.subr.mxu0 0.0
      %3953 = vmatpush1.msra.mxu0 %v3797
      %3954 = vmatprep.subr.mxu0 0.0
      %3955 = vmatpush1.msra.mxu0 %v3798
      %3956 = vmatprep.subr.mxu0 0.0
      %3957 = vmatpush1.msra.mxu0 %v3799
      %3958 = vmatprep.subr.mxu0 0.0
      %3959 = vmatpush1.msra.mxu0 0.0
      %3960 = vmatprep.subr.mxu0 0.0
      %3961 = vmatpush1.msra.mxu0 0.0
      %3962 = vmatprep.subr.mxu0 0.0
      %3963 = vmatpush1.msra.mxu0 0.0
      %3964 = vmatprep.subr.mxu0 0.0
      %3965 = vmatpush1.msra.mxu0 0.0
      %3966 = vmatprep.subr.mxu0 0.0
      %3967 = vmatpush1.msra.mxu0 0.0
      %3968 = vmatprep.subr.mxu0 0.0
      %3969 = vmatpush1.msra.mxu0 0.0
      %3970 = vmatprep.subr.mxu0 0.0
      %3971 = vmatpush1.msra.mxu0 0.0
      %3972 = vmatprep.subr.mxu0 0.0
      %3973 = vmatpush1.msra.mxu0 0.0
      %3974 = vmatprep.subr.mxu0 0.0
      %3975 = vmatpush1.msra.mxu0 0.0
      %3976 = vmatprep.subr.mxu0 0.0
      %3977 = vmatpush1.msra.mxu0 0.0
      %3978 = vmatprep.subr.mxu0 0.0
      %3979 = vmatpush1.msra.mxu0 0.0
      %3980 = vmatprep.subr.mxu0 0.0
      %3981 = vmatpush1.msra.mxu0 0.0
      %3982 = vmatprep.subr.mxu0 0.0
      %3983 = vmatpush1.msra.mxu0 0.0
      %3984 = vmatprep.subr.mxu0 0.0
      %3985 = vmatpush1.msra.mxu0 0.0
      %3986 = vmatprep.subr.mxu0 0.0
      %3987 = vmatpush1.msra.mxu0 0.0
      %3988 = vmatprep.subr.mxu0 0.0
      %3989 = vmatpush1.msra.mxu0 0.0
      %3990 = vmatprep.subr.mxu0 0.0
      %3991 = vmatpush1.msra.mxu0 0.0
      %3992 = vmatprep.subr.mxu0 0.0
      %3993 = vmatpush1.msra.mxu0 0.0
      %3994 = vmatprep.subr.mxu0 0.0
      %3995 = vmatpush1.msra.mxu0 0.0
      %3996 = vmatprep.subr.mxu0 0.0
      %3997 = vmatpush1.msra.mxu0 0.0
      %3998 = vmatprep.subr.mxu0 0.0
      %3999 = vmatpush1.msra.mxu0 0.0
      %4000 = vmatprep.subr.mxu0 0.0
      %4001 = vmatpush1.msra.mxu0 0.0
      %4002 = vmatprep.subr.mxu0 0.0
      %4003 = vmatpush1.msra.mxu0 0.0
      %4004 = vmatprep.subr.mxu0 0.0
      %4005 = vmatpush1.msra.mxu0 0.0
      %4006 = vmatprep.subr.mxu0 0.0
      %4007 = vmatpush1.msra.mxu0 0.0
      %4008 = vmatprep.subr.mxu0 0.0
      %4009 = vmatpush1.msra.mxu0 0.0
      %4010 = vmatprep.subr.mxu0 0.0
      %4011 = vmatpush1.msra.mxu0 0.0
      %4012 = vmatprep.subr.mxu0 0.0
      %4013 = vmatpush1.msra.mxu0 0.0
      %4014 = vmatprep.mubr.f32.mxu0 0.0
      %4015 = vmatmul.mubr.f32.gmra.mrb[0].mxu0 %v3939
      %v4016 = vpop.f32.mrb[0].mxu0
      %v4017 = vadd.f32 %v3920, %v4016
      %v4018 = vpop.f32.mrb[0].mxu0
      %4019 = vmatprep.mubr.f32.mxu0 0.0
      %4020 = vmatmul.mubr.f32.gmra.mrb[0].mxu0 %v3942
      %v4021 = vpop.f32.mrb[0].mxu0
      %v4022 = vadd.f32 %v3925, %v4021
      %v4023 = vpop.f32.mrb[0].mxu0
      %4024 = vmatprep.mubr.f32.mxu0 0.0
      %4025 = vmatmul.mubr.f32.gmra.mrb[0].mxu0 %v3945
      %v4026 = vpop.f32.mrb[0].mxu0
      %v4027 = vadd.f32 %v3930, %v4026
      %v4028 = vpop.f32.mrb[0].mxu0
      %4029 = vmatprep.mubr.f32.mxu0 0.0
      %4030 = vmatmul.mubr.f32.gmra.mrb[0].mxu0 %v3948
      %v4031 = vpop.f32.mrb[0].mxu0
      %v4032 = vadd.f32 %v3935, %v4031
      %v4033 = vpop.f32.mrb[0].mxu0
      %4034 = vdwg.mxu0
      %4035 = vrot.lane.b32.xlu0 %v3796, 126
      %v4036 = vpop.permute.xlu0 %4035
      %4037 = vrot.lane.b32.xlu0 %v3797, 126
      %v4038 = vpop.permute.xlu0 %4037
      %4039 = vrot.lane.b32.xlu0 %v3798, 126
      %v4040 = vpop.permute.xlu0 %4039
      %4041 = vrot.lane.b32.xlu0 %v3799, 126
      %v4042 = vpop.permute.xlu0 %4041
      %4047 = vrot.lane.b32.xlu0 %v3796, 98
      %v4048 = vpop.permute.xlu0 %4047
      %4049 = vrot.lane.b32.xlu0 %v3797, 98
      %v4050 = vpop.permute.xlu0 %4049
      %4051 = vrot.lane.b32.xlu0 %v3798, 98
      %v4052 = vpop.permute.xlu0 %4051
      %4053 = vrot.lane.b32.xlu0 %v3799, 98
      %v4054 = vpop.permute.xlu0 %4053
      %v4059 = vsel %vm1644, %v4036, %v4048
      %v4060 = vsel %vm1644, %v4038, %v4050
      %v4061 = vsel %vm1644, %v4040, %v4052
      %v4062 = vsel %vm1644, %v4042, %v4054
      %s4063 = scalar_lea.vmem %s7, 64
      %v4064 = vld [vmem:[%s4063] sm:$0xff]
      %v4065 = vld [vmem:[%s4063 + $0x8] sm:$0xff]
      %v4066 = vld [vmem:[%s4063 + $0x10] sm:$0xff]
      %v4067 = vld [vmem:[%s4063 + $0x18] sm:$0xff]
      %v4069 = vsel %vm1425, %v4064, 0
      %v4072 = vsel %vm1425, %v4065, 0
      %v4075 = vsel %vm1425, %v4066, 0
      %v4078 = vsel %vm1425, %v4067, 0
      %4080 = vmatprep.subr.mxu0 0.0
      %4081 = vmatpush1.msra.mxu0 %v4059
      %4082 = vmatprep.subr.mxu0 0.0
      %4083 = vmatpush1.msra.mxu0 %v4060
      %4084 = vmatprep.subr.mxu0 0.0
      %4085 = vmatpush1.msra.mxu0 %v4061
      %4086 = vmatprep.subr.mxu0 0.0
      %4087 = vmatpush1.msra.mxu0 %v4062
      %4088 = vmatprep.subr.mxu0 0.0
      %4089 = vmatpush1.msra.mxu0 0.0
      %4090 = vmatprep.subr.mxu0 0.0
      %4091 = vmatpush1.msra.mxu0 0.0
      %4092 = vmatprep.subr.mxu0 0.0
      %4093 = vmatpush1.msra.mxu0 0.0
      %4094 = vmatprep.subr.mxu0 0.0
      %4095 = vmatpush1.msra.mxu0 0.0
      %4096 = vmatprep.subr.mxu0 0.0
      %4097 = vmatpush1.msra.mxu0 0.0
      %4098 = vmatprep.subr.mxu0 0.0
      %4099 = vmatpush1.msra.mxu0 0.0
      %4100 = vmatprep.subr.mxu0 0.0
      %4101 = vmatpush1.msra.mxu0 0.0
      %4102 = vmatprep.subr.mxu0 0.0
      %4103 = vmatpush1.msra.mxu0 0.0
      %4104 = vmatprep.subr.mxu0 0.0
      %4105 = vmatpush1.msra.mxu0 0.0
      %4106 = vmatprep.subr.mxu0 0.0
      %4107 = vmatpush1.msra.mxu0 0.0
      %4108 = vmatprep.subr.mxu0 0.0
      %4109 = vmatpush1.msra.mxu0 0.0
      %4110 = vmatprep.subr.mxu0 0.0
      %4111 = vmatpush1.msra.mxu0 0.0
      %4112 = vmatprep.subr.mxu0 0.0
      %4113 = vmatpush1.msra.mxu0 0.0
      %4114 = vmatprep.subr.mxu0 0.0
      %4115 = vmatpush1.msra.mxu0 0.0
      %4116 = vmatprep.subr.mxu0 0.0
      %4117 = vmatpush1.msra.mxu0 0.0
      %4118 = vmatprep.subr.mxu0 0.0
      %4119 = vmatpush1.msra.mxu0 0.0
      %4120 = vmatprep.subr.mxu0 0.0
      %4121 = vmatpush1.msra.mxu0 0.0
      %4122 = vmatprep.subr.mxu0 0.0
      %4123 = vmatpush1.msra.mxu0 0.0
      %4124 = vmatprep.subr.mxu0 0.0
      %4125 = vmatpush1.msra.mxu0 0.0
      %4126 = vmatprep.subr.mxu0 0.0
      %4127 = vmatpush1.msra.mxu0 0.0
      %4128 = vmatprep.subr.mxu0 0.0
      %4129 = vmatpush1.msra.mxu0 0.0
      %4130 = vmatprep.subr.mxu0 0.0
      %4131 = vmatpush1.msra.mxu0 0.0
      %4132 = vmatprep.subr.mxu0 0.0
      %4133 = vmatpush1.msra.mxu0 0.0
      %4134 = vmatprep.subr.mxu0 0.0
      %4135 = vmatpush1.msra.mxu0 0.0
      %4136 = vmatprep.subr.mxu0 0.0
      %4137 = vmatpush1.msra.mxu0 0.0
      %4138 = vmatprep.subr.mxu0 0.0
      %4139 = vmatpush1.msra.mxu0 0.0
      %4140 = vmatprep.subr.mxu0 0.0
      %4141 = vmatpush1.msra.mxu0 0.0
      %4142 = vmatprep.subr.mxu0 0.0
      %4143 = vmatpush1.msra.mxu0 0.0
      %4144 = vmatprep.mubr.f32.mxu0 0.0
      %4145 = vmatmul.mubr.f32.gmra.mrb[0].mxu0 %v4069
      %v4146 = vpop.f32.mrb[0].mxu0
      %v4147 = vadd.f32 0.0, %v4146
      %v4148 = vpop.f32.mrb[0].mxu0
      %4149 = vmatprep.mubr.f32.mxu0 0.0
      %4150 = vmatmul.mubr.f32.gmra.mrb[0].mxu0 %v4072
      %v4151 = vpop.f32.mrb[0].mxu0
      %v4152 = vadd.f32 0.0, %v4151
      %v4153 = vpop.f32.mrb[0].mxu0
      %4154 = vmatprep.mubr.f32.mxu0 0.0
      %4155 = vmatmul.mubr.f32.gmra.mrb[0].mxu0 %v4075
      %v4156 = vpop.f32.mrb[0].mxu0
      %v4157 = vadd.f32 0.0, %v4156
      %v4158 = vpop.f32.mrb[0].mxu0
      %4159 = vmatprep.mubr.f32.mxu0 0.0
      %4160 = vmatmul.mubr.f32.gmra.mrb[0].mxu0 %v4078
      %v4161 = vpop.f32.mrb[0].mxu0
      %v4162 = vadd.f32 0.0, %v4161
      %v4163 = vpop.f32.mrb[0].mxu0
      %4164 = vdwg.mxu0
      %v4165 = vadd.f32 %v4017, %v4147
      %v4166 = vadd.f32 %v4022, %v4152
      %v4167 = vadd.f32 %v4027, %v4157
      %v4168 = vadd.f32 %v4032, %v4162
      %4169 = vrot.lane.b32.xlu0 %v3796, 118
      %v4170 = vpop.permute.xlu0 %4169
      %4171 = vrot.lane.b32.xlu0 %v3797, 118
      %v4172 = vpop.permute.xlu0 %4171
      %4173 = vrot.lane.b32.xlu0 %v3798, 118
      %v4174 = vpop.permute.xlu0 %4173
      %4175 = vrot.lane.b32.xlu0 %v3799, 118
      %v4176 = vpop.permute.xlu0 %4175
      %4181 = vrot.lane.b32.xlu0 %v3796, 90
      %v4182 = vpop.permute.xlu0 %4181
      %4183 = vrot.lane.b32.xlu0 %v3797, 90
      %v4184 = vpop.permute.xlu0 %4183
      %4185 = vrot.lane.b32.xlu0 %v3798, 90
      %v4186 = vpop.permute.xlu0 %4185
      %4187 = vrot.lane.b32.xlu0 %v3799, 90
      %v4188 = vpop.permute.xlu0 %4187
      %v4193 = vsel %vm1008, %v4170, %v4182
      %v4194 = vsel %vm1008, %v4172, %v4184
      %v4195 = vsel %vm1008, %v4174, %v4186
      %v4196 = vsel %vm1008, %v4176, %v4188
      %s4197 = scalar_lea.vmem %s7, 96
      %v4198 = vld [vmem:[%s4197] sm:$0xff]
      %v4199 = vld [vmem:[%s4197 + $0x8] sm:$0xff]
      %v4200 = vld [vmem:[%s4197 + $0x10] sm:$0xff]
      %v4201 = vld [vmem:[%s4197 + $0x18] sm:$0xff]
      %v4203 = vsel %vm1425, %v4198, 0
      %v4206 = vsel %vm1425, %v4199, 0
      %v4209 = vsel %vm1425, %v4200, 0
      %v4212 = vsel %vm1425, %v4201, 0
      %4214 = vmatprep.subr.mxu0 0.0
      %4215 = vmatpush1.msra.mxu0 %v4193
      %4216 = vmatprep.subr.mxu0 0.0
      %4217 = vmatpush1.msra.mxu0 %v4194
      %4218 = vmatprep.subr.mxu0 0.0
      %4219 = vmatpush1.msra.mxu0 %v4195
      %4220 = vmatprep.subr.mxu0 0.0
      %4221 = vmatpush1.msra.mxu0 %v4196
      %4222 = vmatprep.subr.mxu0 0.0
      %4223 = vmatpush1.msra.mxu0 0.0
      %4224 = vmatprep.subr.mxu0 0.0
      %4225 = vmatpush1.msra.mxu0 0.0
      %4226 = vmatprep.subr.mxu0 0.0
      %4227 = vmatpush1.msra.mxu0 0.0
      %4228 = vmatprep.subr.mxu0 0.0
      %4229 = vmatpush1.msra.mxu0 0.0
      %4230 = vmatprep.subr.mxu0 0.0
      %4231 = vmatpush1.msra.mxu0 0.0
      %4232 = vmatprep.subr.mxu0 0.0
      %4233 = vmatpush1.msra.mxu0 0.0
      %4234 = vmatprep.subr.mxu0 0.0
      %4235 = vmatpush1.msra.mxu0 0.0
      %4236 = vmatprep.subr.mxu0 0.0
      %4237 = vmatpush1.msra.mxu0 0.0
      %4238 = vmatprep.subr.mxu0 0.0
      %4239 = vmatpush1.msra.mxu0 0.0
      %4240 = vmatprep.subr.mxu0 0.0
      %4241 = vmatpush1.msra.mxu0 0.0
      %4242 = vmatprep.subr.mxu0 0.0
      %4243 = vmatpush1.msra.mxu0 0.0
      %4244 = vmatprep.subr.mxu0 0.0
      %4245 = vmatpush1.msra.mxu0 0.0
      %4246 = vmatprep.subr.mxu0 0.0
      %4247 = vmatpush1.msra.mxu0 0.0
      %4248 = vmatprep.subr.mxu0 0.0
      %4249 = vmatpush1.msra.mxu0 0.0
      %4250 = vmatprep.subr.mxu0 0.0
      %4251 = vmatpush1.msra.mxu0 0.0
      %4252 = vmatprep.subr.mxu0 0.0
      %4253 = vmatpush1.msra.mxu0 0.0
      %4254 = vmatprep.subr.mxu0 0.0
      %4255 = vmatpush1.msra.mxu0 0.0
      %4256 = vmatprep.subr.mxu0 0.0
      %4257 = vmatpush1.msra.mxu0 0.0
      %4258 = vmatprep.subr.mxu0 0.0
      %4259 = vmatpush1.msra.mxu0 0.0
      %4260 = vmatprep.subr.mxu0 0.0
      %4261 = vmatpush1.msra.mxu0 0.0
      %4262 = vmatprep.subr.mxu0 0.0
      %4263 = vmatpush1.msra.mxu0 0.0
      %4264 = vmatprep.subr.mxu0 0.0
      %4265 = vmatpush1.msra.mxu0 0.0
      %4266 = vmatprep.subr.mxu0 0.0
      %4267 = vmatpush1.msra.mxu0 0.0
      %4268 = vmatprep.subr.mxu0 0.0
      %4269 = vmatpush1.msra.mxu0 0.0
      %4270 = vmatprep.subr.mxu0 0.0
      %4271 = vmatpush1.msra.mxu0 0.0
      %4272 = vmatprep.subr.mxu0 0.0
      %4273 = vmatpush1.msra.mxu0 0.0
      %4274 = vmatprep.subr.mxu0 0.0
      %4275 = vmatpush1.msra.mxu0 0.0
      %4276 = vmatprep.subr.mxu0 0.0
      %4277 = vmatpush1.msra.mxu0 0.0
      %4278 = vmatprep.mubr.f32.mxu0 0.0
      %4279 = vmatmul.mubr.f32.gmra.mrb[0].mxu0 %v4203
      %v4280 = vpop.f32.mrb[0].mxu0
      %v4281 = vadd.f32 0.0, %v4280
      %v4282 = vpop.f32.mrb[0].mxu0
      %4283 = vmatprep.mubr.f32.mxu0 0.0
      %4284 = vmatmul.mubr.f32.gmra.mrb[0].mxu0 %v4206
      %v4285 = vpop.f32.mrb[0].mxu0
      %v4286 = vadd.f32 0.0, %v4285
      %v4287 = vpop.f32.mrb[0].mxu0
      %4288 = vmatprep.mubr.f32.mxu0 0.0
      %4289 = vmatmul.mubr.f32.gmra.mrb[0].mxu0 %v4209
      %v4290 = vpop.f32.mrb[0].mxu0
      %v4291 = vadd.f32 0.0, %v4290
      %v4292 = vpop.f32.mrb[0].mxu0
      %4293 = vmatprep.mubr.f32.mxu0 0.0
      %4294 = vmatmul.mubr.f32.gmra.mrb[0].mxu0 %v4212
      %v4295 = vpop.f32.mrb[0].mxu0
      %v4296 = vadd.f32 0.0, %v4295
      %v4297 = vpop.f32.mrb[0].mxu0
      %4298 = vdwg.mxu0
      %v4299 = vadd.f32 %v4165, %v4281
      %v4300 = vadd.f32 %v4166, %v4286
      %v4301 = vadd.f32 %v4167, %v4291
      %v4302 = vadd.f32 %v4168, %v4296
      %4303 = vrot.lane.b32.xlu0 %v3796, 117
      %v4304 = vpop.permute.xlu0 %4303
      %4305 = vrot.lane.b32.xlu0 %v3797, 117
      %v4306 = vpop.permute.xlu0 %4305
      %4307 = vrot.lane.b32.xlu0 %v3798, 117
      %v4308 = vpop.permute.xlu0 %4307
      %4309 = vrot.lane.b32.xlu0 %v3799, 117
      %v4310 = vpop.permute.xlu0 %4309
      %4315 = vrot.lane.b32.xlu0 %v3796, 89
      %v4316 = vpop.permute.xlu0 %4315
      %4317 = vrot.lane.b32.xlu0 %v3797, 89
      %v4318 = vpop.permute.xlu0 %4317
      %4319 = vrot.lane.b32.xlu0 %v3798, 89
      %v4320 = vpop.permute.xlu0 %4319
      %4321 = vrot.lane.b32.xlu0 %v3799, 89
      %v4322 = vpop.permute.xlu0 %4321
      %v4327 = vsel %vm1241, %v4304, %v4316
      %v4328 = vsel %vm1241, %v4306, %v4318
      %v4329 = vsel %vm1241, %v4308, %v4320
      %v4330 = vsel %vm1241, %v4310, %v4322
      %s4331 = scalar_lea.vmem %s7, 128
      %v4332 = vld [vmem:[%s4331] sm:$0xff]
      %v4333 = vld [vmem:[%s4331 + $0x8] sm:$0xff]
      %v4334 = vld [vmem:[%s4331 + $0x10] sm:$0xff]
      %v4335 = vld [vmem:[%s4331 + $0x18] sm:$0xff]
      %v4337 = vsel %vm1425, %v4332, 0
      %v4340 = vsel %vm1425, %v4333, 0
      %v4343 = vsel %vm1425, %v4334, 0
      %v4346 = vsel %vm1425, %v4335, 0
      %4348 = vmatprep.subr.mxu0 0.0
      %4349 = vmatpush1.msra.mxu0 %v4327
      %4350 = vmatprep.subr.mxu0 0.0
      %4351 = vmatpush1.msra.mxu0 %v4328
      %4352 = vmatprep.subr.mxu0 0.0
      %4353 = vmatpush1.msra.mxu0 %v4329
      %4354 = vmatprep.subr.mxu0 0.0
      %4355 = vmatpush1.msra.mxu0 %v4330
      %4356 = vmatprep.subr.mxu0 0.0
      %4357 = vmatpush1.msra.mxu0 0.0
      %4358 = vmatprep.subr.mxu0 0.0
      %4359 = vmatpush1.msra.mxu0 0.0
      %4360 = vmatprep.subr.mxu0 0.0
      %4361 = vmatpush1.msra.mxu0 0.0
      %4362 = vmatprep.subr.mxu0 0.0
      %4363 = vmatpush1.msra.mxu0 0.0
      %4364 = vmatprep.subr.mxu0 0.0
      %4365 = vmatpush1.msra.mxu0 0.0
      %4366 = vmatprep.subr.mxu0 0.0
      %4367 = vmatpush1.msra.mxu0 0.0
      %4368 = vmatprep.subr.mxu0 0.0
      %4369 = vmatpush1.msra.mxu0 0.0
      %4370 = vmatprep.subr.mxu0 0.0
      %4371 = vmatpush1.msra.mxu0 0.0
      %4372 = vmatprep.subr.mxu0 0.0
      %4373 = vmatpush1.msra.mxu0 0.0
      %4374 = vmatprep.subr.mxu0 0.0
      %4375 = vmatpush1.msra.mxu0 0.0
      %4376 = vmatprep.subr.mxu0 0.0
      %4377 = vmatpush1.msra.mxu0 0.0
      %4378 = vmatprep.subr.mxu0 0.0
      %4379 = vmatpush1.msra.mxu0 0.0
      %4380 = vmatprep.subr.mxu0 0.0
      %4381 = vmatpush1.msra.mxu0 0.0
      %4382 = vmatprep.subr.mxu0 0.0
      %4383 = vmatpush1.msra.mxu0 0.0
      %4384 = vmatprep.subr.mxu0 0.0
      %4385 = vmatpush1.msra.mxu0 0.0
      %4386 = vmatprep.subr.mxu0 0.0
      %4387 = vmatpush1.msra.mxu0 0.0
      %4388 = vmatprep.subr.mxu0 0.0
      %4389 = vmatpush1.msra.mxu0 0.0
      %4390 = vmatprep.subr.mxu0 0.0
      %4391 = vmatpush1.msra.mxu0 0.0
      %4392 = vmatprep.subr.mxu0 0.0
      %4393 = vmatpush1.msra.mxu0 0.0
      %4394 = vmatprep.subr.mxu0 0.0
      %4395 = vmatpush1.msra.mxu0 0.0
      %4396 = vmatprep.subr.mxu0 0.0
      %4397 = vmatpush1.msra.mxu0 0.0
      %4398 = vmatprep.subr.mxu0 0.0
      %4399 = vmatpush1.msra.mxu0 0.0
      %4400 = vmatprep.subr.mxu0 0.0
      %4401 = vmatpush1.msra.mxu0 0.0
      %4402 = vmatprep.subr.mxu0 0.0
      %4403 = vmatpush1.msra.mxu0 0.0
      %4404 = vmatprep.subr.mxu0 0.0
      %4405 = vmatpush1.msra.mxu0 0.0
      %4406 = vmatprep.subr.mxu0 0.0
      %4407 = vmatpush1.msra.mxu0 0.0
      %4408 = vmatprep.subr.mxu0 0.0
      %4409 = vmatpush1.msra.mxu0 0.0
      %4410 = vmatprep.subr.mxu0 0.0
      %4411 = vmatpush1.msra.mxu0 0.0
      %4412 = vmatprep.mubr.f32.mxu0 0.0
      %4413 = vmatmul.mubr.f32.gmra.mrb[0].mxu0 %v4337
      %v4414 = vpop.f32.mrb[0].mxu0
      %v4415 = vadd.f32 0.0, %v4414
      %v4416 = vpop.f32.mrb[0].mxu0
      %4417 = vmatprep.mubr.f32.mxu0 0.0
      %4418 = vmatmul.mubr.f32.gmra.mrb[0].mxu0 %v4340
      %v4419 = vpop.f32.mrb[0].mxu0
      %v4420 = vadd.f32 0.0, %v4419
      %v4421 = vpop.f32.mrb[0].mxu0
      %4422 = vmatprep.mubr.f32.mxu0 0.0
      %4423 = vmatmul.mubr.f32.gmra.mrb[0].mxu0 %v4343
      %v4424 = vpop.f32.mrb[0].mxu0
      %v4425 = vadd.f32 0.0, %v4424
      %v4426 = vpop.f32.mrb[0].mxu0
      %4427 = vmatprep.mubr.f32.mxu0 0.0
      %4428 = vmatmul.mubr.f32.gmra.mrb[0].mxu0 %v4346
      %v4429 = vpop.f32.mrb[0].mxu0
      %v4430 = vadd.f32 0.0, %v4429
      %v4431 = vpop.f32.mrb[0].mxu0
      %4432 = vdwg.mxu0
      %v4433 = vadd.f32 %v4299, %v4415
      %v4434 = vadd.f32 %v4300, %v4420
      %v4435 = vadd.f32 %v4301, %v4425
      %v4436 = vadd.f32 %v4302, %v4430
      %4437 = vrot.lane.b32.xlu0 %v3796, 116
      %v4438 = vpop.permute.xlu0 %4437
      %4439 = vrot.lane.b32.xlu0 %v3797, 116
      %v4440 = vpop.permute.xlu0 %4439
      %4441 = vrot.lane.b32.xlu0 %v3798, 116
      %v4442 = vpop.permute.xlu0 %4441
      %4443 = vrot.lane.b32.xlu0 %v3799, 116
      %v4444 = vpop.permute.xlu0 %4443
      %4449 = vrot.lane.b32.xlu0 %v3796, 88
      %v4450 = vpop.permute.xlu0 %4449
      %4451 = vrot.lane.b32.xlu0 %v3797, 88
      %v4452 = vpop.permute.xlu0 %4451
      %4453 = vrot.lane.b32.xlu0 %v3798, 88
      %v4454 = vpop.permute.xlu0 %4453
      %4455 = vrot.lane.b32.xlu0 %v3799, 88
      %v4456 = vpop.permute.xlu0 %4455
      %v4461 = vsel %vm2047, %v4438, %v4450
      %v4462 = vsel %vm2047, %v4440, %v4452
      %v4463 = vsel %vm2047, %v4442, %v4454
      %v4464 = vsel %vm2047, %v4444, %v4456
      %s4465 = scalar_lea.vmem %s7, 160
      %v4466 = vld [vmem:[%s4465] sm:$0xff]
      %v4467 = vld [vmem:[%s4465 + $0x8] sm:$0xff]
      %v4468 = vld [vmem:[%s4465 + $0x10] sm:$0xff]
      %v4469 = vld [vmem:[%s4465 + $0x18] sm:$0xff]
      %v4471 = vsel %vm1425, %v4466, 0
      %v4474 = vsel %vm1425, %v4467, 0
      %v4477 = vsel %vm1425, %v4468, 0
      %v4480 = vsel %vm1425, %v4469, 0
      %4482 = vmatprep.subr.mxu0 0.0
      %4483 = vmatpush1.msra.mxu0 %v4461
      %4484 = vmatprep.subr.mxu0 0.0
      %4485 = vmatpush1.msra.mxu0 %v4462
      %4486 = vmatprep.subr.mxu0 0.0
      %4487 = vmatpush1.msra.mxu0 %v4463
      %4488 = vmatprep.subr.mxu0 0.0
      %4489 = vmatpush1.msra.mxu0 %v4464
      %4490 = vmatprep.subr.mxu0 0.0
      %4491 = vmatpush1.msra.mxu0 0.0
      %4492 = vmatprep.subr.mxu0 0.0
      %4493 = vmatpush1.msra.mxu0 0.0
      %4494 = vmatprep.subr.mxu0 0.0
      %4495 = vmatpush1.msra.mxu0 0.0
      %4496 = vmatprep.subr.mxu0 0.0
      %4497 = vmatpush1.msra.mxu0 0.0
      %4498 = vmatprep.subr.mxu0 0.0
      %4499 = vmatpush1.msra.mxu0 0.0
      %4500 = vmatprep.subr.mxu0 0.0
      %4501 = vmatpush1.msra.mxu0 0.0
      %4502 = vmatprep.subr.mxu0 0.0
      %4503 = vmatpush1.msra.mxu0 0.0
      %4504 = vmatprep.subr.mxu0 0.0
      %4505 = vmatpush1.msra.mxu0 0.0
      %4506 = vmatprep.subr.mxu0 0.0
      %4507 = vmatpush1.msra.mxu0 0.0
      %4508 = vmatprep.subr.mxu0 0.0
      %4509 = vmatpush1.msra.mxu0 0.0
      %4510 = vmatprep.subr.mxu0 0.0
      %4511 = vmatpush1.msra.mxu0 0.0
      %4512 = vmatprep.subr.mxu0 0.0
      %4513 = vmatpush1.msra.mxu0 0.0
      %4514 = vmatprep.subr.mxu0 0.0
      %4515 = vmatpush1.msra.mxu0 0.0
      %4516 = vmatprep.subr.mxu0 0.0
      %4517 = vmatpush1.msra.mxu0 0.0
      %4518 = vmatprep.subr.mxu0 0.0
      %4519 = vmatpush1.msra.mxu0 0.0
      %4520 = vmatprep.subr.mxu0 0.0
      %4521 = vmatpush1.msra.mxu0 0.0
      %4522 = vmatprep.subr.mxu0 0.0
      %4523 = vmatpush1.msra.mxu0 0.0
      %4524 = vmatprep.subr.mxu0 0.0
      %4525 = vmatpush1.msra.mxu0 0.0
      %4526 = vmatprep.subr.mxu0 0.0
      %4527 = vmatpush1.msra.mxu0 0.0
      %4528 = vmatprep.subr.mxu0 0.0
      %4529 = vmatpush1.msra.mxu0 0.0
      %4530 = vmatprep.subr.mxu0 0.0
      %4531 = vmatpush1.msra.mxu0 0.0
      %4532 = vmatprep.subr.mxu0 0.0
      %4533 = vmatpush1.msra.mxu0 0.0
      %4534 = vmatprep.subr.mxu0 0.0
      %4535 = vmatpush1.msra.mxu0 0.0
      %4536 = vmatprep.subr.mxu0 0.0
      %4537 = vmatpush1.msra.mxu0 0.0
      %4538 = vmatprep.subr.mxu0 0.0
      %4539 = vmatpush1.msra.mxu0 0.0
      %4540 = vmatprep.subr.mxu0 0.0
      %4541 = vmatpush1.msra.mxu0 0.0
      %4542 = vmatprep.subr.mxu0 0.0
      %4543 = vmatpush1.msra.mxu0 0.0
      %4544 = vmatprep.subr.mxu0 0.0
      %4545 = vmatpush1.msra.mxu0 0.0
      %4546 = vmatprep.mubr.f32.mxu0 0.0
      %4547 = vmatmul.mubr.f32.gmra.mrb[0].mxu0 %v4471
      %v4548 = vpop.f32.mrb[0].mxu0
      %v4549 = vadd.f32 0.0, %v4548
      %v4550 = vpop.f32.mrb[0].mxu0
      %4551 = vmatprep.mubr.f32.mxu0 0.0
      %4552 = vmatmul.mubr.f32.gmra.mrb[0].mxu0 %v4474
      %v4553 = vpop.f32.mrb[0].mxu0
      %v4554 = vadd.f32 0.0, %v4553
      %v4555 = vpop.f32.mrb[0].mxu0
      %4556 = vmatprep.mubr.f32.mxu0 0.0
      %4557 = vmatmul.mubr.f32.gmra.mrb[0].mxu0 %v4477
      %v4558 = vpop.f32.mrb[0].mxu0
      %v4559 = vadd.f32 0.0, %v4558
      %v4560 = vpop.f32.mrb[0].mxu0
      %4561 = vmatprep.mubr.f32.mxu0 0.0
      %4562 = vmatmul.mubr.f32.gmra.mrb[0].mxu0 %v4480
      %v4563 = vpop.f32.mrb[0].mxu0
      %v4564 = vadd.f32 0.0, %v4563
      %v4565 = vpop.f32.mrb[0].mxu0
      %4566 = vdwg.mxu0
      %v4567 = vadd.f32 %v4433, %v4549
      %v4568 = vadd.f32 %v4434, %v4554
      %v4569 = vadd.f32 %v4435, %v4559
      %v4570 = vadd.f32 %v4436, %v4564
      %4571 = vrot.lane.b32.xlu0 %v3796, 108
      %v4572 = vpop.permute.xlu0 %4571
      %4573 = vrot.lane.b32.xlu0 %v3797, 108
      %v4574 = vpop.permute.xlu0 %4573
      %4575 = vrot.lane.b32.xlu0 %v3798, 108
      %v4576 = vpop.permute.xlu0 %4575
      %4577 = vrot.lane.b32.xlu0 %v3799, 108
      %v4578 = vpop.permute.xlu0 %4577
      %4583 = vrot.lane.b32.xlu0 %v3796, 80
      %v4584 = vpop.permute.xlu0 %4583
      %4585 = vrot.lane.b32.xlu0 %v3797, 80
      %v4586 = vpop.permute.xlu0 %4585
      %4587 = vrot.lane.b32.xlu0 %v3798, 80
      %v4588 = vpop.permute.xlu0 %4587
      %4589 = vrot.lane.b32.xlu0 %v3799, 80
      %v4590 = vpop.permute.xlu0 %4589
      %v4595 = vsel %vm2182, %v4572, %v4584
      %v4596 = vsel %vm2182, %v4574, %v4586
      %v4597 = vsel %vm2182, %v4576, %v4588
      %v4598 = vsel %vm2182, %v4578, %v4590
      %s4599 = scalar_lea.vmem %s7, 192
      %v4600 = vld [vmem:[%s4599] sm:$0xff]
      %v4601 = vld [vmem:[%s4599 + $0x8] sm:$0xff]
      %v4602 = vld [vmem:[%s4599 + $0x10] sm:$0xff]
      %v4603 = vld [vmem:[%s4599 + $0x18] sm:$0xff]
      %v4605 = vsel %vm1425, %v4600, 0
      %v4608 = vsel %vm1425, %v4601, 0
      %v4611 = vsel %vm1425, %v4602, 0
      %v4614 = vsel %vm1425, %v4603, 0
      %4616 = vmatprep.subr.mxu0 0.0
      %4617 = vmatpush1.msra.mxu0 %v4595
      %4618 = vmatprep.subr.mxu0 0.0
      %4619 = vmatpush1.msra.mxu0 %v4596
      %4620 = vmatprep.subr.mxu0 0.0
      %4621 = vmatpush1.msra.mxu0 %v4597
      %4622 = vmatprep.subr.mxu0 0.0
      %4623 = vmatpush1.msra.mxu0 %v4598
      %4624 = vmatprep.subr.mxu0 0.0
      %4625 = vmatpush1.msra.mxu0 0.0
      %4626 = vmatprep.subr.mxu0 0.0
      %4627 = vmatpush1.msra.mxu0 0.0
      %4628 = vmatprep.subr.mxu0 0.0
      %4629 = vmatpush1.msra.mxu0 0.0
      %4630 = vmatprep.subr.mxu0 0.0
      %4631 = vmatpush1.msra.mxu0 0.0
      %4632 = vmatprep.subr.mxu0 0.0
      %4633 = vmatpush1.msra.mxu0 0.0
      %4634 = vmatprep.subr.mxu0 0.0
      %4635 = vmatpush1.msra.mxu0 0.0
      %4636 = vmatprep.subr.mxu0 0.0
      %4637 = vmatpush1.msra.mxu0 0.0
      %4638 = vmatprep.subr.mxu0 0.0
      %4639 = vmatpush1.msra.mxu0 0.0
      %4640 = vmatprep.subr.mxu0 0.0
      %4641 = vmatpush1.msra.mxu0 0.0
      %4642 = vmatprep.subr.mxu0 0.0
      %4643 = vmatpush1.msra.mxu0 0.0
      %4644 = vmatprep.subr.mxu0 0.0
      %4645 = vmatpush1.msra.mxu0 0.0
      %4646 = vmatprep.subr.mxu0 0.0
      %4647 = vmatpush1.msra.mxu0 0.0
      %4648 = vmatprep.subr.mxu0 0.0
      %4649 = vmatpush1.msra.mxu0 0.0
      %4650 = vmatprep.subr.mxu0 0.0
      %4651 = vmatpush1.msra.mxu0 0.0
      %4652 = vmatprep.subr.mxu0 0.0
      %4653 = vmatpush1.msra.mxu0 0.0
      %4654 = vmatprep.subr.mxu0 0.0
      %4655 = vmatpush1.msra.mxu0 0.0
      %4656 = vmatprep.subr.mxu0 0.0
      %4657 = vmatpush1.msra.mxu0 0.0
      %4658 = vmatprep.subr.mxu0 0.0
      %4659 = vmatpush1.msra.mxu0 0.0
      %4660 = vmatprep.subr.mxu0 0.0
      %4661 = vmatpush1.msra.mxu0 0.0
      %4662 = vmatprep.subr.mxu0 0.0
      %4663 = vmatpush1.msra.mxu0 0.0
      %4664 = vmatprep.subr.mxu0 0.0
      %4665 = vmatpush1.msra.mxu0 0.0
      %4666 = vmatprep.subr.mxu0 0.0
      %4667 = vmatpush1.msra.mxu0 0.0
      %4668 = vmatprep.subr.mxu0 0.0
      %4669 = vmatpush1.msra.mxu0 0.0
      %4670 = vmatprep.subr.mxu0 0.0
      %4671 = vmatpush1.msra.mxu0 0.0
      %4672 = vmatprep.subr.mxu0 0.0
      %4673 = vmatpush1.msra.mxu0 0.0
      %4674 = vmatprep.subr.mxu0 0.0
      %4675 = vmatpush1.msra.mxu0 0.0
      %4676 = vmatprep.subr.mxu0 0.0
      %4677 = vmatpush1.msra.mxu0 0.0
      %4678 = vmatprep.subr.mxu0 0.0
      %4679 = vmatpush1.msra.mxu0 0.0
      %4680 = vmatprep.mubr.f32.mxu0 0.0
      %4681 = vmatmul.mubr.f32.gmra.mrb[0].mxu0 %v4605
      %v4682 = vpop.f32.mrb[0].mxu0
      %v4683 = vadd.f32 0.0, %v4682
      %v4684 = vpop.f32.mrb[0].mxu0
      %4685 = vmatprep.mubr.f32.mxu0 0.0
      %4686 = vmatmul.mubr.f32.gmra.mrb[0].mxu0 %v4608
      %v4687 = vpop.f32.mrb[0].mxu0
      %v4688 = vadd.f32 0.0, %v4687
      %v4689 = vpop.f32.mrb[0].mxu0
      %4690 = vmatprep.mubr.f32.mxu0 0.0
      %4691 = vmatmul.mubr.f32.gmra.mrb[0].mxu0 %v4611
      %v4692 = vpop.f32.mrb[0].mxu0
      %v4693 = vadd.f32 0.0, %v4692
      %v4694 = vpop.f32.mrb[0].mxu0
      %4695 = vmatprep.mubr.f32.mxu0 0.0
      %4696 = vmatmul.mubr.f32.gmra.mrb[0].mxu0 %v4614
      %v4697 = vpop.f32.mrb[0].mxu0
      %v4698 = vadd.f32 0.0, %v4697
      %v4699 = vpop.f32.mrb[0].mxu0
      %4700 = vdwg.mxu0
      %v4701 = vadd.f32 %v4567, %v4683
      %v4702 = vadd.f32 %v4568, %v4688
      %v4703 = vadd.f32 %v4569, %v4693
      %v4704 = vadd.f32 %v4570, %v4698
      %4705 = vrot.lane.b32.xlu0 %v3796, 107
      %v4706 = vpop.permute.xlu0 %4705
      %4707 = vrot.lane.b32.xlu0 %v3797, 107
      %v4708 = vpop.permute.xlu0 %4707
      %4709 = vrot.lane.b32.xlu0 %v3798, 107
      %v4710 = vpop.permute.xlu0 %4709
      %4711 = vrot.lane.b32.xlu0 %v3799, 107
      %v4712 = vpop.permute.xlu0 %4711
      %4717 = vrot.lane.b32.xlu0 %v3796, 79
      %v4718 = vpop.permute.xlu0 %4717
      %4719 = vrot.lane.b32.xlu0 %v3797, 79
      %v4720 = vpop.permute.xlu0 %4719
      %4721 = vrot.lane.b32.xlu0 %v3798, 79
      %v4722 = vpop.permute.xlu0 %4721
      %4723 = vrot.lane.b32.xlu0 %v3799, 79
      %v4724 = vpop.permute.xlu0 %4723
      %v4729 = vsel %vm2317, %v4706, %v4718
      %v4730 = vsel %vm2317, %v4708, %v4720
      %v4731 = vsel %vm2317, %v4710, %v4722
      %v4732 = vsel %vm2317, %v4712, %v4724
      %s4733 = scalar_lea.vmem %s7, 224
      %v4734 = vld [vmem:[%s4733] sm:$0xff]
      %v4735 = vld [vmem:[%s4733 + $0x8] sm:$0xff]
      %v4736 = vld [vmem:[%s4733 + $0x10] sm:$0xff]
      %v4737 = vld [vmem:[%s4733 + $0x18] sm:$0xff]
      %v4739 = vsel %vm1425, %v4734, 0
      %v4742 = vsel %vm1425, %v4735, 0
      %v4745 = vsel %vm1425, %v4736, 0
      %v4748 = vsel %vm1425, %v4737, 0
      %4750 = vmatprep.subr.mxu0 0.0
      %4751 = vmatpush1.msra.mxu0 %v4729
      %4752 = vmatprep.subr.mxu0 0.0
      %4753 = vmatpush1.msra.mxu0 %v4730
      %4754 = vmatprep.subr.mxu0 0.0
      %4755 = vmatpush1.msra.mxu0 %v4731
      %4756 = vmatprep.subr.mxu0 0.0
      %4757 = vmatpush1.msra.mxu0 %v4732
      %4758 = vmatprep.subr.mxu0 0.0
      %4759 = vmatpush1.msra.mxu0 0.0
      %4760 = vmatprep.subr.mxu0 0.0
      %4761 = vmatpush1.msra.mxu0 0.0
      %4762 = vmatprep.subr.mxu0 0.0
      %4763 = vmatpush1.msra.mxu0 0.0
      %4764 = vmatprep.subr.mxu0 0.0
      %4765 = vmatpush1.msra.mxu0 0.0
      %4766 = vmatprep.subr.mxu0 0.0
      %4767 = vmatpush1.msra.mxu0 0.0
      %4768 = vmatprep.subr.mxu0 0.0
      %4769 = vmatpush1.msra.mxu0 0.0
      %4770 = vmatprep.subr.mxu0 0.0
      %4771 = vmatpush1.msra.mxu0 0.0
      %4772 = vmatprep.subr.mxu0 0.0
      %4773 = vmatpush1.msra.mxu0 0.0
      %4774 = vmatprep.subr.mxu0 0.0
      %4775 = vmatpush1.msra.mxu0 0.0
      %4776 = vmatprep.subr.mxu0 0.0
      %4777 = vmatpush1.msra.mxu0 0.0
      %4778 = vmatprep.subr.mxu0 0.0
      %4779 = vmatpush1.msra.mxu0 0.0
      %4780 = vmatprep.subr.mxu0 0.0
      %4781 = vmatpush1.msra.mxu0 0.0
      %4782 = vmatprep.subr.mxu0 0.0
      %4783 = vmatpush1.msra.mxu0 0.0
      %4784 = vmatprep.subr.mxu0 0.0
      %4785 = vmatpush1.msra.mxu0 0.0
      %4786 = vmatprep.subr.mxu0 0.0
      %4787 = vmatpush1.msra.mxu0 0.0
      %4788 = vmatprep.subr.mxu0 0.0
      %4789 = vmatpush1.msra.mxu0 0.0
      %4790 = vmatprep.subr.mxu0 0.0
      %4791 = vmatpush1.msra.mxu0 0.0
      %4792 = vmatprep.subr.mxu0 0.0
      %4793 = vmatpush1.msra.mxu0 0.0
      %4794 = vmatprep.subr.mxu0 0.0
      %4795 = vmatpush1.msra.mxu0 0.0
      %4796 = vmatprep.subr.mxu0 0.0
      %4797 = vmatpush1.msra.mxu0 0.0
      %4798 = vmatprep.subr.mxu0 0.0
      %4799 = vmatpush1.msra.mxu0 0.0
      %4800 = vmatprep.subr.mxu0 0.0
      %4801 = vmatpush1.msra.mxu0 0.0
      %4802 = vmatprep.subr.mxu0 0.0
      %4803 = vmatpush1.msra.mxu0 0.0
      %4804 = vmatprep.subr.mxu0 0.0
      %4805 = vmatpush1.msra.mxu0 0.0
      %4806 = vmatprep.subr.mxu0 0.0
      %4807 = vmatpush1.msra.mxu0 0.0
      %4808 = vmatprep.subr.mxu0 0.0
      %4809 = vmatpush1.msra.mxu0 0.0
      %4810 = vmatprep.subr.mxu0 0.0
      %4811 = vmatpush1.msra.mxu0 0.0
      %4812 = vmatprep.subr.mxu0 0.0
      %4813 = vmatpush1.msra.mxu0 0.0
      %4814 = vmatprep.mubr.f32.mxu0 0.0
      %4815 = vmatmul.mubr.f32.gmra.mrb[0].mxu0 %v4739
      %v4816 = vpop.f32.mrb[0].mxu0
      %v4817 = vadd.f32 0.0, %v4816
      %v4818 = vpop.f32.mrb[0].mxu0
      %4819 = vmatprep.mubr.f32.mxu0 0.0
      %4820 = vmatmul.mubr.f32.gmra.mrb[0].mxu0 %v4742
      %v4821 = vpop.f32.mrb[0].mxu0
      %v4822 = vadd.f32 0.0, %v4821
      %v4823 = vpop.f32.mrb[0].mxu0
      %4824 = vmatprep.mubr.f32.mxu0 0.0
      %4825 = vmatmul.mubr.f32.gmra.mrb[0].mxu0 %v4745
      %v4826 = vpop.f32.mrb[0].mxu0
      %v4827 = vadd.f32 0.0, %v4826
      %v4828 = vpop.f32.mrb[0].mxu0
      %4829 = vmatprep.mubr.f32.mxu0 0.0
      %4830 = vmatmul.mubr.f32.gmra.mrb[0].mxu0 %v4748
      %v4831 = vpop.f32.mrb[0].mxu0
      %v4832 = vadd.f32 0.0, %v4831
      %v4833 = vpop.f32.mrb[0].mxu0
      %4834 = vdwg.mxu0
      %v4835 = vadd.f32 %v4701, %v4817
      %v4836 = vadd.f32 %v4702, %v4822
      %v4837 = vadd.f32 %v4703, %v4827
      %v4838 = vadd.f32 %v4704, %v4832
      %4839 = vrot.lane.b32.xlu0 %v3796, 106
      %v4840 = vpop.permute.xlu0 %4839
      %4841 = vrot.lane.b32.xlu0 %v3797, 106
      %v4842 = vpop.permute.xlu0 %4841
      %4843 = vrot.lane.b32.xlu0 %v3798, 106
      %v4844 = vpop.permute.xlu0 %4843
      %4845 = vrot.lane.b32.xlu0 %v3799, 106
      %v4846 = vpop.permute.xlu0 %4845
      %4851 = vrot.lane.b32.xlu0 %v3796, 78
      %v4852 = vpop.permute.xlu0 %4851
      %4853 = vrot.lane.b32.xlu0 %v3797, 78
      %v4854 = vpop.permute.xlu0 %4853
      %4855 = vrot.lane.b32.xlu0 %v3798, 78
      %v4856 = vpop.permute.xlu0 %4855
      %4857 = vrot.lane.b32.xlu0 %v3799, 78
      %v4858 = vpop.permute.xlu0 %4857
      %v4863 = vsel %vm2452, %v4840, %v4852
      %v4864 = vsel %vm2452, %v4842, %v4854
      %v4865 = vsel %vm2452, %v4844, %v4856
      %v4866 = vsel %vm2452, %v4846, %v4858
      %s4867 = scalar_lea.vmem %s7, 256
      %v4868 = vld [vmem:[%s4867] sm:$0xff]
      %v4869 = vld [vmem:[%s4867 + $0x8] sm:$0xff]
      %v4870 = vld [vmem:[%s4867 + $0x10] sm:$0xff]
      %v4871 = vld [vmem:[%s4867 + $0x18] sm:$0xff]
      %v4873 = vsel %vm1425, %v4868, 0
      %v4876 = vsel %vm1425, %v4869, 0
      %v4879 = vsel %vm1425, %v4870, 0
      %v4882 = vsel %vm1425, %v4871, 0
      %4884 = vmatprep.subr.mxu0 0.0
      %4885 = vmatpush1.msra.mxu0 %v4863
      %4886 = vmatprep.subr.mxu0 0.0
      %4887 = vmatpush1.msra.mxu0 %v4864
      %4888 = vmatprep.subr.mxu0 0.0
      %4889 = vmatpush1.msra.mxu0 %v4865
      %4890 = vmatprep.subr.mxu0 0.0
      %4891 = vmatpush1.msra.mxu0 %v4866
      %4892 = vmatprep.subr.mxu0 0.0
      %4893 = vmatpush1.msra.mxu0 0.0
      %4894 = vmatprep.subr.mxu0 0.0
      %4895 = vmatpush1.msra.mxu0 0.0
      %4896 = vmatprep.subr.mxu0 0.0
      %4897 = vmatpush1.msra.mxu0 0.0
      %4898 = vmatprep.subr.mxu0 0.0
      %4899 = vmatpush1.msra.mxu0 0.0
      %4900 = vmatprep.subr.mxu0 0.0
      %4901 = vmatpush1.msra.mxu0 0.0
      %4902 = vmatprep.subr.mxu0 0.0
      %4903 = vmatpush1.msra.mxu0 0.0
      %4904 = vmatprep.subr.mxu0 0.0
      %4905 = vmatpush1.msra.mxu0 0.0
      %4906 = vmatprep.subr.mxu0 0.0
      %4907 = vmatpush1.msra.mxu0 0.0
      %4908 = vmatprep.subr.mxu0 0.0
      %4909 = vmatpush1.msra.mxu0 0.0
      %4910 = vmatprep.subr.mxu0 0.0
      %4911 = vmatpush1.msra.mxu0 0.0
      %4912 = vmatprep.subr.mxu0 0.0
      %4913 = vmatpush1.msra.mxu0 0.0
      %4914 = vmatprep.subr.mxu0 0.0
      %4915 = vmatpush1.msra.mxu0 0.0
      %4916 = vmatprep.subr.mxu0 0.0
      %4917 = vmatpush1.msra.mxu0 0.0
      %4918 = vmatprep.subr.mxu0 0.0
      %4919 = vmatpush1.msra.mxu0 0.0
      %4920 = vmatprep.subr.mxu0 0.0
      %4921 = vmatpush1.msra.mxu0 0.0
      %4922 = vmatprep.subr.mxu0 0.0
      %4923 = vmatpush1.msra.mxu0 0.0
      %4924 = vmatprep.subr.mxu0 0.0
      %4925 = vmatpush1.msra.mxu0 0.0
      %4926 = vmatprep.subr.mxu0 0.0
      %4927 = vmatpush1.msra.mxu0 0.0
      %4928 = vmatprep.subr.mxu0 0.0
      %4929 = vmatpush1.msra.mxu0 0.0
      %4930 = vmatprep.subr.mxu0 0.0
      %4931 = vmatpush1.msra.mxu0 0.0
      %4932 = vmatprep.subr.mxu0 0.0
      %4933 = vmatpush1.msra.mxu0 0.0
      %4934 = vmatprep.subr.mxu0 0.0
      %4935 = vmatpush1.msra.mxu0 0.0
      %4936 = vmatprep.subr.mxu0 0.0
      %4937 = vmatpush1.msra.mxu0 0.0
      %4938 = vmatprep.subr.mxu0 0.0
      %4939 = vmatpush1.msra.mxu0 0.0
      %4940 = vmatprep.subr.mxu0 0.0
      %4941 = vmatpush1.msra.mxu0 0.0
      %4942 = vmatprep.subr.mxu0 0.0
      %4943 = vmatpush1.msra.mxu0 0.0
      %4944 = vmatprep.subr.mxu0 0.0
      %4945 = vmatpush1.msra.mxu0 0.0
      %4946 = vmatprep.subr.mxu0 0.0
      %4947 = vmatpush1.msra.mxu0 0.0
      %4948 = vmatprep.mubr.f32.mxu0 0.0
      %4949 = vmatmul.mubr.f32.gmra.mrb[0].mxu0 %v4873
      %v4950 = vpop.f32.mrb[0].mxu0
      %v4951 = vadd.f32 0.0, %v4950
      %v4952 = vpop.f32.mrb[0].mxu0
      %4953 = vmatprep.mubr.f32.mxu0 0.0
      %4954 = vmatmul.mubr.f32.gmra.mrb[0].mxu0 %v4876
      %v4955 = vpop.f32.mrb[0].mxu0
      %v4956 = vadd.f32 0.0, %v4955
      %v4957 = vpop.f32.mrb[0].mxu0
      %4958 = vmatprep.mubr.f32.mxu0 0.0
      %4959 = vmatmul.mubr.f32.gmra.mrb[0].mxu0 %v4879
      %v4960 = vpop.f32.mrb[0].mxu0
      %v4961 = vadd.f32 0.0, %v4960
      %v4962 = vpop.f32.mrb[0].mxu0
      %4963 = vmatprep.mubr.f32.mxu0 0.0
      %4964 = vmatmul.mubr.f32.gmra.mrb[0].mxu0 %v4882
      %v4965 = vpop.f32.mrb[0].mxu0
      %v4966 = vadd.f32 0.0, %v4965
      %v4967 = vpop.f32.mrb[0].mxu0
      %4968 = vdwg.mxu0
      %v4969 = vadd.f32 %v4835, %v4951
      %v4970 = vadd.f32 %v4836, %v4956
      %v4971 = vadd.f32 %v4837, %v4961
      %v4972 = vadd.f32 %v4838, %v4966
      %v4973 = vld [vmem:[%s8] sm:$0xff]
      %v4974 = vld [vmem:[%s8 + $0x8] sm:$0xff]
      %v4975 = vld [vmem:[%s8 + $0x10] sm:$0xff]
      %v4976 = vld [vmem:[%s8 + $0x18] sm:$0xff]
      %4978 = vset.pattern.permute.xlu0 0
      %4979 = vperm.xlu0 %4978, %v4973
      %v4980 = vpop.permute.xlu0 %4979
      %4983 = vset.pattern.permute.xlu0 0
      %4984 = vperm.xlu0 %4983, %v4974
      %v4985 = vpop.permute.xlu0 %4984
      %4988 = vset.pattern.permute.xlu0 0
      %4989 = vperm.xlu0 %4988, %v4975
      %v4990 = vpop.permute.xlu0 %4989
      %4993 = vset.pattern.permute.xlu0 0
      %4994 = vperm.xlu0 %4993, %v4976
      %v4995 = vpop.permute.xlu0 %4994
      %v4997 = vadd.f32 %v4969, %v4980
      %v4998 = vadd.f32 %v4970, %v4985
      %v4999 = vadd.f32 %v4971, %v4990
      %v5000 = vadd.f32 %v4972, %v4995
      %v5001 = vmax.f32 %v4997, 0.0
      %v5002 = vmax.f32 %v4998, 0.0
      %v5003 = vmax.f32 %v4999, 0.0
      %v5004 = vmax.f32 %v5000, 0.0
      %vm5005 = vcmask 818176
      %5006 = vst.msk [vmem:[%s332] sm:$0xff] %vm5005, %v5001
      %5007 = vst.msk [vmem:[%s332 + $0x8] sm:$0xff] %vm5005, %v5002
      %5008 = vst.msk [vmem:[%s332 + $0x10] sm:$0xff] %vm5005, %v5003
      %5009 = vst.msk [vmem:[%s332 + $0x18] sm:$0xff] %vm5005, %v5004
      %p5010 = scmp.lt.s32.totalorder %s20, 1
      %s5011 = scalar_select %p5010, %s20, 1
      %s5012 = smul.addr %s5011, 4
      %s5013 = smul.addr %s5012, 8
      %s5014 = scalar_lea.vmem %s9, %s5013
      // Predicated region
      $region57: #{rl_encoder_forward.1} parent=55 // pred_check
        %p5015 = pneg %p232
      $region58: #{rl_encoder_forward.1} parent=55 // pred_check_branch
        %5017 = sbr.rel (%p5015) target = $region60
      $region59: #{rl_encoder_forward.1} parent=55 // pred_region
        _
      $region60: #{rl_encoder_forward.1} parent=55 // pred_fallthru
        _
    $region56: #{rl_encoder_forward.1} parent=5 // pred_fallthru
      _
    %p5018 = scmp.le.s32.totalorder 2, %s15
    // Predicated region
    $region61: #{rl_encoder_forward.1} parent=5 // pred_check
      %p5019 = pneg %p5018
    $region62: #{rl_encoder_forward.1} parent=5 // pred_check_branch
      %5021 = sbr.rel (%p5019) target = $region64
    $region63: #{rl_encoder_forward.1} parent=5 // pred_region
      %s5022 = ssub.s32 %s15, 2
      // Predicated region
      $region65: #{rl_encoder_forward.1} parent=63 // pred_check
        %p5023 = pneg %p238
      $region66: #{rl_encoder_forward.1} parent=63 // pred_check_branch
        %5025 = sbr.rel (%p5023) target = $region68
      $region67: #{rl_encoder_forward.1} parent=63 // pred_region
        %p5026 = scmp.lt.s32.totalorder %s21, 1
        %s5027 = scalar_select %p5026, %s21, 1
        %s5028 = smul.addr %s5027, 4
        %s5029 = smul.addr %s5028, 8
        %s5030 = scalar_lea.vmem %s9, %s5029
      $region68: #{rl_encoder_forward.1} parent=63 // pred_fallthru
        _
    $region64: #{rl_encoder_forward.1} parent=5 // pred_fallthru
      _
  $region6: #{rl_encoder_forward.1} parent=0 // loop_footer
    %s19 = sadd.s32 1, %s15
  $region7: #{rl_encoder_forward.1} parent=0 // loop_footer_branch
    %14 = sbr.rel target = $region3
  $region8: #{rl_encoder_forward.1} parent=0 // loop_exit
    _

</llo_original>
